<compile_context>
chip_gen: v7x
topology: tpu7x:2x2x1
jax: 0.10.0
libtpu: 0.0.40
codegen_flags: <defaults>
</compile_context>

<pallas_src>
import jax
import jax.numpy as jnp
from jax.experimental import pallas as pl
from jax.experimental.pallas import tpu as pltpu

NUM_FEATURES = 16     # num_features (global in the original file)
HIDDEN = 32           # hidden_size (uni -> cur_rnn_dim == hidden_size)
NUM_LAYERS = 2        # kernel below is specialized for the 2-layer config
NUM_CLASSES = 5       # num_target_label
FC_DIM = 1024
OUT_PAD = 128         # lane-dense padded class dim
B_PAD = 8             # batch padded to one full sublane group
NEG_SLOPE = 0.01      # nn.LeakyReLU default slope
# TODO(synk): nn.Dropout is identity at inference (eval mode); omitted.


def _leaky_relu(x):
    return jnp.where(x > 0, x, NEG_SLOPE * x)


def rnn_net_kernel(x_ref, w_emb_ref, b_emb_ref,
                   w_ih1_ref, w_hh1_ref, b1_ref,
                   w_l2_ref, b2_ref,
                   w_fc1_ref, b_fc1_ref, w_fc2_ref, b_fc2_ref,
                   out_ref):
    TB, F = x_ref.shape            # (T*Bp, F), time-major, batch pre-padded
    Bp = out_ref.shape[0]          # 8 (full sublane group)
    T = TB // Bp
    H = w_emb_ref.shape[1]         # 32; 4H == 128 -> lane-dense gate tiles

    # ---- embedding: Linear(F, H) + LeakyReLU (Dropout == identity in eval) ----
    seq = _leaky_relu(
        jnp.dot(x_ref[...], w_emb_ref[...], preferred_element_type=jnp.float32)
        + b_emb_ref[...])                                   # (T*Bp, H)

    # ---- layer-1 input projection hoisted off the recurrence ----
    # One batched MXU op for all T steps, bias fused.
    gx1 = (jnp.dot(seq, w_ih1_ref[...], preferred_element_type=jnp.float32)
           + b1_ref[...])                                   # (T*Bp, 4H)

    w_hh1 = w_hh1_ref[...]                                  # (H, 4H)
    w_l2 = w_l2_ref[...]                                    # (2H, 4H) = [W_ih2; W_hh2]
    b2 = b2_ref[...]                                        # (1, 4H)

    # ---- wavefront 2-layer unidirectional LSTM, zero initial (h, c) ----
    h1 = jnp.zeros((Bp, H), jnp.float32)
    c1 = jnp.zeros((Bp, H), jnp.float32)
    h2 = jnp.zeros((Bp, H), jnp.float32)
    c2 = jnp.zeros((Bp, H), jnp.float32)

    # TODO(synk): weight-resident MXU driving (pltpu.matmul_push_rhs /
    # matmul_acc_lhs, MRB accumulate on v7x) could hold w_hh1 / w_l2 across the
    # T loop; kept as jnp.dot for portability.
    for t in range(T):                                      # static unroll (T=8)
        # --- layer 1, step t ---
        g1 = (gx1[t * Bp:(t + 1) * Bp]                      # aligned (8,128) slice
              + jnp.dot(h1, w_hh1, preferred_element_type=jnp.float32))
        s1 = jax.nn.sigmoid(g1)                             # 1 EUP pass, (Bp, 4H)
        n1 = jnp.tanh(g1)                                   # 1 EUP pass, (Bp, 4H)
        c1 = s1[:, H:2 * H] * c1 + s1[:, 0:H] * n1[:, 2 * H:3 * H]
        h1 = s1[:, 3 * H:4 * H] * jnp.tanh(c1)
        # --- layer 2, step t (wavefront: consumes h1_t and h2_{t-1}) ---
        g2 = (jnp.dot(jnp.concatenate([h1, h2], axis=1),    # (Bp, 2H) @ (2H, 4H)
                      w_l2, preferred_element_type=jnp.float32)
              + b2)
        s2 = jax.nn.sigmoid(g2)
        n2 = jnp.tanh(g2)
        c2 = s2[:, H:2 * H] * c2 + s2[:, 0:H] * n2[:, 2 * H:3 * H]
        h2 = s2[:, 3 * H:4 * H] * jnp.tanh(c2)

    # h2 == last-layer h_n, which is what the reshape/permute gymnastics in
    # RNNNet.forward selects for the 'uni' direction.

    # ---- final head: Linear(H, 1024) + LeakyReLU + Linear(1024, 128-padded) ----
    # TODO(synk): bf16 FC weights (v5e HBM-BW win) skipped to keep f32 accuracy.
    fc1 = _leaky_relu(
        jnp.dot(h2, w_fc1_ref[...], preferred_element_type=jnp.float32)
        + b_fc1_ref[...])                                   # (Bp, 1024)
    out_ref[...] = (jnp.dot(fc1, w_fc2_ref[...],
                            preferred_element_type=jnp.float32)
                    + b_fc2_ref[...])                       # (Bp, 128) unmasked vst


def prepare_params(params):
    """One-time parameter preprocessing (hoisted out of the per-call path)."""
    b1 = params['b_ih'][0] + params['b_hh'][0]                      # (1, 4H)
    b2 = params['b_ih'][1] + params['b_hh'][1]                      # (1, 4H)
    w_l2 = jnp.concatenate([params['w_ih'][1], params['w_hh'][1]],
                           axis=0)                                  # (2H, 4H)
    w_fc2_pad = jnp.zeros((FC_DIM, OUT_PAD), jnp.float32)
    w_fc2_pad = w_fc2_pad.at[:, :NUM_CLASSES].set(params['w_fc2'])
    b_fc2_pad = jnp.zeros((1, OUT_PAD), jnp.float32)
    b_fc2_pad = b_fc2_pad.at[:, :NUM_CLASSES].set(params['b_fc2'])
    return {
        'w_emb': params['w_emb'], 'b_emb': params['b_emb'],
        'w_ih1': params['w_ih'][0], 'w_hh1': params['w_hh'][0], 'b1': b1,
        'w_l2': w_l2, 'b2': b2,
        'w_fc1': params['w_fc1'], 'b_fc1': params['b_fc1'],
        'w_fc2': w_fc2_pad, 'b_fc2': b_fc2_pad,
    }


def rnn_net_forward(x_btf, prep):
    B, T, F = x_btf.shape
    assert B <= B_PAD, "wrapper pads batch to one sublane group (8)"

    # Time-major, zero-pad batch to Bp=8, pre-flatten (no in-kernel reshape).
    x_tbf = jnp.transpose(x_btf, (1, 0, 2)).astype(jnp.float32)     # (T, B, F)
    x_pad = jnp.zeros((T, B_PAD, F), jnp.float32).at[:, :B, :].set(x_tbf)
    x_flat = x_pad.reshape(T * B_PAD, F)                            # (T*Bp, F)

    vmem = pl.BlockSpec(memory_space=pltpu.MemorySpace.VMEM)
    out_pad = pl.pallas_call(
        rnn_net_kernel,
        out_shape=jax.ShapeDtypeStruct((B_PAD, OUT_PAD), jnp.float32),
        in_specs=[vmem] * 12,
        out_specs=vmem,
    )(x_flat,
      prep['w_emb'], prep['b_emb'],
      prep['w_ih1'], prep['w_hh1'], prep['b1'],
      prep['w_l2'], prep['b2'],
      prep['w_fc1'], prep['b_fc1'], prep['w_fc2'], prep['b_fc2'])
    return out_pad[:B, :NUM_CLASSES]


def reference_forward(x, p):
    """Pure-JAX reference mirroring the PyTorch forward (eval mode)."""
    H = HIDDEN
    B, T, _ = x.shape
    seq = _leaky_relu(x @ p['w_emb'] + p['b_emb'])        # (B, T, H)
    h = jnp.zeros((B, H), jnp.float32)
    for l in range(NUM_LAYERS):
        h = jnp.zeros((B, H), jnp.float32)
        c = jnp.zeros((B, H), jnp.float32)
        outs = []
        for t in range(T):
            gates = (seq[:, t] @ p['w_ih'][l] + h @ p['w_hh'][l]
                     + p['b_ih'][l] + p['b_hh'][l])
            i = jax.nn.sigmoid(gates[:, :H])
            f = jax.nn.sigmoid(gates[:, H:2 * H])
            g = jnp.tanh(gates[:, 2 * H:3 * H])
            o = jax.nn.sigmoid(gates[:, 3 * H:])
            c = f * c + i * g
            h = o * jnp.tanh(c)
            outs.append(h)
        seq = jnp.stack(outs, axis=1)
    fc1 = _leaky_relu(h @ p['w_fc1'] + p['b_fc1'])
    return fc1 @ p['w_fc2'] + p['b_fc2']


def init_params(key):
    ks = jax.random.split(key, 10)
    s = 0.1
    H, F, L, C = HIDDEN, NUM_FEATURES, NUM_LAYERS, NUM_CLASSES
    return {
        'w_emb': s * jax.random.normal(ks[0], (F, H), jnp.float32),
        'b_emb': s * jax.random.normal(ks[1], (1, H), jnp.float32),
        'w_ih':  s * jax.random.normal(ks[2], (L, H, 4 * H), jnp.float32),
        'w_hh':  s * jax.random.normal(ks[3], (L, H, 4 * H), jnp.float32),
        'b_ih':  s * jax.random.normal(ks[4], (L, 1, 4 * H), jnp.float32),
        'b_hh':  s * jax.random.normal(ks[5], (L, 1, 4 * H), jnp.float32),
        'w_fc1': s * jax.random.normal(ks[6], (H, FC_DIM), jnp.float32),
        'b_fc1': s * jax.random.normal(ks[7], (1, FC_DIM), jnp.float32),
        'w_fc2': s * jax.random.normal(ks[8], (FC_DIM, C), jnp.float32),
        'b_fc2': s * jax.random.normal(ks[9], (1, C), jnp.float32),
    }


if __name__ == "__main__":
    key = jax.random.PRNGKey(0)
    k_x, k_p = jax.random.split(key)
    B, T = 2, 8
    x = jax.random.normal(k_x, (B, T, NUM_FEATURES), jnp.float32)
    params = init_params(k_p)
    prep = prepare_params(params)     # one-time preprocessing, off the hot path

    pred = rnn_net_forward(x, prep)
    pred = jax.block_until_ready(pred)

    ref = reference_forward(x, params)
    assert pred.shape == (B, NUM_CLASSES)
    assert jnp.allclose(pred, ref, atol=1e-4, rtol=1e-4), (pred, ref)
    print("KERNEL_OK")
</pallas_src>

<mosaic_0001>
module attributes {stable_mosaic.version = 11 : i64} {
  func.func @rnn_net_kernel(%arg0: memref<64x16xf32, #tpu.memory_space<vmem>>, %arg1: memref<16x32xf32, #tpu.memory_space<vmem>>, %arg2: memref<1x32xf32, #tpu.memory_space<vmem>>, %arg3: memref<32x128xf32, #tpu.memory_space<vmem>>, %arg4: memref<32x128xf32, #tpu.memory_space<vmem>>, %arg5: memref<1x128xf32, #tpu.memory_space<vmem>>, %arg6: memref<64x128xf32, #tpu.memory_space<vmem>>, %arg7: memref<1x128xf32, #tpu.memory_space<vmem>>, %arg8: memref<32x1024xf32, #tpu.memory_space<vmem>>, %arg9: memref<1x1024xf32, #tpu.memory_space<vmem>>, %arg10: memref<1024x128xf32, #tpu.memory_space<vmem>>, %arg11: memref<1x128xf32, #tpu.memory_space<vmem>>, %arg12: memref<8x128xf32, #tpu.memory_space<vmem>>) attributes {dimension_semantics = [], scalar_prefetch = 0 : i64, scratch_operands = 0 : i64, tpu.core_type = #tpu.core_type<tc>} {
    %c0 = arith.constant 0 : index
    %c0_0 = arith.constant 0 : index
    %0 = vector.load %arg0[%c0, %c0_0] : memref<64x16xf32, #tpu.memory_space<vmem>>, vector<64x16xf32>
    %c0_1 = arith.constant 0 : index
    %c0_2 = arith.constant 0 : index
    %1 = vector.load %arg1[%c0_1, %c0_2] : memref<16x32xf32, #tpu.memory_space<vmem>>, vector<16x32xf32>
    %cst = arith.constant dense<0.000000e+00> : vector<64x32xf32>
    %2 = tpu.matmul %0, %1, %cst {dimension_numbers = #tpu.dot_dimension_numbers<[1], [0], [0], [1], [0, 0, 1, 1], [], []>} : vector<64x16xf32>, vector<16x32xf32>, vector<64x32xf32> -> vector<64x32xf32>
    %c0_3 = arith.constant 0 : index
    %c0_4 = arith.constant 0 : index
    %3 = vector.load %arg2[%c0_3, %c0_4] : memref<1x32xf32, #tpu.memory_space<vmem>>, vector<1x32xf32>
    %4 = vector.broadcast %3 : vector<1x32xf32> to vector<64x32xf32>
    %5 = arith.addf %2, %4 : vector<64x32xf32>
    %cst_5 = arith.constant 0.000000e+00 : f32
    %6 = vector.broadcast %cst_5 : f32 to vector<64x32xf32>
    %7 = arith.cmpf ogt, %5, %6 : vector<64x32xf32>
    %cst_6 = arith.constant 0.00999999977 : f32
    %8 = vector.broadcast %cst_6 : f32 to vector<64x32xf32>
    %9 = arith.mulf %8, %5 : vector<64x32xf32>
    %10 = arith.select %7, %5, %9 : vector<64x32xi1>, vector<64x32xf32>
    %c0_7 = arith.constant 0 : index
    %c0_8 = arith.constant 0 : index
    %11 = vector.load %arg3[%c0_7, %c0_8] : memref<32x128xf32, #tpu.memory_space<vmem>>, vector<32x128xf32>
    %cst_9 = arith.constant dense<0.000000e+00> : vector<64x128xf32>
    %12 = tpu.matmul %10, %11, %cst_9 {dimension_numbers = #tpu.dot_dimension_numbers<[1], [0], [0], [1], [0, 0, 1, 1], [], []>} : vector<64x32xf32>, vector<32x128xf32>, vector<64x128xf32> -> vector<64x128xf32>
    %c0_10 = arith.constant 0 : index
    %c0_11 = arith.constant 0 : index
    %13 = vector.load %arg5[%c0_10, %c0_11] : memref<1x128xf32, #tpu.memory_space<vmem>>, vector<1x128xf32>
    %14 = vector.broadcast %13 : vector<1x128xf32> to vector<64x128xf32>
    %15 = arith.addf %12, %14 : vector<64x128xf32>
    %c0_12 = arith.constant 0 : index
    %c0_13 = arith.constant 0 : index
    %16 = vector.load %arg4[%c0_12, %c0_13] : memref<32x128xf32, #tpu.memory_space<vmem>>, vector<32x128xf32>
    %c0_14 = arith.constant 0 : index
    %c0_15 = arith.constant 0 : index
    %17 = vector.load %arg6[%c0_14, %c0_15] : memref<64x128xf32, #tpu.memory_space<vmem>>, vector<64x128xf32>
    %c0_16 = arith.constant 0 : index
    %c0_17 = arith.constant 0 : index
    %18 = vector.load %arg7[%c0_16, %c0_17] : memref<1x128xf32, #tpu.memory_space<vmem>>, vector<1x128xf32>
    %cst_18 = arith.constant 0.000000e+00 : f32
    %19 = vector.broadcast %cst_18 : f32 to vector<8x32xf32>
    %cst_19 = arith.constant 0.000000e+00 : f32
    %20 = vector.broadcast %cst_19 : f32 to vector<8x32xf32>
    %cst_20 = arith.constant 0.000000e+00 : f32
    %21 = vector.broadcast %cst_20 : f32 to vector<8x32xf32>
    %cst_21 = arith.constant 0.000000e+00 : f32
    %22 = vector.broadcast %cst_21 : f32 to vector<8x32xf32>
    %23 = vector.extract_strided_slice %15 {offsets = [0, 0], sizes = [8, 128], strides = [1, 1]} : vector<64x128xf32> to vector<8x128xf32>
    %cst_22 = arith.constant dense<0.000000e+00> : vector<8x128xf32>
    %24 = tpu.matmul %19, %16, %cst_22 {dimension_numbers = #tpu.dot_dimension_numbers<[1], [0], [0], [1], [0, 0, 1, 1], [], []>} : vector<8x32xf32>, vector<32x128xf32>, vector<8x128xf32> -> vector<8x128xf32>
    %25 = arith.addf %23, %24 : vector<8x128xf32>
    %26 = arith.negf %25 : vector<8x128xf32>
    %27 = math.exp %26 : vector<8x128xf32>
    %cst_23 = arith.constant 1.000000e+00 : f32
    %28 = vector.broadcast %cst_23 : f32 to vector<8x128xf32>
    %29 = arith.addf %28, %27 : vector<8x128xf32>
    %30 = arith.divf %28, %29 : vector<8x128xf32>
    %31 = math.tanh %25 : vector<8x128xf32>
    %32 = vector.extract_strided_slice %30 {offsets = [0, 32], sizes = [8, 32], strides = [1, 1]} : vector<8x128xf32> to vector<8x32xf32>
    %33 = arith.mulf %32, %20 : vector<8x32xf32>
    %34 = vector.extract_strided_slice %30 {offsets = [0, 0], sizes = [8, 32], strides = [1, 1]} : vector<8x128xf32> to vector<8x32xf32>
    %35 = vector.extract_strided_slice %31 {offsets = [0, 64], sizes = [8, 32], strides = [1, 1]} : vector<8x128xf32> to vector<8x32xf32>
    %36 = arith.mulf %34, %35 : vector<8x32xf32>
    %37 = arith.addf %33, %36 : vector<8x32xf32>
    %38 = vector.extract_strided_slice %30 {offsets = [0, 96], sizes = [8, 32], strides = [1, 1]} : vector<8x128xf32> to vector<8x32xf32>
    %39 = math.tanh %37 : vector<8x32xf32>
    %40 = arith.mulf %38, %39 : vector<8x32xf32>
    %41 = tpu.concatenate %40, %21 in 1 : vector<8x32xf32>, vector<8x32xf32> -> vector<8x64xf32>
    %cst_24 = arith.constant dense<0.000000e+00> : vector<8x128xf32>
    %42 = tpu.matmul %41, %17, %cst_24 {dimension_numbers = #tpu.dot_dimension_numbers<[1], [0], [0], [1], [0, 0, 1, 1], [], []>} : vector<8x64xf32>, vector<64x128xf32>, vector<8x128xf32> -> vector<8x128xf32>
    %43 = vector.broadcast %18 : vector<1x128xf32> to vector<8x128xf32>
    %44 = arith.addf %42, %43 : vector<8x128xf32>
    %45 = arith.negf %44 : vector<8x128xf32>
    %46 = math.exp %45 : vector<8x128xf32>
    %cst_25 = arith.constant 1.000000e+00 : f32
    %47 = vector.broadcast %cst_25 : f32 to vector<8x128xf32>
    %48 = arith.addf %47, %46 : vector<8x128xf32>
    %49 = arith.divf %47, %48 : vector<8x128xf32>
    %50 = math.tanh %44 : vector<8x128xf32>
    %51 = vector.extract_strided_slice %49 {offsets = [0, 32], sizes = [8, 32], strides = [1, 1]} : vector<8x128xf32> to vector<8x32xf32>
    %52 = arith.mulf %51, %22 : vector<8x32xf32>
    %53 = vector.extract_strided_slice %49 {offsets = [0, 0], sizes = [8, 32], strides = [1, 1]} : vector<8x128xf32> to vector<8x32xf32>
    %54 = vector.extract_strided_slice %50 {offsets = [0, 64], sizes = [8, 32], strides = [1, 1]} : vector<8x128xf32> to vector<8x32xf32>
    %55 = arith.mulf %53, %54 : vector<8x32xf32>
    %56 = arith.addf %52, %55 : vector<8x32xf32>
    %57 = vector.extract_strided_slice %49 {offsets = [0, 96], sizes = [8, 32], strides = [1, 1]} : vector<8x128xf32> to vector<8x32xf32>
    %58 = math.tanh %56 : vector<8x32xf32>
    %59 = arith.mulf %57, %58 : vector<8x32xf32>
    %60 = vector.extract_strided_slice %15 {offsets = [8, 0], sizes = [8, 128], strides = [1, 1]} : vector<64x128xf32> to vector<8x128xf32>
    %cst_26 = arith.constant dense<0.000000e+00> : vector<8x128xf32>
    %61 = tpu.matmul %40, %16, %cst_26 {dimension_numbers = #tpu.dot_dimension_numbers<[1], [0], [0], [1], [0, 0, 1, 1], [], []>} : vector<8x32xf32>, vector<32x128xf32>, vector<8x128xf32> -> vector<8x128xf32>
    %62 = arith.addf %60, %61 : vector<8x128xf32>
    %63 = arith.negf %62 : vector<8x128xf32>
    %64 = math.exp %63 : vector<8x128xf32>
    %cst_27 = arith.constant 1.000000e+00 : f32
    %65 = vector.broadcast %cst_27 : f32 to vector<8x128xf32>
    %66 = arith.addf %65, %64 : vector<8x128xf32>
    %67 = arith.divf %65, %66 : vector<8x128xf32>
    %68 = math.tanh %62 : vector<8x128xf32>
    %69 = vector.extract_strided_slice %67 {offsets = [0, 32], sizes = [8, 32], strides = [1, 1]} : vector<8x128xf32> to vector<8x32xf32>
    %70 = arith.mulf %69, %37 : vector<8x32xf32>
    %71 = vector.extract_strided_slice %67 {offsets = [0, 0], sizes = [8, 32], strides = [1, 1]} : vector<8x128xf32> to vector<8x32xf32>
    %72 = vector.extract_strided_slice %68 {offsets = [0, 64], sizes = [8, 32], strides = [1, 1]} : vector<8x128xf32> to vector<8x32xf32>
    %73 = arith.mulf %71, %72 : vector<8x32xf32>
    %74 = arith.addf %70, %73 : vector<8x32xf32>
    %75 = vector.extract_strided_slice %67 {offsets = [0, 96], sizes = [8, 32], strides = [1, 1]} : vector<8x128xf32> to vector<8x32xf32>
    %76 = math.tanh %74 : vector<8x32xf32>
    %77 = arith.mulf %75, %76 : vector<8x32xf32>
    %78 = tpu.concatenate %77, %59 in 1 : vector<8x32xf32>, vector<8x32xf32> -> vector<8x64xf32>
    %cst_28 = arith.constant dense<0.000000e+00> : vector<8x128xf32>
    %79 = tpu.matmul %78, %17, %cst_28 {dimension_numbers = #tpu.dot_dimension_numbers<[1], [0], [0], [1], [0, 0, 1, 1], [], []>} : vector<8x64xf32>, vector<64x128xf32>, vector<8x128xf32> -> vector<8x128xf32>
    %80 = vector.broadcast %18 : vector<1x128xf32> to vector<8x128xf32>
    %81 = arith.addf %79, %80 : vector<8x128xf32>
    %82 = arith.negf %81 : vector<8x128xf32>
    %83 = math.exp %82 : vector<8x128xf32>
    %cst_29 = arith.constant 1.000000e+00 : f32
    %84 = vector.broadcast %cst_29 : f32 to vector<8x128xf32>
    %85 = arith.addf %84, %83 : vector<8x128xf32>
    %86 = arith.divf %84, %85 : vector<8x128xf32>
    %87 = math.tanh %81 : vector<8x128xf32>
    %88 = vector.extract_strided_slice %86 {offsets = [0, 32], sizes = [8, 32], strides = [1, 1]} : vector<8x128xf32> to vector<8x32xf32>
    %89 = arith.mulf %88, %56 : vector<8x32xf32>
    %90 = vector.extract_strided_slice %86 {offsets = [0, 0], sizes = [8, 32], strides = [1, 1]} : vector<8x128xf32> to vector<8x32xf32>
    %91 = vector.extract_strided_slice %87 {offsets = [0, 64], sizes = [8, 32], strides = [1, 1]} : vector<8x128xf32> to vector<8x32xf32>
    %92 = arith.mulf %90, %91 : vector<8x32xf32>
    %93 = arith.addf %89, %92 : vector<8x32xf32>
    %94 = vector.extract_strided_slice %86 {offsets = [0, 96], sizes = [8, 32], strides = [1, 1]} : vector<8x128xf32> to vector<8x32xf32>
    %95 = math.tanh %93 : vector<8x32xf32>
    %96 = arith.mulf %94, %95 : vector<8x32xf32>
    %97 = vector.extract_strided_slice %15 {offsets = [16, 0], sizes = [8, 128], strides = [1, 1]} : vector<64x128xf32> to vector<8x128xf32>
    %cst_30 = arith.constant dense<0.000000e+00> : vector<8x128xf32>
    %98 = tpu.matmul %77, %16, %cst_30 {dimension_numbers = #tpu.dot_dimension_numbers<[1], [0], [0], [1], [0, 0, 1, 1], [], []>} : vector<8x32xf32>, vector<32x128xf32>, vector<8x128xf32> -> vector<8x128xf32>
    %99 = arith.addf %97, %98 : vector<8x128xf32>
    %100 = arith.negf %99 : vector<8x128xf32>
    %101 = math.exp %100 : vector<8x128xf32>
    %cst_31 = arith.constant 1.000000e+00 : f32
    %102 = vector.broadcast %cst_31 : f32 to vector<8x128xf32>
    %103 = arith.addf %102, %101 : vector<8x128xf32>
    %104 = arith.divf %102, %103 : vector<8x128xf32>
    %105 = math.tanh %99 : vector<8x128xf32>
    %106 = vector.extract_strided_slice %104 {offsets = [0, 32], sizes = [8, 32], strides = [1, 1]} : vector<8x128xf32> to vector<8x32xf32>
    %107 = arith.mulf %106, %74 : vector<8x32xf32>
    %108 = vector.extract_strided_slice %104 {offsets = [0, 0], sizes = [8, 32], strides = [1, 1]} : vector<8x128xf32> to vector<8x32xf32>
    %109 = vector.extract_strided_slice %105 {offsets = [0, 64], sizes = [8, 32], strides = [1, 1]} : vector<8x128xf32> to vector<8x32xf32>
    %110 = arith.mulf %108, %109 : vector<8x32xf32>
    %111 = arith.addf %107, %110 : vector<8x32xf32>
    %112 = vector.extract_strided_slice %104 {offsets = [0, 96], sizes = [8, 32], strides = [1, 1]} : vector<8x128xf32> to vector<8x32xf32>
    %113 = math.tanh %111 : vector<8x32xf32>
    %114 = arith.mulf %112, %113 : vector<8x32xf32>
    %115 = tpu.concatenate %114, %96 in 1 : vector<8x32xf32>, vector<8x32xf32> -> vector<8x64xf32>
    %cst_32 = arith.constant dense<0.000000e+00> : vector<8x128xf32>
    %116 = tpu.matmul %115, %17, %cst_32 {dimension_numbers = #tpu.dot_dimension_numbers<[1], [0], [0], [1], [0, 0, 1, 1], [], []>} : vector<8x64xf32>, vector<64x128xf32>, vector<8x128xf32> -> vector<8x128xf32>
    %117 = vector.broadcast %18 : vector<1x128xf32> to vector<8x128xf32>
    %118 = arith.addf %116, %117 : vector<8x128xf32>
    %119 = arith.negf %118 : vector<8x128xf32>
    %120 = math.exp %119 : vector<8x128xf32>
    %cst_33 = arith.constant 1.000000e+00 : f32
    %121 = vector.broadcast %cst_33 : f32 to vector<8x128xf32>
    %122 = arith.addf %121, %120 : vector<8x128xf32>
    %123 = arith.divf %121, %122 : vector<8x128xf32>
    %124 = math.tanh %118 : vector<8x128xf32>
    %125 = vector.extract_strided_slice %123 {offsets = [0, 32], sizes = [8, 32], strides = [1, 1]} : vector<8x128xf32> to vector<8x32xf32>
    %126 = arith.mulf %125, %93 : vector<8x32xf32>
    %127 = vector.extract_strided_slice %123 {offsets = [0, 0], sizes = [8, 32], strides = [1, 1]} : vector<8x128xf32> to vector<8x32xf32>
    %128 = vector.extract_strided_slice %124 {offsets = [0, 64], sizes = [8, 32], strides = [1, 1]} : vector<8x128xf32> to vector<8x32xf32>
    %129 = arith.mulf %127, %128 : vector<8x32xf32>
    %130 = arith.addf %126, %129 : vector<8x32xf32>
    %131 = vector.extract_strided_slice %123 {offsets = [0, 96], sizes = [8, 32], strides = [1, 1]} : vector<8x128xf32> to vector<8x32xf32>
    %132 = math.tanh %130 : vector<8x32xf32>
    %133 = arith.mulf %131, %132 : vector<8x32xf32>
    %134 = vector.extract_strided_slice %15 {offsets = [24, 0], sizes = [8, 128], strides = [1, 1]} : vector<64x128xf32> to vector<8x128xf32>
    %cst_34 = arith.constant dense<0.000000e+00> : vector<8x128xf32>
    %135 = tpu.matmul %114, %16, %cst_34 {dimension_numbers = #tpu.dot_dimension_numbers<[1], [0], [0], [1], [0, 0, 1, 1], [], []>} : vector<8x32xf32>, vector<32x128xf32>, vector<8x128xf32> -> vector<8x128xf32>
    %136 = arith.addf %134, %135 : vector<8x128xf32>
    %137 = arith.negf %136 : vector<8x128xf32>
    %138 = math.exp %137 : vector<8x128xf32>
    %cst_35 = arith.constant 1.000000e+00 : f32
    %139 = vector.broadcast %cst_35 : f32 to vector<8x128xf32>
    %140 = arith.addf %139, %138 : vector<8x128xf32>
    %141 = arith.divf %139, %140 : vector<8x128xf32>
    %142 = math.tanh %136 : vector<8x128xf32>
    %143 = vector.extract_strided_slice %141 {offsets = [0, 32], sizes = [8, 32], strides = [1, 1]} : vector<8x128xf32> to vector<8x32xf32>
    %144 = arith.mulf %143, %111 : vector<8x32xf32>
    %145 = vector.extract_strided_slice %141 {offsets = [0, 0], sizes = [8, 32], strides = [1, 1]} : vector<8x128xf32> to vector<8x32xf32>
    %146 = vector.extract_strided_slice %142 {offsets = [0, 64], sizes = [8, 32], strides = [1, 1]} : vector<8x128xf32> to vector<8x32xf32>
    %147 = arith.mulf %145, %146 : vector<8x32xf32>
    %148 = arith.addf %144, %147 : vector<8x32xf32>
    %149 = vector.extract_strided_slice %141 {offsets = [0, 96], sizes = [8, 32], strides = [1, 1]} : vector<8x128xf32> to vector<8x32xf32>
    %150 = math.tanh %148 : vector<8x32xf32>
    %151 = arith.mulf %149, %150 : vector<8x32xf32>
    %152 = tpu.concatenate %151, %133 in 1 : vector<8x32xf32>, vector<8x32xf32> -> vector<8x64xf32>
    %cst_36 = arith.constant dense<0.000000e+00> : vector<8x128xf32>
    %153 = tpu.matmul %152, %17, %cst_36 {dimension_numbers = #tpu.dot_dimension_numbers<[1], [0], [0], [1], [0, 0, 1, 1], [], []>} : vector<8x64xf32>, vector<64x128xf32>, vector<8x128xf32> -> vector<8x128xf32>
    %154 = vector.broadcast %18 : vector<1x128xf32> to vector<8x128xf32>
    %155 = arith.addf %153, %154 : vector<8x128xf32>
    %156 = arith.negf %155 : vector<8x128xf32>
    %157 = math.exp %156 : vector<8x128xf32>
    %cst_37 = arith.constant 1.000000e+00 : f32
    %158 = vector.broadcast %cst_37 : f32 to vector<8x128xf32>
    %159 = arith.addf %158, %157 : vector<8x128xf32>
    %160 = arith.divf %158, %159 : vector<8x128xf32>
    %161 = math.tanh %155 : vector<8x128xf32>
    %162 = vector.extract_strided_slice %160 {offsets = [0, 32], sizes = [8, 32], strides = [1, 1]} : vector<8x128xf32> to vector<8x32xf32>
    %163 = arith.mulf %162, %130 : vector<8x32xf32>
    %164 = vector.extract_strided_slice %160 {offsets = [0, 0], sizes = [8, 32], strides = [1, 1]} : vector<8x128xf32> to vector<8x32xf32>
    %165 = vector.extract_strided_slice %161 {offsets = [0, 64], sizes = [8, 32], strides = [1, 1]} : vector<8x128xf32> to vector<8x32xf32>
    %166 = arith.mulf %164, %165 : vector<8x32xf32>
    %167 = arith.addf %163, %166 : vector<8x32xf32>
    %168 = vector.extract_strided_slice %160 {offsets = [0, 96], sizes = [8, 32], strides = [1, 1]} : vector<8x128xf32> to vector<8x32xf32>
    %169 = math.tanh %167 : vector<8x32xf32>
    %170 = arith.mulf %168, %169 : vector<8x32xf32>
    %171 = vector.extract_strided_slice %15 {offsets = [32, 0], sizes = [8, 128], strides = [1, 1]} : vector<64x128xf32> to vector<8x128xf32>
    %cst_38 = arith.constant dense<0.000000e+00> : vector<8x128xf32>
    %172 = tpu.matmul %151, %16, %cst_38 {dimension_numbers = #tpu.dot_dimension_numbers<[1], [0], [0], [1], [0, 0, 1, 1], [], []>} : vector<8x32xf32>, vector<32x128xf32>, vector<8x128xf32> -> vector<8x128xf32>
    %173 = arith.addf %171, %172 : vector<8x128xf32>
    %174 = arith.negf %173 : vector<8x128xf32>
    %175 = math.exp %174 : vector<8x128xf32>
    %cst_39 = arith.constant 1.000000e+00 : f32
    %176 = vector.broadcast %cst_39 : f32 to vector<8x128xf32>
    %177 = arith.addf %176, %175 : vector<8x128xf32>
    %178 = arith.divf %176, %177 : vector<8x128xf32>
    %179 = math.tanh %173 : vector<8x128xf32>
    %180 = vector.extract_strided_slice %178 {offsets = [0, 32], sizes = [8, 32], strides = [1, 1]} : vector<8x128xf32> to vector<8x32xf32>
    %181 = arith.mulf %180, %148 : vector<8x32xf32>
    %182 = vector.extract_strided_slice %178 {offsets = [0, 0], sizes = [8, 32], strides = [1, 1]} : vector<8x128xf32> to vector<8x32xf32>
    %183 = vector.extract_strided_slice %179 {offsets = [0, 64], sizes = [8, 32], strides = [1, 1]} : vector<8x128xf32> to vector<8x32xf32>
    %184 = arith.mulf %182, %183 : vector<8x32xf32>
    %185 = arith.addf %181, %184 : vector<8x32xf32>
    %186 = vector.extract_strided_slice %178 {offsets = [0, 96], sizes = [8, 32], strides = [1, 1]} : vector<8x128xf32> to vector<8x32xf32>
    %187 = math.tanh %185 : vector<8x32xf32>
    %188 = arith.mulf %186, %187 : vector<8x32xf32>
    %189 = tpu.concatenate %188, %170 in 1 : vector<8x32xf32>, vector<8x32xf32> -> vector<8x64xf32>
    %cst_40 = arith.constant dense<0.000000e+00> : vector<8x128xf32>
    %190 = tpu.matmul %189, %17, %cst_40 {dimension_numbers = #tpu.dot_dimension_numbers<[1], [0], [0], [1], [0, 0, 1, 1], [], []>} : vector<8x64xf32>, vector<64x128xf32>, vector<8x128xf32> -> vector<8x128xf32>
    %191 = vector.broadcast %18 : vector<1x128xf32> to vector<8x128xf32>
    %192 = arith.addf %190, %191 : vector<8x128xf32>
    %193 = arith.negf %192 : vector<8x128xf32>
    %194 = math.exp %193 : vector<8x128xf32>
    %cst_41 = arith.constant 1.000000e+00 : f32
    %195 = vector.broadcast %cst_41 : f32 to vector<8x128xf32>
    %196 = arith.addf %195, %194 : vector<8x128xf32>
    %197 = arith.divf %195, %196 : vector<8x128xf32>
    %198 = math.tanh %192 : vector<8x128xf32>
    %199 = vector.extract_strided_slice %197 {offsets = [0, 32], sizes = [8, 32], strides = [1, 1]} : vector<8x128xf32> to vector<8x32xf32>
    %200 = arith.mulf %199, %167 : vector<8x32xf32>
    %201 = vector.extract_strided_slice %197 {offsets = [0, 0], sizes = [8, 32], strides = [1, 1]} : vector<8x128xf32> to vector<8x32xf32>
    %202 = vector.extract_strided_slice %198 {offsets = [0, 64], sizes = [8, 32], strides = [1, 1]} : vector<8x128xf32> to vector<8x32xf32>
    %203 = arith.mulf %201, %202 : vector<8x32xf32>
    %204 = arith.addf %200, %203 : vector<8x32xf32>
    %205 = vector.extract_strided_slice %197 {offsets = [0, 96], sizes = [8, 32], strides = [1, 1]} : vector<8x128xf32> to vector<8x32xf32>
    %206 = math.tanh %204 : vector<8x32xf32>
    %207 = arith.mulf %205, %206 : vector<8x32xf32>
    %208 = vector.extract_strided_slice %15 {offsets = [40, 0], sizes = [8, 128], strides = [1, 1]} : vector<64x128xf32> to vector<8x128xf32>
    %cst_42 = arith.constant dense<0.000000e+00> : vector<8x128xf32>
    %209 = tpu.matmul %188, %16, %cst_42 {dimension_numbers = #tpu.dot_dimension_numbers<[1], [0], [0], [1], [0, 0, 1, 1], [], []>} : vector<8x32xf32>, vector<32x128xf32>, vector<8x128xf32> -> vector<8x128xf32>
    %210 = arith.addf %208, %209 : vector<8x128xf32>
    %211 = arith.negf %210 : vector<8x128xf32>
    %212 = math.exp %211 : vector<8x128xf32>
    %cst_43 = arith.constant 1.000000e+00 : f32
    %213 = vector.broadcast %cst_43 : f32 to vector<8x128xf32>
    %214 = arith.addf %213, %212 : vector<8x128xf32>
    %215 = arith.divf %213, %214 : vector<8x128xf32>
    %216 = math.tanh %210 : vector<8x128xf32>
    %217 = vector.extract_strided_slice %215 {offsets = [0, 32], sizes = [8, 32], strides = [1, 1]} : vector<8x128xf32> to vector<8x32xf32>
    %218 = arith.mulf %217, %185 : vector<8x32xf32>
    %219 = vector.extract_strided_slice %215 {offsets = [0, 0], sizes = [8, 32], strides = [1, 1]} : vector<8x128xf32> to vector<8x32xf32>
    %220 = vector.extract_strided_slice %216 {offsets = [0, 64], sizes = [8, 32], strides = [1, 1]} : vector<8x128xf32> to vector<8x32xf32>
    %221 = arith.mulf %219, %220 : vector<8x32xf32>
    %222 = arith.addf %218, %221 : vector<8x32xf32>
    %223 = vector.extract_strided_slice %215 {offsets = [0, 96], sizes = [8, 32], strides = [1, 1]} : vector<8x128xf32> to vector<8x32xf32>
    %224 = math.tanh %222 : vector<8x32xf32>
    %225 = arith.mulf %223, %224 : vector<8x32xf32>
    %226 = tpu.concatenate %225, %207 in 1 : vector<8x32xf32>, vector<8x32xf32> -> vector<8x64xf32>
    %cst_44 = arith.constant dense<0.000000e+00> : vector<8x128xf32>
    %227 = tpu.matmul %226, %17, %cst_44 {dimension_numbers = #tpu.dot_dimension_numbers<[1], [0], [0], [1], [0, 0, 1, 1], [], []>} : vector<8x64xf32>, vector<64x128xf32>, vector<8x128xf32> -> vector<8x128xf32>
    %228 = vector.broadcast %18 : vector<1x128xf32> to vector<8x128xf32>
    %229 = arith.addf %227, %228 : vector<8x128xf32>
    %230 = arith.negf %229 : vector<8x128xf32>
    %231 = math.exp %230 : vector<8x128xf32>
    %cst_45 = arith.constant 1.000000e+00 : f32
    %232 = vector.broadcast %cst_45 : f32 to vector<8x128xf32>
    %233 = arith.addf %232, %231 : vector<8x128xf32>
    %234 = arith.divf %232, %233 : vector<8x128xf32>
    %235 = math.tanh %229 : vector<8x128xf32>
    %236 = vector.extract_strided_slice %234 {offsets = [0, 32], sizes = [8, 32], strides = [1, 1]} : vector<8x128xf32> to vector<8x32xf32>
    %237 = arith.mulf %236, %204 : vector<8x32xf32>
    %238 = vector.extract_strided_slice %234 {offsets = [0, 0], sizes = [8, 32], strides = [1, 1]} : vector<8x128xf32> to vector<8x32xf32>
    %239 = vector.extract_strided_slice %235 {offsets = [0, 64], sizes = [8, 32], strides = [1, 1]} : vector<8x128xf32> to vector<8x32xf32>
    %240 = arith.mulf %238, %239 : vector<8x32xf32>
    %241 = arith.addf %237, %240 : vector<8x32xf32>
    %242 = vector.extract_strided_slice %234 {offsets = [0, 96], sizes = [8, 32], strides = [1, 1]} : vector<8x128xf32> to vector<8x32xf32>
    %243 = math.tanh %241 : vector<8x32xf32>
    %244 = arith.mulf %242, %243 : vector<8x32xf32>
    %245 = vector.extract_strided_slice %15 {offsets = [48, 0], sizes = [8, 128], strides = [1, 1]} : vector<64x128xf32> to vector<8x128xf32>
    %cst_46 = arith.constant dense<0.000000e+00> : vector<8x128xf32>
    %246 = tpu.matmul %225, %16, %cst_46 {dimension_numbers = #tpu.dot_dimension_numbers<[1], [0], [0], [1], [0, 0, 1, 1], [], []>} : vector<8x32xf32>, vector<32x128xf32>, vector<8x128xf32> -> vector<8x128xf32>
    %247 = arith.addf %245, %246 : vector<8x128xf32>
    %248 = arith.negf %247 : vector<8x128xf32>
    %249 = math.exp %248 : vector<8x128xf32>
    %cst_47 = arith.constant 1.000000e+00 : f32
    %250 = vector.broadcast %cst_47 : f32 to vector<8x128xf32>
    %251 = arith.addf %250, %249 : vector<8x128xf32>
    %252 = arith.divf %250, %251 : vector<8x128xf32>
    %253 = math.tanh %247 : vector<8x128xf32>
    %254 = vector.extract_strided_slice %252 {offsets = [0, 32], sizes = [8, 32], strides = [1, 1]} : vector<8x128xf32> to vector<8x32xf32>
    %255 = arith.mulf %254, %222 : vector<8x32xf32>
    %256 = vector.extract_strided_slice %252 {offsets = [0, 0], sizes = [8, 32], strides = [1, 1]} : vector<8x128xf32> to vector<8x32xf32>
    %257 = vector.extract_strided_slice %253 {offsets = [0, 64], sizes = [8, 32], strides = [1, 1]} : vector<8x128xf32> to vector<8x32xf32>
    %258 = arith.mulf %256, %257 : vector<8x32xf32>
    %259 = arith.addf %255, %258 : vector<8x32xf32>
    %260 = vector.extract_strided_slice %252 {offsets = [0, 96], sizes = [8, 32], strides = [1, 1]} : vector<8x128xf32> to vector<8x32xf32>
    %261 = math.tanh %259 : vector<8x32xf32>
    %262 = arith.mulf %260, %261 : vector<8x32xf32>
    %263 = tpu.concatenate %262, %244 in 1 : vector<8x32xf32>, vector<8x32xf32> -> vector<8x64xf32>
    %cst_48 = arith.constant dense<0.000000e+00> : vector<8x128xf32>
    %264 = tpu.matmul %263, %17, %cst_48 {dimension_numbers = #tpu.dot_dimension_numbers<[1], [0], [0], [1], [0, 0, 1, 1], [], []>} : vector<8x64xf32>, vector<64x128xf32>, vector<8x128xf32> -> vector<8x128xf32>
    %265 = vector.broadcast %18 : vector<1x128xf32> to vector<8x128xf32>
    %266 = arith.addf %264, %265 : vector<8x128xf32>
    %267 = arith.negf %266 : vector<8x128xf32>
    %268 = math.exp %267 : vector<8x128xf32>
    %cst_49 = arith.constant 1.000000e+00 : f32
    %269 = vector.broadcast %cst_49 : f32 to vector<8x128xf32>
    %270 = arith.addf %269, %268 : vector<8x128xf32>
    %271 = arith.divf %269, %270 : vector<8x128xf32>
    %272 = math.tanh %266 : vector<8x128xf32>
    %273 = vector.extract_strided_slice %271 {offsets = [0, 32], sizes = [8, 32], strides = [1, 1]} : vector<8x128xf32> to vector<8x32xf32>
    %274 = arith.mulf %273, %241 : vector<8x32xf32>
    %275 = vector.extract_strided_slice %271 {offsets = [0, 0], sizes = [8, 32], strides = [1, 1]} : vector<8x128xf32> to vector<8x32xf32>
    %276 = vector.extract_strided_slice %272 {offsets = [0, 64], sizes = [8, 32], strides = [1, 1]} : vector<8x128xf32> to vector<8x32xf32>
    %277 = arith.mulf %275, %276 : vector<8x32xf32>
    %278 = arith.addf %274, %277 : vector<8x32xf32>
    %279 = vector.extract_strided_slice %271 {offsets = [0, 96], sizes = [8, 32], strides = [1, 1]} : vector<8x128xf32> to vector<8x32xf32>
    %280 = math.tanh %278 : vector<8x32xf32>
    %281 = arith.mulf %279, %280 : vector<8x32xf32>
    %282 = vector.extract_strided_slice %15 {offsets = [56, 0], sizes = [8, 128], strides = [1, 1]} : vector<64x128xf32> to vector<8x128xf32>
    %cst_50 = arith.constant dense<0.000000e+00> : vector<8x128xf32>
    %283 = tpu.matmul %262, %16, %cst_50 {dimension_numbers = #tpu.dot_dimension_numbers<[1], [0], [0], [1], [0, 0, 1, 1], [], []>} : vector<8x32xf32>, vector<32x128xf32>, vector<8x128xf32> -> vector<8x128xf32>
    %284 = arith.addf %282, %283 : vector<8x128xf32>
    %285 = arith.negf %284 : vector<8x128xf32>
    %286 = math.exp %285 : vector<8x128xf32>
    %cst_51 = arith.constant 1.000000e+00 : f32
    %287 = vector.broadcast %cst_51 : f32 to vector<8x128xf32>
    %288 = arith.addf %287, %286 : vector<8x128xf32>
    %289 = arith.divf %287, %288 : vector<8x128xf32>
    %290 = math.tanh %284 : vector<8x128xf32>
    %291 = vector.extract_strided_slice %289 {offsets = [0, 32], sizes = [8, 32], strides = [1, 1]} : vector<8x128xf32> to vector<8x32xf32>
    %292 = arith.mulf %291, %259 : vector<8x32xf32>
    %293 = vector.extract_strided_slice %289 {offsets = [0, 0], sizes = [8, 32], strides = [1, 1]} : vector<8x128xf32> to vector<8x32xf32>
    %294 = vector.extract_strided_slice %290 {offsets = [0, 64], sizes = [8, 32], strides = [1, 1]} : vector<8x128xf32> to vector<8x32xf32>
    %295 = arith.mulf %293, %294 : vector<8x32xf32>
    %296 = arith.addf %292, %295 : vector<8x32xf32>
    %297 = vector.extract_strided_slice %289 {offsets = [0, 96], sizes = [8, 32], strides = [1, 1]} : vector<8x128xf32> to vector<8x32xf32>
    %298 = math.tanh %296 : vector<8x32xf32>
    %299 = arith.mulf %297, %298 : vector<8x32xf32>
    %300 = tpu.concatenate %299, %281 in 1 : vector<8x32xf32>, vector<8x32xf32> -> vector<8x64xf32>
    %cst_52 = arith.constant dense<0.000000e+00> : vector<8x128xf32>
    %301 = tpu.matmul %300, %17, %cst_52 {dimension_numbers = #tpu.dot_dimension_numbers<[1], [0], [0], [1], [0, 0, 1, 1], [], []>} : vector<8x64xf32>, vector<64x128xf32>, vector<8x128xf32> -> vector<8x128xf32>
    %302 = vector.broadcast %18 : vector<1x128xf32> to vector<8x128xf32>
    %303 = arith.addf %301, %302 : vector<8x128xf32>
    %304 = arith.negf %303 : vector<8x128xf32>
    %305 = math.exp %304 : vector<8x128xf32>
    %cst_53 = arith.constant 1.000000e+00 : f32
    %306 = vector.broadcast %cst_53 : f32 to vector<8x128xf32>
    %307 = arith.addf %306, %305 : vector<8x128xf32>
    %308 = arith.divf %306, %307 : vector<8x128xf32>
    %309 = math.tanh %303 : vector<8x128xf32>
    %310 = vector.extract_strided_slice %308 {offsets = [0, 32], sizes = [8, 32], strides = [1, 1]} : vector<8x128xf32> to vector<8x32xf32>
    %311 = arith.mulf %310, %278 : vector<8x32xf32>
    %312 = vector.extract_strided_slice %308 {offsets = [0, 0], sizes = [8, 32], strides = [1, 1]} : vector<8x128xf32> to vector<8x32xf32>
    %313 = vector.extract_strided_slice %309 {offsets = [0, 64], sizes = [8, 32], strides = [1, 1]} : vector<8x128xf32> to vector<8x32xf32>
    %314 = arith.mulf %312, %313 : vector<8x32xf32>
    %315 = arith.addf %311, %314 : vector<8x32xf32>
    %316 = vector.extract_strided_slice %308 {offsets = [0, 96], sizes = [8, 32], strides = [1, 1]} : vector<8x128xf32> to vector<8x32xf32>
    %317 = math.tanh %315 : vector<8x32xf32>
    %318 = arith.mulf %316, %317 : vector<8x32xf32>
    %c0_54 = arith.constant 0 : index
    %c0_55 = arith.constant 0 : index
    %319 = vector.load %arg8[%c0_54, %c0_55] : memref<32x1024xf32, #tpu.memory_space<vmem>>, vector<32x1024xf32>
    %cst_56 = arith.constant dense<0.000000e+00> : vector<8x1024xf32>
    %320 = tpu.matmul %318, %319, %cst_56 {dimension_numbers = #tpu.dot_dimension_numbers<[1], [0], [0], [1], [0, 0, 1, 1], [], []>} : vector<8x32xf32>, vector<32x1024xf32>, vector<8x1024xf32> -> vector<8x1024xf32>
    %c0_57 = arith.constant 0 : index
    %c0_58 = arith.constant 0 : index
    %321 = vector.load %arg9[%c0_57, %c0_58] : memref<1x1024xf32, #tpu.memory_space<vmem>>, vector<1x1024xf32>
    %322 = vector.broadcast %321 : vector<1x1024xf32> to vector<8x1024xf32>
    %323 = arith.addf %320, %322 : vector<8x1024xf32>
    %cst_59 = arith.constant 0.000000e+00 : f32
    %324 = vector.broadcast %cst_59 : f32 to vector<8x1024xf32>
    %325 = arith.cmpf ogt, %323, %324 : vector<8x1024xf32>
    %cst_60 = arith.constant 0.00999999977 : f32
    %326 = vector.broadcast %cst_60 : f32 to vector<8x1024xf32>
    %327 = arith.mulf %326, %323 : vector<8x1024xf32>
    %328 = arith.select %325, %323, %327 : vector<8x1024xi1>, vector<8x1024xf32>
    %c0_61 = arith.constant 0 : index
    %c0_62 = arith.constant 0 : index
    %329 = vector.load %arg10[%c0_61, %c0_62] : memref<1024x128xf32, #tpu.memory_space<vmem>>, vector<1024x128xf32>
    %cst_63 = arith.constant dense<0.000000e+00> : vector<8x128xf32>
    %330 = tpu.matmul %328, %329, %cst_63 {dimension_numbers = #tpu.dot_dimension_numbers<[1], [0], [0], [1], [0, 0, 1, 1], [], []>} : vector<8x1024xf32>, vector<1024x128xf32>, vector<8x128xf32> -> vector<8x128xf32>
    %c0_64 = arith.constant 0 : index
    %c0_65 = arith.constant 0 : index
    %331 = vector.load %arg11[%c0_64, %c0_65] : memref<1x128xf32, #tpu.memory_space<vmem>>, vector<1x128xf32>
    %332 = vector.broadcast %331 : vector<1x128xf32> to vector<8x128xf32>
    %333 = arith.addf %330, %332 : vector<8x128xf32>
    %c0_66 = arith.constant 0 : index
    %c0_67 = arith.constant 0 : index
    %334 = vector.load %arg12[%c0_66, %c0_67] : memref<8x128xf32, #tpu.memory_space<vmem>>, vector<8x128xf32>
    tpu.vector_store %arg12[%c0_66, %c0_67], %333 {strides = array<i32>} : memref<8x128xf32, #tpu.memory_space<vmem>>, vector<8x128xf32>,
    return
  }
}

</mosaic_0001>

<llo_original>
// kernel: tpu_custom_call.1
$region0: #{tpu_custom_call.1}
  #allocation0 [shape = 'u32[]', space=smem, size = 0x4, offset = 0x4, fixed_abs, tag = 'smem constant byte address 0x4 - core index']
  #allocation1 [shape = 'u32[144,128]{1,0:T(1,128)}', space=vmem, size = 0x12000, scoped, tag = 'internal scratch']
  %s0 = inlined_call_operand.vmem [shape: f32[64,16], index: 0, kind: input, shape index: {}]
  %s1 = inlined_call_operand.hbm [shape: f32[16,32], index: 1, kind: input, shape index: {}]
  %s2 = inlined_call_operand.vmem [shape: f32[1,32], index: 2, kind: input, shape index: {}]
  %s3 = inlined_call_operand.vmem [shape: f32[32,128], index: 3, kind: input, shape index: {}]
  %s4 = inlined_call_operand.hbm [shape: f32[32,128], index: 4, kind: input, shape index: {}]
  %s5 = inlined_call_operand.vmem [shape: f32[1,128], index: 5, kind: input, shape index: {}]
  %s6 = inlined_call_operand.vmem [shape: f32[64,128], index: 6, kind: input, shape index: {}]
  %s7 = inlined_call_operand.hbm [shape: f32[1,128], index: 7, kind: input, shape index: {}]
  %s8 = inlined_call_operand.hbm [shape: f32[32,1024], index: 8, kind: input, shape index: {}]
  %s9 = inlined_call_operand.vmem [shape: f32[1,1024], index: 9, kind: input, shape index: {}]
  %s10 = inlined_call_operand.hbm [shape: f32[1024,128], index: 10, kind: input, shape index: {}]
  %s11 = inlined_call_operand.vmem [shape: f32[1,128], index: 11, kind: input, shape index: {}]
  %s12 = inlined_call_operand.hbm [shape: f32[8,128], index: 12, kind: output, shape index: {}]
  %s13 = sld [smem:[#allocation0]]
  $region78: #{tpu_custom_call.1} parent=0
    _
  %s15 = ssub.s32 1, %s13
  %s16 = scalar_select 0, %s15, %s13
  $region1: #{tpu_custom_call.1} parent=0
    #allocation2 [shape = 'u8[8192]{0}', space=vmem, size = 0x2000, scoped, tag = 'input window, operand 1, single buffered']
    #allocation3 [shape = 's32[1]{0}', space=sflag, size = 0x4, scoped, tag = 'scoped memory for tpu_custom_call.1']
    #allocation4 [shape = 's32[1]{0}', space=sflag, size = 0x4, scoped, tag = 'scoped memory for tpu_custom_call.1']
    #allocation5 [shape = 'u8[16384]{0}', space=vmem, size = 0x4000, scoped, tag = 'input window, operand 4, single buffered']
    #allocation6 [shape = 's32[1]{0}', space=sflag, size = 0x4, scoped, tag = 'scoped memory for tpu_custom_call.1']
    #allocation7 [shape = 'u8[512]{0}', space=vmem, size = 0x400, scoped, tag = 'input window, operand 7, single buffered']
    #allocation8 [shape = 'u8[131072]{0}', space=vmem, size = 0x20000, scoped, tag = 'input window, operand 8, single buffered']
    #allocation9 [shape = 's32[1]{0}', space=sflag, size = 0x4, scoped, tag = 'scoped memory for tpu_custom_call.1']
    #allocation10 [shape = 'u8[524288]{0}', space=vmem, size = 0x80000, scoped, tag = 'input window, operand 10, single buffered']
    #allocation11 [shape = 'u8[4096]{0}', space=vmem, size = 0x1000, scoped, tag = 'output window, operand 0, single buffered']
    %17 = vsyncpa [#allocation3], 0
    %18 = vsyncpa [#allocation6], 0
    %19 = vsyncpa [#allocation9], 0
    %20 = vsyncpa [#allocation4], 0
    // Predicated region
    $region2: #{tpu_custom_call.1} parent=1 // pred_check
      _
    $region3: #{tpu_custom_call.1} parent=1 // pred_check_branch
      %22 = sbr.rel (0) target = $region5
    $region4: #{tpu_custom_call.1} parent=1 // pred_region
      _
    $region5: #{tpu_custom_call.1} parent=1 // pred_fallthru
      _
    // Predicated region
    $region6: #{tpu_custom_call.1} parent=1 // pred_check
      _
    $region7: #{tpu_custom_call.1} parent=1 // pred_check_branch
      %24 = sbr.rel (0) target = $region9
    $region8: #{tpu_custom_call.1} parent=1 // pred_region
      %s26 = ssub.s32 256, 256
      %27 = vsyncadd [#allocation3], %s26
      %s28 = sshll.u32 [#allocation2], 4
      %s29 = int_to_ptr.vmem [resolvable:$true] %s28
      %34 = dma.hbm_to_vmem [thread:$0]  %s1, 256, %s29, [#allocation3], 128, 128, 8
    $region9: #{tpu_custom_call.1} parent=1 // pred_fallthru
      _
    // Predicated region
    $region10: #{tpu_custom_call.1} parent=1 // pred_check
      _
    $region11: #{tpu_custom_call.1} parent=1 // pred_check_branch
      %36 = sbr.rel (0) target = $region13
    $region12: #{tpu_custom_call.1} parent=1 // pred_region
      _
    $region13: #{tpu_custom_call.1} parent=1 // pred_fallthru
      _
    // Predicated region
    $region14: #{tpu_custom_call.1} parent=1 // pred_check
      _
    $region15: #{tpu_custom_call.1} parent=1 // pred_check_branch
      %38 = sbr.rel (0) target = $region17
    $region16: #{tpu_custom_call.1} parent=1 // pred_region
      _
    $region17: #{tpu_custom_call.1} parent=1 // pred_fallthru
      _
    // Predicated region
    $region18: #{tpu_custom_call.1} parent=1 // pred_check
      _
    $region19: #{tpu_custom_call.1} parent=1 // pred_check_branch
      %40 = sbr.rel (0) target = $region21
    $region20: #{tpu_custom_call.1} parent=1 // pred_region
      %s42 = ssub.s32 512, 512
      %43 = vsyncadd [#allocation6], %s42
      %s44 = sshll.u32 [#allocation5], 4
      %s45 = int_to_ptr.vmem [resolvable:$true] %s44
      %50 = dma.hbm_to_vmem [thread:$0]  %s4, 512, %s45, [#allocation6], 128, 128, 8
    $region21: #{tpu_custom_call.1} parent=1 // pred_fallthru
      _
    // Predicated region
    $region22: #{tpu_custom_call.1} parent=1 // pred_check
      _
    $region23: #{tpu_custom_call.1} parent=1 // pred_check_branch
      %52 = sbr.rel (0) target = $region25
    $region24: #{tpu_custom_call.1} parent=1 // pred_region
      _
    $region25: #{tpu_custom_call.1} parent=1 // pred_fallthru
      _
    // Predicated region
    $region26: #{tpu_custom_call.1} parent=1 // pred_check
      _
    $region27: #{tpu_custom_call.1} parent=1 // pred_check_branch
      %54 = sbr.rel (0) target = $region29
    $region28: #{tpu_custom_call.1} parent=1 // pred_region
      _
    $region29: #{tpu_custom_call.1} parent=1 // pred_fallthru
      _
    // Predicated region
    $region30: #{tpu_custom_call.1} parent=1 // pred_check
      _
    $region31: #{tpu_custom_call.1} parent=1 // pred_check_branch
      %56 = sbr.rel (0) target = $region33
    $region32: #{tpu_custom_call.1} parent=1 // pred_region
      %s58 = ssub.s32 16, 16
      %59 = vsyncadd [#allocation6], %s58
      %s61 = sshll.u32 [#allocation7], 4
      %s62 = int_to_ptr.vmem [resolvable:$true] %s61
      %64 = dma.hbm_to_vmem [thread:$0]  %s7, 16, %s62, [#allocation6]
    $region33: #{tpu_custom_call.1} parent=1 // pred_fallthru
      _
    // Predicated region
    $region34: #{tpu_custom_call.1} parent=1 // pred_check
      _
    $region35: #{tpu_custom_call.1} parent=1 // pred_check_branch
      %66 = sbr.rel (0) target = $region37
    $region36: #{tpu_custom_call.1} parent=1 // pred_region
      %s68 = ssub.s32 4096, 4096
      %69 = vsyncadd [#allocation9], %s68
      %s70 = sshll.u32 [#allocation8], 4
      %s71 = int_to_ptr.vmem [resolvable:$true] %s70
      %76 = dma.hbm_to_vmem [thread:$0]  %s8, 4096, %s71, [#allocation9], 1024, 1024, 64
    $region37: #{tpu_custom_call.1} parent=1 // pred_fallthru
      _
    // Predicated region
    $region38: #{tpu_custom_call.1} parent=1 // pred_check
      _
    $region39: #{tpu_custom_call.1} parent=1 // pred_check_branch
      %78 = sbr.rel (0) target = $region41
    $region40: #{tpu_custom_call.1} parent=1 // pred_region
      _
    $region41: #{tpu_custom_call.1} parent=1 // pred_fallthru
      _
    // Predicated region
    $region42: #{tpu_custom_call.1} parent=1 // pred_check
      _
    $region43: #{tpu_custom_call.1} parent=1 // pred_check_branch
      %80 = sbr.rel (0) target = $region45
    $region44: #{tpu_custom_call.1} parent=1 // pred_region
      %s82 = ssub.s32 16384, 16384
      %83 = vsyncadd [#allocation9], %s82
      %s84 = sshll.u32 [#allocation10], 4
      %s85 = int_to_ptr.vmem [resolvable:$true] %s84
      %90 = dma.hbm_to_vmem [thread:$0]  %s10, 16384, %s85, [#allocation9], 128, 128, 8
    $region45: #{tpu_custom_call.1} parent=1 // pred_fallthru
      _
    // Predicated region
    $region46: #{tpu_custom_call.1} parent=1 // pred_check
      _
    $region47: #{tpu_custom_call.1} parent=1 // pred_check_branch
      %92 = sbr.rel (0) target = $region49
    $region48: #{tpu_custom_call.1} parent=1 // pred_region
      _
    $region49: #{tpu_custom_call.1} parent=1 // pred_fallthru
      _
    // Predicated region
    $region50: #{tpu_custom_call.1} parent=1 // pred_check
      _
    $region51: #{tpu_custom_call.1} parent=1 // pred_check_branch
      %94 = sbr.rel (0) target = $region53
    $region52: #{tpu_custom_call.1} parent=1 // pred_region
      %95 = dma.done [#allocation3], 256
    $region53: #{tpu_custom_call.1} parent=1 // pred_fallthru
      _
    // Predicated region
    $region54: #{tpu_custom_call.1} parent=1 // pred_check
      _
    $region55: #{tpu_custom_call.1} parent=1 // pred_check_branch
      %97 = sbr.rel (0) target = $region57
    $region56: #{tpu_custom_call.1} parent=1 // pred_region
      %98 = dma.done [#allocation6], 512
    $region57: #{tpu_custom_call.1} parent=1 // pred_fallthru
      _
    // Predicated region
    $region58: #{tpu_custom_call.1} parent=1 // pred_check
      _
    $region59: #{tpu_custom_call.1} parent=1 // pred_check_branch
      %100 = sbr.rel (0) target = $region61
    $region60: #{tpu_custom_call.1} parent=1 // pred_region
      %101 = dma.done [#allocation6], 16
    $region61: #{tpu_custom_call.1} parent=1 // pred_fallthru
      _
    // Predicated region
    $region62: #{tpu_custom_call.1} parent=1 // pred_check
      _
    $region63: #{tpu_custom_call.1} parent=1 // pred_check_branch
      %103 = sbr.rel (0) target = $region65
    $region64: #{tpu_custom_call.1} parent=1 // pred_region
      %104 = dma.done [#allocation9], 4096
    $region65: #{tpu_custom_call.1} parent=1 // pred_fallthru
      _
    // Predicated region
    $region66: #{tpu_custom_call.1} parent=1 // pred_check
      _
    $region67: #{tpu_custom_call.1} parent=1 // pred_check_branch
      %106 = sbr.rel (0) target = $region69
    $region68: #{tpu_custom_call.1} parent=1 // pred_region
      %107 = dma.done [#allocation9], 16384
    $region69: #{tpu_custom_call.1} parent=1 // pred_fallthru
      _
    %v108 = vld [vmem:[%s0] sm:$0xff]
    %v109 = vld [vmem:[%s0 + $0x8] sm:$0xff]
    %v110 = vld [vmem:[%s0 + $0x10] sm:$0xff]
    %v111 = vld [vmem:[%s0 + $0x18] sm:$0xff]
    %v112 = vld [vmem:[%s0 + $0x20] sm:$0xff]
    %v113 = vld [vmem:[%s0 + $0x28] sm:$0xff]
    %v114 = vld [vmem:[%s0 + $0x30] sm:$0xff]
    %v115 = vld [vmem:[%s0 + $0x38] sm:$0xff]
    %v116 = vld [vmem:[#allocation2] sm:$0xff]
    %v117 = vld [vmem:[#allocation2 + $0x8] sm:$0xff]
    %v118 = vld [vmem:[%s2] sm:$0x1]
    %v120 = vlaneseq
    %v121 = vshrl.u32 %v120, 7
    %v122 = vsub.s32 0, %v121
    %v123 = vrot.slane %v118, %v122
    %vm125 = vcmask 130048
    %v127 = vsel %vm125, %v108, 0
    %v130 = vsel %vm125, %v109, 0
    %v133 = vsel %vm125, %v110, 0
    %v136 = vsel %vm125, %v111, 0
    %v139 = vsel %vm125, %v112, 0
    %v142 = vsel %vm125, %v113, 0
    %v145 = vsel %vm125, %v114, 0
    %v148 = vsel %vm125, %v115, 0
    %150 = vmatprep.subr.mxu0 0.0
    %151 = vmatpush1.msra.mxu0 %v116
    %152 = vmatprep.subr.mxu0 0.0
    %153 = vmatpush1.msra.mxu0 %v117
    %154 = vmatprep.subr.mxu0 0.0
    %155 = vmatpush1.msra.mxu0 0.0
    %156 = vmatprep.subr.mxu0 0.0
    %157 = vmatpush1.msra.mxu0 0.0
    %158 = vmatprep.subr.mxu0 0.0
    %159 = vmatpush1.msra.mxu0 0.0
    %160 = vmatprep.subr.mxu0 0.0
    %161 = vmatpush1.msra.mxu0 0.0
    %162 = vmatprep.subr.mxu0 0.0
    %163 = vmatpush1.msra.mxu0 0.0
    %164 = vmatprep.subr.mxu0 0.0
    %165 = vmatpush1.msra.mxu0 0.0
    %166 = vmatprep.subr.mxu0 0.0
    %167 = vmatpush1.msra.mxu0 0.0
    %168 = vmatprep.subr.mxu0 0.0
    %169 = vmatpush1.msra.mxu0 0.0
    %170 = vmatprep.subr.mxu0 0.0
    %171 = vmatpush1.msra.mxu0 0.0
    %172 = vmatprep.subr.mxu0 0.0
    %173 = vmatpush1.msra.mxu0 0.0
    %174 = vmatprep.subr.mxu0 0.0
    %175 = vmatpush1.msra.mxu0 0.0
    %176 = vmatprep.subr.mxu0 0.0
    %177 = vmatpush1.msra.mxu0 0.0
    %178 = vmatprep.subr.mxu0 0.0
    %179 = vmatpush1.msra.mxu0 0.0
    %180 = vmatprep.subr.mxu0 0.0
    %181 = vmatpush1.msra.mxu0 0.0
    %182 = vmatprep.subr.mxu0 0.0
    %183 = vmatpush1.msra.mxu0 0.0
    %184 = vmatprep.subr.mxu0 0.0
    %185 = vmatpush1.msra.mxu0 0.0
    %186 = vmatprep.subr.mxu0 0.0
    %187 = vmatpush1.msra.mxu0 0.0
    %188 = vmatprep.subr.mxu0 0.0
    %189 = vmatpush1.msra.mxu0 0.0
    %190 = vmatprep.subr.mxu0 0.0
    %191 = vmatpush1.msra.mxu0 0.0
    %192 = vmatprep.subr.mxu0 0.0
    %193 = vmatpush1.msra.mxu0 0.0
    %194 = vmatprep.subr.mxu0 0.0
    %195 = vmatpush1.msra.mxu0 0.0
    %196 = vmatprep.subr.mxu0 0.0
    %197 = vmatpush1.msra.mxu0 0.0
    %198 = vmatprep.subr.mxu0 0.0
    %199 = vmatpush1.msra.mxu0 0.0
    %200 = vmatprep.subr.mxu0 0.0
    %201 = vmatpush1.msra.mxu0 0.0
    %202 = vmatprep.subr.mxu0 0.0
    %203 = vmatpush1.msra.mxu0 0.0
    %204 = vmatprep.subr.mxu0 0.0
    %205 = vmatpush1.msra.mxu0 0.0
    %206 = vmatprep.subr.mxu0 0.0
    %207 = vmatpush1.msra.mxu0 0.0
    %208 = vmatprep.subr.mxu0 0.0
    %209 = vmatpush1.msra.mxu0 0.0
    %210 = vmatprep.subr.mxu0 0.0
    %211 = vmatpush1.msra.mxu0 0.0
    %212 = vmatprep.subr.mxu0 0.0
    %213 = vmatpush1.msra.mxu0 0.0
    %214 = vmatprep.mubr.f32.mxu0 0.0
    %215 = vmatmul.mubr.f32.gmra.mrb[0].mxu0 %v127
    %v216 = vpop.f32.mrb[0].mxu0
    %v217 = vadd.f32 %v123, %v216
    %v218 = vpop.f32.mrb[0].mxu0
    %219 = vmatprep.mubr.f32.mxu0 0.0
    %220 = vmatmul.mubr.f32.gmra.mrb[0].mxu0 %v130
    %v221 = vpop.f32.mrb[0].mxu0
    %v222 = vadd.f32 %v123, %v221
    %v223 = vpop.f32.mrb[0].mxu0
    %224 = vmatprep.mubr.f32.mxu0 0.0
    %225 = vmatmul.mubr.f32.gmra.mrb[0].mxu0 %v133
    %v226 = vpop.f32.mrb[0].mxu0
    %v227 = vadd.f32 %v123, %v226
    %v228 = vpop.f32.mrb[0].mxu0
    %229 = vmatprep.mubr.f32.mxu0 0.0
    %230 = vmatmul.mubr.f32.gmra.mrb[0].mxu0 %v136
    %v231 = vpop.f32.mrb[0].mxu0
    %v232 = vadd.f32 %v123, %v231
    %v233 = vpop.f32.mrb[0].mxu0
    %234 = vmatprep.mubr.f32.mxu0 0.0
    %235 = vmatmul.mubr.f32.gmra.mrb[0].mxu0 %v139
    %v236 = vpop.f32.mrb[0].mxu0
    %v237 = vadd.f32 %v123, %v236
    %v238 = vpop.f32.mrb[0].mxu0
    %239 = vmatprep.mubr.f32.mxu0 0.0
    %240 = vmatmul.mubr.f32.gmra.mrb[0].mxu0 %v142
    %v241 = vpop.f32.mrb[0].mxu0
    %v242 = vadd.f32 %v123, %v241
    %v243 = vpop.f32.mrb[0].mxu0
    %244 = vmatprep.mubr.f32.mxu0 0.0
    %245 = vmatmul.mubr.f32.gmra.mrb[0].mxu0 %v145
    %v246 = vpop.f32.mrb[0].mxu0
    %v247 = vadd.f32 %v123, %v246
    %v248 = vpop.f32.mrb[0].mxu0
    %249 = vmatprep.mubr.f32.mxu0 0.0
    %250 = vmatmul.mubr.f32.gmra.mrb[0].mxu0 %v148
    %v251 = vpop.f32.mrb[0].mxu0
    %v252 = vadd.f32 %v123, %v251
    %v253 = vpop.f32.mrb[0].mxu0
    %254 = vdwg.mxu0
    %vm255 = vcmp.gt.f32.partialorder %v217, 0.0
    %vm256 = vcmp.gt.f32.partialorder %v222, 0.0
    %vm257 = vcmp.gt.f32.partialorder %v227, 0.0
    %vm258 = vcmp.gt.f32.partialorder %v232, 0.0
    %vm259 = vcmp.gt.f32.partialorder %v237, 0.0
    %vm260 = vcmp.gt.f32.partialorder %v242, 0.0
    %vm261 = vcmp.gt.f32.partialorder %v247, 0.0
    %vm262 = vcmp.gt.f32.partialorder %v252, 0.0
    %v263 = vmul.f32 %v217, 0.01
    %v264 = vmul.f32 %v222, 0.01
    %v265 = vmul.f32 %v227, 0.01
    %v266 = vmul.f32 %v232, 0.01
    %v267 = vmul.f32 %v237, 0.01
    %v268 = vmul.f32 %v242, 0.01
    %v269 = vmul.f32 %v247, 0.01
    %v270 = vmul.f32 %v252, 0.01
    %v271 = vsel %vm255, %v217, %v263
    %v272 = vsel %vm256, %v222, %v264
    %v273 = vsel %vm257, %v227, %v265
    %v274 = vsel %vm258, %v232, %v266
    %v275 = vsel %vm259, %v237, %v267
    %v276 = vsel %vm260, %v242, %v268
    %v277 = vsel %vm261, %v247, %v269
    %v278 = vsel %vm262, %v252, %v270
    %v279 = vld [vmem:[%s3] sm:$0xff]
    %v280 = vld [vmem:[%s3 + $0x8] sm:$0xff]
    %v281 = vld [vmem:[%s3 + $0x10] sm:$0xff]
    %v282 = vld [vmem:[%s3 + $0x18] sm:$0xff]
    %v283 = vld [vmem:[%s5] sm:$0x1]
    %v285 = vlaneseq
    %v286 = vshrl.u32 %v285, 7
    %v287 = vsub.s32 0, %v286
    %v288 = vrot.slane %v283, %v287
    %vm290 = vcmask 261120
    %v292 = vsel %vm290, %v271, 0
    %v295 = vsel %vm290, %v272, 0
    %v298 = vsel %vm290, %v273, 0
    %v301 = vsel %vm290, %v274, 0
    %v304 = vsel %vm290, %v275, 0
    %v307 = vsel %vm290, %v276, 0
    %v310 = vsel %vm290, %v277, 0
    %v313 = vsel %vm290, %v278, 0
    %315 = vmatprep.subr.mxu0 0.0
    %316 = vmatpush1.msra.mxu0 %v279
    %317 = vmatprep.subr.mxu0 0.0
    %318 = vmatpush1.msra.mxu0 %v280
    %319 = vmatprep.subr.mxu0 0.0
    %320 = vmatpush1.msra.mxu0 %v281
    %321 = vmatprep.subr.mxu0 0.0
    %322 = vmatpush1.msra.mxu0 %v282
    %323 = vmatprep.subr.mxu0 0.0
    %324 = vmatpush1.msra.mxu0 0.0
    %325 = vmatprep.subr.mxu0 0.0
    %326 = vmatpush1.msra.mxu0 0.0
    %327 = vmatprep.subr.mxu0 0.0
    %328 = vmatpush1.msra.mxu0 0.0
    %329 = vmatprep.subr.mxu0 0.0
    %330 = vmatpush1.msra.mxu0 0.0
    %331 = vmatprep.subr.mxu0 0.0
    %332 = vmatpush1.msra.mxu0 0.0
    %333 = vmatprep.subr.mxu0 0.0
    %334 = vmatpush1.msra.mxu0 0.0
    %335 = vmatprep.subr.mxu0 0.0
    %336 = vmatpush1.msra.mxu0 0.0
    %337 = vmatprep.subr.mxu0 0.0
    %338 = vmatpush1.msra.mxu0 0.0
    %339 = vmatprep.subr.mxu0 0.0
    %340 = vmatpush1.msra.mxu0 0.0
    %341 = vmatprep.subr.mxu0 0.0
    %342 = vmatpush1.msra.mxu0 0.0
    %343 = vmatprep.subr.mxu0 0.0
    %344 = vmatpush1.msra.mxu0 0.0
    %345 = vmatprep.subr.mxu0 0.0
    %346 = vmatpush1.msra.mxu0 0.0
    %347 = vmatprep.subr.mxu0 0.0
    %348 = vmatpush1.msra.mxu0 0.0
    %349 = vmatprep.subr.mxu0 0.0
    %350 = vmatpush1.msra.mxu0 0.0
    %351 = vmatprep.subr.mxu0 0.0
    %352 = vmatpush1.msra.mxu0 0.0
    %353 = vmatprep.subr.mxu0 0.0
    %354 = vmatpush1.msra.mxu0 0.0
    %355 = vmatprep.subr.mxu0 0.0
    %356 = vmatpush1.msra.mxu0 0.0
    %357 = vmatprep.subr.mxu0 0.0
    %358 = vmatpush1.msra.mxu0 0.0
    %359 = vmatprep.subr.mxu0 0.0
    %360 = vmatpush1.msra.mxu0 0.0
    %361 = vmatprep.subr.mxu0 0.0
    %362 = vmatpush1.msra.mxu0 0.0
    %363 = vmatprep.subr.mxu0 0.0
    %364 = vmatpush1.msra.mxu0 0.0
    %365 = vmatprep.subr.mxu0 0.0
    %366 = vmatpush1.msra.mxu0 0.0
    %367 = vmatprep.subr.mxu0 0.0
    %368 = vmatpush1.msra.mxu0 0.0
    %369 = vmatprep.subr.mxu0 0.0
    %370 = vmatpush1.msra.mxu0 0.0
    %371 = vmatprep.subr.mxu0 0.0
    %372 = vmatpush1.msra.mxu0 0.0
    %373 = vmatprep.subr.mxu0 0.0
    %374 = vmatpush1.msra.mxu0 0.0
    %375 = vmatprep.subr.mxu0 0.0
    %376 = vmatpush1.msra.mxu0 0.0
    %377 = vmatprep.subr.mxu0 0.0
    %378 = vmatpush1.msra.mxu0 0.0
    %379 = vmatprep.mubr.f32.mxu0 0.0
    %380 = vmatmul.mubr.f32.gmra.mrb[0].mxu0 %v292
    %v381 = vpop.f32.mrb[0].mxu0
    %v382 = vadd.f32 %v288, %v381
    %v383 = vpop.f32.mrb[0].mxu0
    %384 = vmatprep.mubr.f32.mxu0 0.0
    %385 = vmatmul.mubr.f32.gmra.mrb[0].mxu0 %v295
    %v386 = vpop.f32.mrb[0].mxu0
    %v387 = vadd.f32 %v288, %v386
    %v388 = vpop.f32.mrb[0].mxu0
    %389 = vmatprep.mubr.f32.mxu0 0.0
    %390 = vmatmul.mubr.f32.gmra.mrb[0].mxu0 %v298
    %v391 = vpop.f32.mrb[0].mxu0
    %v392 = vadd.f32 %v288, %v391
    %v393 = vpop.f32.mrb[0].mxu0
    %394 = vmatprep.mubr.f32.mxu0 0.0
    %395 = vmatmul.mubr.f32.gmra.mrb[0].mxu0 %v301
    %v396 = vpop.f32.mrb[0].mxu0
    %v397 = vadd.f32 %v288, %v396
    %v398 = vpop.f32.mrb[0].mxu0
    %399 = vmatprep.mubr.f32.mxu0 0.0
    %400 = vmatmul.mubr.f32.gmra.mrb[0].mxu0 %v304
    %v401 = vpop.f32.mrb[0].mxu0
    %v402 = vadd.f32 %v288, %v401
    %v403 = vpop.f32.mrb[0].mxu0
    %404 = vmatprep.mubr.f32.mxu0 0.0
    %405 = vmatmul.mubr.f32.gmra.mrb[0].mxu0 %v307
    %v406 = vpop.f32.mrb[0].mxu0
    %v407 = vadd.f32 %v288, %v406
    %v408 = vpop.f32.mrb[0].mxu0
    %409 = vmatprep.mubr.f32.mxu0 0.0
    %410 = vmatmul.mubr.f32.gmra.mrb[0].mxu0 %v310
    %v411 = vpop.f32.mrb[0].mxu0
    %v412 = vadd.f32 %v288, %v411
    %v413 = vpop.f32.mrb[0].mxu0
    %414 = vmatprep.mubr.f32.mxu0 0.0
    %415 = vmatmul.mubr.f32.gmra.mrb[0].mxu0 %v313
    %v416 = vpop.f32.mrb[0].mxu0
    %v417 = vadd.f32 %v288, %v416
    %v418 = vpop.f32.mrb[0].mxu0
    %419 = vdwg.mxu0
    %v420 = vld [vmem:[#allocation5] sm:$0xff]
    %v421 = vld [vmem:[#allocation5 + $0x8] sm:$0xff]
    %v422 = vld [vmem:[#allocation5 + $0x10] sm:$0xff]
    %v423 = vld [vmem:[#allocation5 + $0x18] sm:$0xff]
    %v424 = vld [vmem:[%s6] sm:$0xff]
    %v425 = vld [vmem:[%s6 + $0x8] sm:$0xff]
    %v426 = vld [vmem:[%s6 + $0x10] sm:$0xff]
    %v427 = vld [vmem:[%s6 + $0x18] sm:$0xff]
    %v428 = vld [vmem:[%s6 + $0x20] sm:$0xff]
    %v429 = vld [vmem:[%s6 + $0x28] sm:$0xff]
    %v430 = vld [vmem:[%s6 + $0x30] sm:$0xff]
    %v431 = vld [vmem:[%s6 + $0x38] sm:$0xff]
    %v432 = vld [vmem:[#allocation7] sm:$0x1]
    %v434 = vsel %vm290, 0.0, 0
    %436 = vmatprep.subr.mxu0 0.0
    %437 = vmatpush1.msra.mxu0 %v420
    %438 = vmatprep.subr.mxu0 0.0
    %439 = vmatpush1.msra.mxu0 %v421
    %440 = vmatprep.subr.mxu0 0.0
    %441 = vmatpush1.msra.mxu0 %v422
    %442 = vmatprep.subr.mxu0 0.0
    %443 = vmatpush1.msra.mxu0 %v423
    %444 = vmatprep.subr.mxu0 0.0
    %445 = vmatpush1.msra.mxu0 0.0
    %446 = vmatprep.subr.mxu0 0.0
    %447 = vmatpush1.msra.mxu0 0.0
    %448 = vmatprep.subr.mxu0 0.0
    %449 = vmatpush1.msra.mxu0 0.0
    %450 = vmatprep.subr.mxu0 0.0
    %451 = vmatpush1.msra.mxu0 0.0
    %452 = vmatprep.subr.mxu0 0.0
    %453 = vmatpush1.msra.mxu0 0.0
    %454 = vmatprep.subr.mxu0 0.0
    %455 = vmatpush1.msra.mxu0 0.0
    %456 = vmatprep.subr.mxu0 0.0
    %457 = vmatpush1.msra.mxu0 0.0
    %458 = vmatprep.subr.mxu0 0.0
    %459 = vmatpush1.msra.mxu0 0.0
    %460 = vmatprep.subr.mxu0 0.0
    %461 = vmatpush1.msra.mxu0 0.0
    %462 = vmatprep.subr.mxu0 0.0
    %463 = vmatpush1.msra.mxu0 0.0
    %464 = vmatprep.subr.mxu0 0.0
    %465 = vmatpush1.msra.mxu0 0.0
    %466 = vmatprep.subr.mxu0 0.0
    %467 = vmatpush1.msra.mxu0 0.0
    %468 = vmatprep.subr.mxu0 0.0
    %469 = vmatpush1.msra.mxu0 0.0
    %470 = vmatprep.subr.mxu0 0.0
    %471 = vmatpush1.msra.mxu0 0.0
    %472 = vmatprep.subr.mxu0 0.0
    %473 = vmatpush1.msra.mxu0 0.0
    %474 = vmatprep.subr.mxu0 0.0
    %475 = vmatpush1.msra.mxu0 0.0
    %476 = vmatprep.subr.mxu0 0.0
    %477 = vmatpush1.msra.mxu0 0.0
    %478 = vmatprep.subr.mxu0 0.0
    %479 = vmatpush1.msra.mxu0 0.0
    %480 = vmatprep.subr.mxu0 0.0
    %481 = vmatpush1.msra.mxu0 0.0
    %482 = vmatprep.subr.mxu0 0.0
    %483 = vmatpush1.msra.mxu0 0.0
    %484 = vmatprep.subr.mxu0 0.0
    %485 = vmatpush1.msra.mxu0 0.0
    %486 = vmatprep.subr.mxu0 0.0
    %487 = vmatpush1.msra.mxu0 0.0
    %488 = vmatprep.subr.mxu0 0.0
    %489 = vmatpush1.msra.mxu0 0.0
    %490 = vmatprep.subr.mxu0 0.0
    %491 = vmatpush1.msra.mxu0 0.0
    %492 = vmatprep.subr.mxu0 0.0
    %493 = vmatpush1.msra.mxu0 0.0
    %494 = vmatprep.subr.mxu0 0.0
    %495 = vmatpush1.msra.mxu0 0.0
    %496 = vmatprep.subr.mxu0 0.0
    %497 = vmatpush1.msra.mxu0 0.0
    %498 = vmatprep.subr.mxu0 0.0
    %499 = vmatpush1.msra.mxu0 0.0
    %500 = vmatprep.mubr.f32.mxu0 0.0
    %501 = vmatmul.mubr.f32.gmra.mrb[0].mxu0 %v434
    %v502 = vpop.f32.mrb[0].mxu0
    %v503 = vadd.f32 0.0, %v502
    %v504 = vpop.f32.mrb[0].mxu0
    %505 = vdwg.mxu0
    %v506 = vadd.f32 %v382, %v503
    %v507 = vxor.u32 %v506, 2147483648
    %v508 = vmul.f32 %v507, 1.442695
    %v509 = vpow.pop %v508
    %v510 = vadd.f32 %v509, 1.0
    %v511 = vrcp.pop %v510
    %v512 = vmul.f32 1.0, %v511
    %v513 = vtanh.pop %v506
    %v514 = vmul.f32 %v512, 0.0
    %516 = vrot.lane.b32.xlu0 %v513, 64
    %v517 = vpop.permute.xlu0 %516
    %v519 = vmul.f32 %v512, %v517
    %521 = vrot.lane.b32.xlu0 %v519, 32
    %v522 = vpop.permute.xlu0 %521
    %v524 = vadd.f32 %v514, %v522
    %v525 = vtanh.pop %v524
    %527 = vrot.lane.b32.xlu0 %v525, 64
    %v528 = vpop.permute.xlu0 %527
    %v530 = vmul.f32 %v512, %v528
    %532 = vrot.lane.b32.xlu0 %v530, 32
    %v533 = vpop.permute.xlu0 %532
    %v535 = vsel %vm290, %v533, 0.0
    %v537 = vlaneseq
    %v538 = vshrl.u32 %v537, 7
    %v539 = vsub.s32 0, %v538
    %v540 = vrot.slane %v432, %v539
    %vm542 = vcmask 523264
    %v544 = vsel %vm542, %v535, 0
    %546 = vmatprep.subr.mxu0 0.0
    %547 = vmatpush1.msra.mxu0 %v424
    %548 = vmatprep.subr.mxu0 0.0
    %549 = vmatpush1.msra.mxu0 %v425
    %550 = vmatprep.subr.mxu0 0.0
    %551 = vmatpush1.msra.mxu0 %v426
    %552 = vmatprep.subr.mxu0 0.0
    %553 = vmatpush1.msra.mxu0 %v427
    %554 = vmatprep.subr.mxu0 0.0
    %555 = vmatpush1.msra.mxu0 %v428
    %556 = vmatprep.subr.mxu0 0.0
    %557 = vmatpush1.msra.mxu0 %v429
    %558 = vmatprep.subr.mxu0 0.0
    %559 = vmatpush1.msra.mxu0 %v430
    %560 = vmatprep.subr.mxu0 0.0
    %561 = vmatpush1.msra.mxu0 %v431
    %562 = vmatprep.subr.mxu0 0.0
    %563 = vmatpush1.msra.mxu0 0.0
    %564 = vmatprep.subr.mxu0 0.0
    %565 = vmatpush1.msra.mxu0 0.0
    %566 = vmatprep.subr.mxu0 0.0
    %567 = vmatpush1.msra.mxu0 0.0
    %568 = vmatprep.subr.mxu0 0.0
    %569 = vmatpush1.msra.mxu0 0.0
    %570 = vmatprep.subr.mxu0 0.0
    %571 = vmatpush1.msra.mxu0 0.0
    %572 = vmatprep.subr.mxu0 0.0
    %573 = vmatpush1.msra.mxu0 0.0
    %574 = vmatprep.subr.mxu0 0.0
    %575 = vmatpush1.msra.mxu0 0.0
    %576 = vmatprep.subr.mxu0 0.0
    %577 = vmatpush1.msra.mxu0 0.0
    %578 = vmatprep.subr.mxu0 0.0
    %579 = vmatpush1.msra.mxu0 0.0
    %580 = vmatprep.subr.mxu0 0.0
    %581 = vmatpush1.msra.mxu0 0.0
    %582 = vmatprep.subr.mxu0 0.0
    %583 = vmatpush1.msra.mxu0 0.0
    %584 = vmatprep.subr.mxu0 0.0
    %585 = vmatpush1.msra.mxu0 0.0
    %586 = vmatprep.subr.mxu0 0.0
    %587 = vmatpush1.msra.mxu0 0.0
    %588 = vmatprep.subr.mxu0 0.0
    %589 = vmatpush1.msra.mxu0 0.0
    %590 = vmatprep.subr.mxu0 0.0
    %591 = vmatpush1.msra.mxu0 0.0
    %592 = vmatprep.subr.mxu0 0.0
    %593 = vmatpush1.msra.mxu0 0.0
    %594 = vmatprep.subr.mxu0 0.0
    %595 = vmatpush1.msra.mxu0 0.0
    %596 = vmatprep.subr.mxu0 0.0
    %597 = vmatpush1.msra.mxu0 0.0
    %598 = vmatprep.subr.mxu0 0.0
    %599 = vmatpush1.msra.mxu0 0.0
    %600 = vmatprep.subr.mxu0 0.0
    %601 = vmatpush1.msra.mxu0 0.0
    %602 = vmatprep.subr.mxu0 0.0
    %603 = vmatpush1.msra.mxu0 0.0
    %604 = vmatprep.subr.mxu0 0.0
    %605 = vmatpush1.msra.mxu0 0.0
    %606 = vmatprep.subr.mxu0 0.0
    %607 = vmatpush1.msra.mxu0 0.0
    %608 = vmatprep.subr.mxu0 0.0
    %609 = vmatpush1.msra.mxu0 0.0
    %610 = vmatprep.mubr.f32.mxu0 0.0
    %611 = vmatmul.mubr.f32.gmra.mrb[0].mxu0 %v544
    %v612 = vpop.f32.mrb[0].mxu0
    %v613 = vadd.f32 %v540, %v612
    %v614 = vpop.f32.mrb[0].mxu0
    %615 = vdwg.mxu0
    %v616 = vxor.u32 %v613, 2147483648
    %v617 = vmul.f32 %v616, 1.442695
    %v618 = vpow.pop %v617
    %v619 = vadd.f32 %v618, 1.0
    %v620 = vrcp.pop %v619
    %v621 = vmul.f32 1.0, %v620
    %v622 = vtanh.pop %v613
    %v623 = vmul.f32 %v621, 0.0
    %625 = vrot.lane.b32.xlu0 %v622, 64
    %v626 = vpop.permute.xlu0 %625
    %v628 = vmul.f32 %v621, %v626
    %630 = vrot.lane.b32.xlu0 %v628, 32
    %v631 = vpop.permute.xlu0 %630
    %v633 = vadd.f32 %v623, %v631
    %v634 = vtanh.pop %v633
    %636 = vrot.lane.b32.xlu0 %v634, 64
    %v637 = vpop.permute.xlu0 %636
    %v639 = vmul.f32 %v621, %v637
    %v640 = vsel %vm290, %v533, 0
    %642 = vmatprep.subr.mxu0 0.0
    %643 = vmatpush1.msra.mxu0 %v420
    %644 = vmatprep.subr.mxu0 0.0
    %645 = vmatpush1.msra.mxu0 %v421
    %646 = vmatprep.subr.mxu0 0.0
    %647 = vmatpush1.msra.mxu0 %v422
    %648 = vmatprep.subr.mxu0 0.0
    %649 = vmatpush1.msra.mxu0 %v423
    %650 = vmatprep.subr.mxu0 0.0
    %651 = vmatpush1.msra.mxu0 0.0
    %652 = vmatprep.subr.mxu0 0.0
    %653 = vmatpush1.msra.mxu0 0.0
    %654 = vmatprep.subr.mxu0 0.0
    %655 = vmatpush1.msra.mxu0 0.0
    %656 = vmatprep.subr.mxu0 0.0
    %657 = vmatpush1.msra.mxu0 0.0
    %658 = vmatprep.subr.mxu0 0.0
    %659 = vmatpush1.msra.mxu0 0.0
    %660 = vmatprep.subr.mxu0 0.0
    %661 = vmatpush1.msra.mxu0 0.0
    %662 = vmatprep.subr.mxu0 0.0
    %663 = vmatpush1.msra.mxu0 0.0
    %664 = vmatprep.subr.mxu0 0.0
    %665 = vmatpush1.msra.mxu0 0.0
    %666 = vmatprep.subr.mxu0 0.0
    %667 = vmatpush1.msra.mxu0 0.0
    %668 = vmatprep.subr.mxu0 0.0
    %669 = vmatpush1.msra.mxu0 0.0
    %670 = vmatprep.subr.mxu0 0.0
    %671 = vmatpush1.msra.mxu0 0.0
    %672 = vmatprep.subr.mxu0 0.0
    %673 = vmatpush1.msra.mxu0 0.0
    %674 = vmatprep.subr.mxu0 0.0
    %675 = vmatpush1.msra.mxu0 0.0
    %676 = vmatprep.subr.mxu0 0.0
    %677 = vmatpush1.msra.mxu0 0.0
    %678 = vmatprep.subr.mxu0 0.0
    %679 = vmatpush1.msra.mxu0 0.0
    %680 = vmatprep.subr.mxu0 0.0
    %681 = vmatpush1.msra.mxu0 0.0
    %682 = vmatprep.subr.mxu0 0.0
    %683 = vmatpush1.msra.mxu0 0.0
    %684 = vmatprep.subr.mxu0 0.0
    %685 = vmatpush1.msra.mxu0 0.0
    %686 = vmatprep.subr.mxu0 0.0
    %687 = vmatpush1.msra.mxu0 0.0
    %688 = vmatprep.subr.mxu0 0.0
    %689 = vmatpush1.msra.mxu0 0.0
    %690 = vmatprep.subr.mxu0 0.0
    %691 = vmatpush1.msra.mxu0 0.0
    %692 = vmatprep.subr.mxu0 0.0
    %693 = vmatpush1.msra.mxu0 0.0
    %694 = vmatprep.subr.mxu0 0.0
    %695 = vmatpush1.msra.mxu0 0.0
    %696 = vmatprep.subr.mxu0 0.0
    %697 = vmatpush1.msra.mxu0 0.0
    %698 = vmatprep.subr.mxu0 0.0
    %699 = vmatpush1.msra.mxu0 0.0
    %700 = vmatprep.subr.mxu0 0.0
    %701 = vmatpush1.msra.mxu0 0.0
    %702 = vmatprep.subr.mxu0 0.0
    %703 = vmatpush1.msra.mxu0 0.0
    %704 = vmatprep.subr.mxu0 0.0
    %705 = vmatpush1.msra.mxu0 0.0
    %706 = vmatprep.mubr.f32.mxu0 0.0
    %707 = vmatmul.mubr.f32.gmra.mrb[0].mxu0 %v640
    %v708 = vpop.f32.mrb[0].mxu0
    %v709 = vadd.f32 0.0, %v708
    %v710 = vpop.f32.mrb[0].mxu0
    %711 = vdwg.mxu0
    %v712 = vadd.f32 %v387, %v709
    %v713 = vxor.u32 %v712, 2147483648
    %v714 = vmul.f32 %v713, 1.442695
    %v715 = vpow.pop %v714
    %v716 = vadd.f32 %v715, 1.0
    %v717 = vrcp.pop %v716
    %v718 = vmul.f32 1.0, %v717
    %v719 = vtanh.pop %v712
    %v720 = vmul.f32 %v718, %v524
    %722 = vrot.lane.b32.xlu0 %v719, 64
    %v723 = vpop.permute.xlu0 %722
    %v725 = vmul.f32 %v718, %v723
    %727 = vrot.lane.b32.xlu0 %v725, 32
    %v728 = vpop.permute.xlu0 %727
    %v730 = vadd.f32 %v720, %v728
    %v731 = vtanh.pop %v730
    %733 = vrot.lane.b32.xlu0 %v731, 64
    %v734 = vpop.permute.xlu0 %733
    %v736 = vmul.f32 %v718, %v734
    %738 = vrot.lane.b32.xlu0 %v736, 32
    %v739 = vpop.permute.xlu0 %738
    %742 = vrot.lane.b32.xlu0 %v639, 64
    %v743 = vpop.permute.xlu0 %742
    %v745 = vsel %vm290, %v739, %v743
    %v747 = vsel %vm542, %v745, 0
    %749 = vmatprep.subr.mxu0 0.0
    %750 = vmatpush1.msra.mxu0 %v424
    %751 = vmatprep.subr.mxu0 0.0
    %752 = vmatpush1.msra.mxu0 %v425
    %753 = vmatprep.subr.mxu0 0.0
    %754 = vmatpush1.msra.mxu0 %v426
    %755 = vmatprep.subr.mxu0 0.0
    %756 = vmatpush1.msra.mxu0 %v427
    %757 = vmatprep.subr.mxu0 0.0
    %758 = vmatpush1.msra.mxu0 %v428
    %759 = vmatprep.subr.mxu0 0.0
    %760 = vmatpush1.msra.mxu0 %v429
    %761 = vmatprep.subr.mxu0 0.0
    %762 = vmatpush1.msra.mxu0 %v430
    %763 = vmatprep.subr.mxu0 0.0
    %764 = vmatpush1.msra.mxu0 %v431
    %765 = vmatprep.subr.mxu0 0.0
    %766 = vmatpush1.msra.mxu0 0.0
    %767 = vmatprep.subr.mxu0 0.0
    %768 = vmatpush1.msra.mxu0 0.0
    %769 = vmatprep.subr.mxu0 0.0
    %770 = vmatpush1.msra.mxu0 0.0
    %771 = vmatprep.subr.mxu0 0.0
    %772 = vmatpush1.msra.mxu0 0.0
    %773 = vmatprep.subr.mxu0 0.0
    %774 = vmatpush1.msra.mxu0 0.0
    %775 = vmatprep.subr.mxu0 0.0
    %776 = vmatpush1.msra.mxu0 0.0
    %777 = vmatprep.subr.mxu0 0.0
    %778 = vmatpush1.msra.mxu0 0.0
    %779 = vmatprep.subr.mxu0 0.0
    %780 = vmatpush1.msra.mxu0 0.0
    %781 = vmatprep.subr.mxu0 0.0
    %782 = vmatpush1.msra.mxu0 0.0
    %783 = vmatprep.subr.mxu0 0.0
    %784 = vmatpush1.msra.mxu0 0.0
    %785 = vmatprep.subr.mxu0 0.0
    %786 = vmatpush1.msra.mxu0 0.0
    %787 = vmatprep.subr.mxu0 0.0
    %788 = vmatpush1.msra.mxu0 0.0
    %789 = vmatprep.subr.mxu0 0.0
    %790 = vmatpush1.msra.mxu0 0.0
    %791 = vmatprep.subr.mxu0 0.0
    %792 = vmatpush1.msra.mxu0 0.0
    %793 = vmatprep.subr.mxu0 0.0
    %794 = vmatpush1.msra.mxu0 0.0
    %795 = vmatprep.subr.mxu0 0.0
    %796 = vmatpush1.msra.mxu0 0.0
    %797 = vmatprep.subr.mxu0 0.0
    %798 = vmatpush1.msra.mxu0 0.0
    %799 = vmatprep.subr.mxu0 0.0
    %800 = vmatpush1.msra.mxu0 0.0
    %801 = vmatprep.subr.mxu0 0.0
    %802 = vmatpush1.msra.mxu0 0.0
    %803 = vmatprep.subr.mxu0 0.0
    %804 = vmatpush1.msra.mxu0 0.0
    %805 = vmatprep.subr.mxu0 0.0
    %806 = vmatpush1.msra.mxu0 0.0
    %807 = vmatprep.subr.mxu0 0.0
    %808 = vmatpush1.msra.mxu0 0.0
    %809 = vmatprep.subr.mxu0 0.0
    %810 = vmatpush1.msra.mxu0 0.0
    %811 = vmatprep.subr.mxu0 0.0
    %812 = vmatpush1.msra.mxu0 0.0
    %813 = vmatprep.mubr.f32.mxu0 0.0
    %814 = vmatmul.mubr.f32.gmra.mrb[0].mxu0 %v747
    %v815 = vpop.f32.mrb[0].mxu0
    %v816 = vadd.f32 %v540, %v815
    %v817 = vpop.f32.mrb[0].mxu0
    %818 = vdwg.mxu0
    %v819 = vxor.u32 %v816, 2147483648
    %v820 = vmul.f32 %v819, 1.442695
    %v821 = vpow.pop %v820
    %v822 = vadd.f32 %v821, 1.0
    %v823 = vrcp.pop %v822
    %v824 = vmul.f32 1.0, %v823
    %v825 = vtanh.pop %v816
    %v826 = vmul.f32 %v824, %v633
    %828 = vrot.lane.b32.xlu0 %v825, 64
    %v829 = vpop.permute.xlu0 %828
    %v831 = vmul.f32 %v824, %v829
    %833 = vrot.lane.b32.xlu0 %v831, 32
    %v834 = vpop.permute.xlu0 %833
    %v836 = vadd.f32 %v826, %v834
    %v837 = vtanh.pop %v836
    %839 = vrot.lane.b32.xlu0 %v837, 64
    %v840 = vpop.permute.xlu0 %839
    %v842 = vmul.f32 %v824, %v840
    %v843 = vsel %vm290, %v739, 0
    %845 = vmatprep.subr.mxu0 0.0
    %846 = vmatpush1.msra.mxu0 %v420
    %847 = vmatprep.subr.mxu0 0.0
    %848 = vmatpush1.msra.mxu0 %v421
    %849 = vmatprep.subr.mxu0 0.0
    %850 = vmatpush1.msra.mxu0 %v422
    %851 = vmatprep.subr.mxu0 0.0
    %852 = vmatpush1.msra.mxu0 %v423
    %853 = vmatprep.subr.mxu0 0.0
    %854 = vmatpush1.msra.mxu0 0.0
    %855 = vmatprep.subr.mxu0 0.0
    %856 = vmatpush1.msra.mxu0 0.0
    %857 = vmatprep.subr.mxu0 0.0
    %858 = vmatpush1.msra.mxu0 0.0
    %859 = vmatprep.subr.mxu0 0.0
    %860 = vmatpush1.msra.mxu0 0.0
    %861 = vmatprep.subr.mxu0 0.0
    %862 = vmatpush1.msra.mxu0 0.0
    %863 = vmatprep.subr.mxu0 0.0
    %864 = vmatpush1.msra.mxu0 0.0
    %865 = vmatprep.subr.mxu0 0.0
    %866 = vmatpush1.msra.mxu0 0.0
    %867 = vmatprep.subr.mxu0 0.0
    %868 = vmatpush1.msra.mxu0 0.0
    %869 = vmatprep.subr.mxu0 0.0
    %870 = vmatpush1.msra.mxu0 0.0
    %871 = vmatprep.subr.mxu0 0.0
    %872 = vmatpush1.msra.mxu0 0.0
    %873 = vmatprep.subr.mxu0 0.0
    %874 = vmatpush1.msra.mxu0 0.0
    %875 = vmatprep.subr.mxu0 0.0
    %876 = vmatpush1.msra.mxu0 0.0
    %877 = vmatprep.subr.mxu0 0.0
    %878 = vmatpush1.msra.mxu0 0.0
    %879 = vmatprep.subr.mxu0 0.0
    %880 = vmatpush1.msra.mxu0 0.0
    %881 = vmatprep.subr.mxu0 0.0
    %882 = vmatpush1.msra.mxu0 0.0
    %883 = vmatprep.subr.mxu0 0.0
    %884 = vmatpush1.msra.mxu0 0.0
    %885 = vmatprep.subr.mxu0 0.0
    %886 = vmatpush1.msra.mxu0 0.0
    %887 = vmatprep.subr.mxu0 0.0
    %888 = vmatpush1.msra.mxu0 0.0
    %889 = vmatprep.subr.mxu0 0.0
    %890 = vmatpush1.msra.mxu0 0.0
    %891 = vmatprep.subr.mxu0 0.0
    %892 = vmatpush1.msra.mxu0 0.0
    %893 = vmatprep.subr.mxu0 0.0
    %894 = vmatpush1.msra.mxu0 0.0
    %895 = vmatprep.subr.mxu0 0.0
    %896 = vmatpush1.msra.mxu0 0.0
    %897 = vmatprep.subr.mxu0 0.0
    %898 = vmatpush1.msra.mxu0 0.0
    %899 = vmatprep.subr.mxu0 0.0
    %900 = vmatpush1.msra.mxu0 0.0
    %901 = vmatprep.subr.mxu0 0.0
    %902 = vmatpush1.msra.mxu0 0.0
    %903 = vmatprep.subr.mxu0 0.0
    %904 = vmatpush1.msra.mxu0 0.0
    %905 = vmatprep.subr.mxu0 0.0
    %906 = vmatpush1.msra.mxu0 0.0
    %907 = vmatprep.subr.mxu0 0.0
    %908 = vmatpush1.msra.mxu0 0.0
    %909 = vmatprep.mubr.f32.mxu0 0.0
    %910 = vmatmul.mubr.f32.gmra.mrb[0].mxu0 %v843
    %v911 = vpop.f32.mrb[0].mxu0
    %v912 = vadd.f32 0.0, %v911
    %v913 = vpop.f32.mrb[0].mxu0
    %914 = vdwg.mxu0
    %v915 = vadd.f32 %v392, %v912
    %v916 = vxor.u32 %v915, 2147483648
    %v917 = vmul.f32 %v916, 1.442695
    %v918 = vpow.pop %v917
    %v919 = vadd.f32 %v918, 1.0
    %v920 = vrcp.pop %v919
    %v921 = vmul.f32 1.0, %v920
    %v922 = vtanh.pop %v915
    %v923 = vmul.f32 %v921, %v730
    %925 = vrot.lane.b32.xlu0 %v922, 64
    %v926 = vpop.permute.xlu0 %925
    %v928 = vmul.f32 %v921, %v926
    %930 = vrot.lane.b32.xlu0 %v928, 32
    %v931 = vpop.permute.xlu0 %930
    %v933 = vadd.f32 %v923, %v931
    %v934 = vtanh.pop %v933
    %936 = vrot.lane.b32.xlu0 %v934, 64
    %v937 = vpop.permute.xlu0 %936
    %v939 = vmul.f32 %v921, %v937
    %941 = vrot.lane.b32.xlu0 %v939, 32
    %v942 = vpop.permute.xlu0 %941
    %945 = vrot.lane.b32.xlu0 %v842, 64
    %v946 = vpop.permute.xlu0 %945
    %v948 = vsel %vm290, %v942, %v946
    %v950 = vsel %vm542, %v948, 0
    %952 = vmatprep.subr.mxu0 0.0
    %953 = vmatpush1.msra.mxu0 %v424
    %954 = vmatprep.subr.mxu0 0.0
    %955 = vmatpush1.msra.mxu0 %v425
    %956 = vmatprep.subr.mxu0 0.0
    %957 = vmatpush1.msra.mxu0 %v426
    %958 = vmatprep.subr.mxu0 0.0
    %959 = vmatpush1.msra.mxu0 %v427
    %960 = vmatprep.subr.mxu0 0.0
    %961 = vmatpush1.msra.mxu0 %v428
    %962 = vmatprep.subr.mxu0 0.0
    %963 = vmatpush1.msra.mxu0 %v429
    %964 = vmatprep.subr.mxu0 0.0
    %965 = vmatpush1.msra.mxu0 %v430
    %966 = vmatprep.subr.mxu0 0.0
    %967 = vmatpush1.msra.mxu0 %v431
    %968 = vmatprep.subr.mxu0 0.0
    %969 = vmatpush1.msra.mxu0 0.0
    %970 = vmatprep.subr.mxu0 0.0
    %971 = vmatpush1.msra.mxu0 0.0
    %972 = vmatprep.subr.mxu0 0.0
    %973 = vmatpush1.msra.mxu0 0.0
    %974 = vmatprep.subr.mxu0 0.0
    %975 = vmatpush1.msra.mxu0 0.0
    %976 = vmatprep.subr.mxu0 0.0
    %977 = vmatpush1.msra.mxu0 0.0
    %978 = vmatprep.subr.mxu0 0.0
    %979 = vmatpush1.msra.mxu0 0.0
    %980 = vmatprep.subr.mxu0 0.0
    %981 = vmatpush1.msra.mxu0 0.0
    %982 = vmatprep.subr.mxu0 0.0
    %983 = vmatpush1.msra.mxu0 0.0
    %984 = vmatprep.subr.mxu0 0.0
    %985 = vmatpush1.msra.mxu0 0.0
    %986 = vmatprep.subr.mxu0 0.0
    %987 = vmatpush1.msra.mxu0 0.0
    %988 = vmatprep.subr.mxu0 0.0
    %989 = vmatpush1.msra.mxu0 0.0
    %990 = vmatprep.subr.mxu0 0.0
    %991 = vmatpush1.msra.mxu0 0.0
    %992 = vmatprep.subr.mxu0 0.0
    %993 = vmatpush1.msra.mxu0 0.0
    %994 = vmatprep.subr.mxu0 0.0
    %995 = vmatpush1.msra.mxu0 0.0
    %996 = vmatprep.subr.mxu0 0.0
    %997 = vmatpush1.msra.mxu0 0.0
    %998 = vmatprep.subr.mxu0 0.0
    %999 = vmatpush1.msra.mxu0 0.0
    %1000 = vmatprep.subr.mxu0 0.0
    %1001 = vmatpush1.msra.mxu0 0.0
    %1002 = vmatprep.subr.mxu0 0.0
    %1003 = vmatpush1.msra.mxu0 0.0
    %1004 = vmatprep.subr.mxu0 0.0
    %1005 = vmatpush1.msra.mxu0 0.0
    %1006 = vmatprep.subr.mxu0 0.0
    %1007 = vmatpush1.msra.mxu0 0.0
    %1008 = vmatprep.subr.mxu0 0.0
    %1009 = vmatpush1.msra.mxu0 0.0
    %1010 = vmatprep.subr.mxu0 0.0
    %1011 = vmatpush1.msra.mxu0 0.0
    %1012 = vmatprep.subr.mxu0 0.0
    %1013 = vmatpush1.msra.mxu0 0.0
    %1014 = vmatprep.subr.mxu0 0.0
    %1015 = vmatpush1.msra.mxu0 0.0
    %1016 = vmatprep.mubr.f32.mxu0 0.0
    %1017 = vmatmul.mubr.f32.gmra.mrb[0].mxu0 %v950
    %v1018 = vpop.f32.mrb[0].mxu0
    %v1019 = vadd.f32 %v540, %v1018
    %v1020 = vpop.f32.mrb[0].mxu0
    %1021 = vdwg.mxu0
    %v1022 = vxor.u32 %v1019, 2147483648
    %v1023 = vmul.f32 %v1022, 1.442695
    %v1024 = vpow.pop %v1023
    %v1025 = vadd.f32 %v1024, 1.0
    %v1026 = vrcp.pop %v1025
    %v1027 = vmul.f32 1.0, %v1026
    %v1028 = vtanh.pop %v1019
    %v1029 = vmul.f32 %v1027, %v836
    %1031 = vrot.lane.b32.xlu0 %v1028, 64
    %v1032 = vpop.permute.xlu0 %1031
    %v1034 = vmul.f32 %v1027, %v1032
    %1036 = vrot.lane.b32.xlu0 %v1034, 32
    %v1037 = vpop.permute.xlu0 %1036
    %v1039 = vadd.f32 %v1029, %v1037
    %v1040 = vtanh.pop %v1039
    %1042 = vrot.lane.b32.xlu0 %v1040, 64
    %v1043 = vpop.permute.xlu0 %1042
    %v1045 = vmul.f32 %v1027, %v1043
    %v1046 = vsel %vm290, %v942, 0
    %1048 = vmatprep.subr.mxu0 0.0
    %1049 = vmatpush1.msra.mxu0 %v420
    %1050 = vmatprep.subr.mxu0 0.0
    %1051 = vmatpush1.msra.mxu0 %v421
    %1052 = vmatprep.subr.mxu0 0.0
    %1053 = vmatpush1.msra.mxu0 %v422
    %1054 = vmatprep.subr.mxu0 0.0
    %1055 = vmatpush1.msra.mxu0 %v423
    %1056 = vmatprep.subr.mxu0 0.0
    %1057 = vmatpush1.msra.mxu0 0.0
    %1058 = vmatprep.subr.mxu0 0.0
    %1059 = vmatpush1.msra.mxu0 0.0
    %1060 = vmatprep.subr.mxu0 0.0
    %1061 = vmatpush1.msra.mxu0 0.0
    %1062 = vmatprep.subr.mxu0 0.0
    %1063 = vmatpush1.msra.mxu0 0.0
    %1064 = vmatprep.subr.mxu0 0.0
    %1065 = vmatpush1.msra.mxu0 0.0
    %1066 = vmatprep.subr.mxu0 0.0
    %1067 = vmatpush1.msra.mxu0 0.0
    %1068 = vmatprep.subr.mxu0 0.0
    %1069 = vmatpush1.msra.mxu0 0.0
    %1070 = vmatprep.subr.mxu0 0.0
    %1071 = vmatpush1.msra.mxu0 0.0
    %1072 = vmatprep.subr.mxu0 0.0
    %1073 = vmatpush1.msra.mxu0 0.0
    %1074 = vmatprep.subr.mxu0 0.0
    %1075 = vmatpush1.msra.mxu0 0.0
    %1076 = vmatprep.subr.mxu0 0.0
    %1077 = vmatpush1.msra.mxu0 0.0
    %1078 = vmatprep.subr.mxu0 0.0
    %1079 = vmatpush1.msra.mxu0 0.0
    %1080 = vmatprep.subr.mxu0 0.0
    %1081 = vmatpush1.msra.mxu0 0.0
    %1082 = vmatprep.subr.mxu0 0.0
    %1083 = vmatpush1.msra.mxu0 0.0
    %1084 = vmatprep.subr.mxu0 0.0
    %1085 = vmatpush1.msra.mxu0 0.0
    %1086 = vmatprep.subr.mxu0 0.0
    %1087 = vmatpush1.msra.mxu0 0.0
    %1088 = vmatprep.subr.mxu0 0.0
    %1089 = vmatpush1.msra.mxu0 0.0
    %1090 = vmatprep.subr.mxu0 0.0
    %1091 = vmatpush1.msra.mxu0 0.0
    %1092 = vmatprep.subr.mxu0 0.0
    %1093 = vmatpush1.msra.mxu0 0.0
    %1094 = vmatprep.subr.mxu0 0.0
    %1095 = vmatpush1.msra.mxu0 0.0
    %1096 = vmatprep.subr.mxu0 0.0
    %1097 = vmatpush1.msra.mxu0 0.0
    %1098 = vmatprep.subr.mxu0 0.0
    %1099 = vmatpush1.msra.mxu0 0.0
    %1100 = vmatprep.subr.mxu0 0.0
    %1101 = vmatpush1.msra.mxu0 0.0
    %1102 = vmatprep.subr.mxu0 0.0
    %1103 = vmatpush1.msra.mxu0 0.0
    %1104 = vmatprep.subr.mxu0 0.0
    %1105 = vmatpush1.msra.mxu0 0.0
    %1106 = vmatprep.subr.mxu0 0.0
    %1107 = vmatpush1.msra.mxu0 0.0
    %1108 = vmatprep.subr.mxu0 0.0
    %1109 = vmatpush1.msra.mxu0 0.0
    %1110 = vmatprep.subr.mxu0 0.0
    %1111 = vmatpush1.msra.mxu0 0.0
    %1112 = vmatprep.mubr.f32.mxu0 0.0
    %1113 = vmatmul.mubr.f32.gmra.mrb[0].mxu0 %v1046
    %v1114 = vpop.f32.mrb[0].mxu0
    %v1115 = vadd.f32 0.0, %v1114
    %v1116 = vpop.f32.mrb[0].mxu0
    %1117 = vdwg.mxu0
    %v1118 = vadd.f32 %v397, %v1115
    %v1119 = vxor.u32 %v1118, 2147483648
    %v1120 = vmul.f32 %v1119, 1.442695
    %v1121 = vpow.pop %v1120
    %v1122 = vadd.f32 %v1121, 1.0
    %v1123 = vrcp.pop %v1122
    %v1124 = vmul.f32 1.0, %v1123
    %v1125 = vtanh.pop %v1118
    %v1126 = vmul.f32 %v1124, %v933
    %1128 = vrot.lane.b32.xlu0 %v1125, 64
    %v1129 = vpop.permute.xlu0 %1128
    %v1131 = vmul.f32 %v1124, %v1129
    %1133 = vrot.lane.b32.xlu0 %v1131, 32
    %v1134 = vpop.permute.xlu0 %1133
    %v1136 = vadd.f32 %v1126, %v1134
    %v1137 = vtanh.pop %v1136
    %1139 = vrot.lane.b32.xlu0 %v1137, 64
    %v1140 = vpop.permute.xlu0 %1139
    %v1142 = vmul.f32 %v1124, %v1140
    %1144 = vrot.lane.b32.xlu0 %v1142, 32
    %v1145 = vpop.permute.xlu0 %1144
    %1148 = vrot.lane.b32.xlu0 %v1045, 64
    %v1149 = vpop.permute.xlu0 %1148
    %v1151 = vsel %vm290, %v1145, %v1149
    %v1153 = vsel %vm542, %v1151, 0
    %1155 = vmatprep.subr.mxu0 0.0
    %1156 = vmatpush1.msra.mxu0 %v424
    %1157 = vmatprep.subr.mxu0 0.0
    %1158 = vmatpush1.msra.mxu0 %v425
    %1159 = vmatprep.subr.mxu0 0.0
    %1160 = vmatpush1.msra.mxu0 %v426
    %1161 = vmatprep.subr.mxu0 0.0
    %1162 = vmatpush1.msra.mxu0 %v427
    %1163 = vmatprep.subr.mxu0 0.0
    %1164 = vmatpush1.msra.mxu0 %v428
    %1165 = vmatprep.subr.mxu0 0.0
    %1166 = vmatpush1.msra.mxu0 %v429
    %1167 = vmatprep.subr.mxu0 0.0
    %1168 = vmatpush1.msra.mxu0 %v430
    %1169 = vmatprep.subr.mxu0 0.0
    %1170 = vmatpush1.msra.mxu0 %v431
    %1171 = vmatprep.subr.mxu0 0.0
    %1172 = vmatpush1.msra.mxu0 0.0
    %1173 = vmatprep.subr.mxu0 0.0
    %1174 = vmatpush1.msra.mxu0 0.0
    %1175 = vmatprep.subr.mxu0 0.0
    %1176 = vmatpush1.msra.mxu0 0.0
    %1177 = vmatprep.subr.mxu0 0.0
    %1178 = vmatpush1.msra.mxu0 0.0
    %1179 = vmatprep.subr.mxu0 0.0
    %1180 = vmatpush1.msra.mxu0 0.0
    %1181 = vmatprep.subr.mxu0 0.0
    %1182 = vmatpush1.msra.mxu0 0.0
    %1183 = vmatprep.subr.mxu0 0.0
    %1184 = vmatpush1.msra.mxu0 0.0
    %1185 = vmatprep.subr.mxu0 0.0
    %1186 = vmatpush1.msra.mxu0 0.0
    %1187 = vmatprep.subr.mxu0 0.0
    %1188 = vmatpush1.msra.mxu0 0.0
    %1189 = vmatprep.subr.mxu0 0.0
    %1190 = vmatpush1.msra.mxu0 0.0
    %1191 = vmatprep.subr.mxu0 0.0
    %1192 = vmatpush1.msra.mxu0 0.0
    %1193 = vmatprep.subr.mxu0 0.0
    %1194 = vmatpush1.msra.mxu0 0.0
    %1195 = vmatprep.subr.mxu0 0.0
    %1196 = vmatpush1.msra.mxu0 0.0
    %1197 = vmatprep.subr.mxu0 0.0
    %1198 = vmatpush1.msra.mxu0 0.0
    %1199 = vmatprep.subr.mxu0 0.0
    %1200 = vmatpush1.msra.mxu0 0.0
    %1201 = vmatprep.subr.mxu0 0.0
    %1202 = vmatpush1.msra.mxu0 0.0
    %1203 = vmatprep.subr.mxu0 0.0
    %1204 = vmatpush1.msra.mxu0 0.0
    %1205 = vmatprep.subr.mxu0 0.0
    %1206 = vmatpush1.msra.mxu0 0.0
    %1207 = vmatprep.subr.mxu0 0.0
    %1208 = vmatpush1.msra.mxu0 0.0
    %1209 = vmatprep.subr.mxu0 0.0
    %1210 = vmatpush1.msra.mxu0 0.0
    %1211 = vmatprep.subr.mxu0 0.0
    %1212 = vmatpush1.msra.mxu0 0.0
    %1213 = vmatprep.subr.mxu0 0.0
    %1214 = vmatpush1.msra.mxu0 0.0
    %1215 = vmatprep.subr.mxu0 0.0
    %1216 = vmatpush1.msra.mxu0 0.0
    %1217 = vmatprep.subr.mxu0 0.0
    %1218 = vmatpush1.msra.mxu0 0.0
    %1219 = vmatprep.mubr.f32.mxu0 0.0
    %1220 = vmatmul.mubr.f32.gmra.mrb[0].mxu0 %v1153
    %v1221 = vpop.f32.mrb[0].mxu0
    %v1222 = vadd.f32 %v540, %v1221
    %v1223 = vpop.f32.mrb[0].mxu0
    %1224 = vdwg.mxu0
    %v1225 = vxor.u32 %v1222, 2147483648
    %v1226 = vmul.f32 %v1225, 1.442695
    %v1227 = vpow.pop %v1226
    %v1228 = vadd.f32 %v1227, 1.0
    %v1229 = vrcp.pop %v1228
    %v1230 = vmul.f32 1.0, %v1229
    %v1231 = vtanh.pop %v1222
    %v1232 = vmul.f32 %v1230, %v1039
    %1234 = vrot.lane.b32.xlu0 %v1231, 64
    %v1235 = vpop.permute.xlu0 %1234
    %v1237 = vmul.f32 %v1230, %v1235
    %1239 = vrot.lane.b32.xlu0 %v1237, 32
    %v1240 = vpop.permute.xlu0 %1239
    %v1242 = vadd.f32 %v1232, %v1240
    %v1243 = vtanh.pop %v1242
    %1245 = vrot.lane.b32.xlu0 %v1243, 64
    %v1246 = vpop.permute.xlu0 %1245
    %v1248 = vmul.f32 %v1230, %v1246
    %v1249 = vsel %vm290, %v1145, 0
    %1251 = vmatprep.subr.mxu0 0.0
    %1252 = vmatpush1.msra.mxu0 %v420
    %1253 = vmatprep.subr.mxu0 0.0
    %1254 = vmatpush1.msra.mxu0 %v421
    %1255 = vmatprep.subr.mxu0 0.0
    %1256 = vmatpush1.msra.mxu0 %v422
    %1257 = vmatprep.subr.mxu0 0.0
    %1258 = vmatpush1.msra.mxu0 %v423
    %1259 = vmatprep.subr.mxu0 0.0
    %1260 = vmatpush1.msra.mxu0 0.0
    %1261 = vmatprep.subr.mxu0 0.0
    %1262 = vmatpush1.msra.mxu0 0.0
    %1263 = vmatprep.subr.mxu0 0.0
    %1264 = vmatpush1.msra.mxu0 0.0
    %1265 = vmatprep.subr.mxu0 0.0
    %1266 = vmatpush1.msra.mxu0 0.0
    %1267 = vmatprep.subr.mxu0 0.0
    %1268 = vmatpush1.msra.mxu0 0.0
    %1269 = vmatprep.subr.mxu0 0.0
    %1270 = vmatpush1.msra.mxu0 0.0
    %1271 = vmatprep.subr.mxu0 0.0
    %1272 = vmatpush1.msra.mxu0 0.0
    %1273 = vmatprep.subr.mxu0 0.0
    %1274 = vmatpush1.msra.mxu0 0.0
    %1275 = vmatprep.subr.mxu0 0.0
    %1276 = vmatpush1.msra.mxu0 0.0
    %1277 = vmatprep.subr.mxu0 0.0
    %1278 = vmatpush1.msra.mxu0 0.0
    %1279 = vmatprep.subr.mxu0 0.0
    %1280 = vmatpush1.msra.mxu0 0.0
    %1281 = vmatprep.subr.mxu0 0.0
    %1282 = vmatpush1.msra.mxu0 0.0
    %1283 = vmatprep.subr.mxu0 0.0
    %1284 = vmatpush1.msra.mxu0 0.0
    %1285 = vmatprep.subr.mxu0 0.0
    %1286 = vmatpush1.msra.mxu0 0.0
    %1287 = vmatprep.subr.mxu0 0.0
    %1288 = vmatpush1.msra.mxu0 0.0
    %1289 = vmatprep.subr.mxu0 0.0
    %1290 = vmatpush1.msra.mxu0 0.0
    %1291 = vmatprep.subr.mxu0 0.0
    %1292 = vmatpush1.msra.mxu0 0.0
    %1293 = vmatprep.subr.mxu0 0.0
    %1294 = vmatpush1.msra.mxu0 0.0
    %1295 = vmatprep.subr.mxu0 0.0
    %1296 = vmatpush1.msra.mxu0 0.0
    %1297 = vmatprep.subr.mxu0 0.0
    %1298 = vmatpush1.msra.mxu0 0.0
    %1299 = vmatprep.subr.mxu0 0.0
    %1300 = vmatpush1.msra.mxu0 0.0
    %1301 = vmatprep.subr.mxu0 0.0
    %1302 = vmatpush1.msra.mxu0 0.0
    %1303 = vmatprep.subr.mxu0 0.0
    %1304 = vmatpush1.msra.mxu0 0.0
    %1305 = vmatprep.subr.mxu0 0.0
    %1306 = vmatpush1.msra.mxu0 0.0
    %1307 = vmatprep.subr.mxu0 0.0
    %1308 = vmatpush1.msra.mxu0 0.0
    %1309 = vmatprep.subr.mxu0 0.0
    %1310 = vmatpush1.msra.mxu0 0.0
    %1311 = vmatprep.subr.mxu0 0.0
    %1312 = vmatpush1.msra.mxu0 0.0
    %1313 = vmatprep.subr.mxu0 0.0
    %1314 = vmatpush1.msra.mxu0 0.0
    %1315 = vmatprep.mubr.f32.mxu0 0.0
    %1316 = vmatmul.mubr.f32.gmra.mrb[0].mxu0 %v1249
    %v1317 = vpop.f32.mrb[0].mxu0
    %v1318 = vadd.f32 0.0, %v1317
    %v1319 = vpop.f32.mrb[0].mxu0
    %1320 = vdwg.mxu0
    %v1321 = vadd.f32 %v402, %v1318
    %v1322 = vxor.u32 %v1321, 2147483648
    %v1323 = vmul.f32 %v1322, 1.442695
    %v1324 = vpow.pop %v1323
    %v1325 = vadd.f32 %v1324, 1.0
    %v1326 = vrcp.pop %v1325
    %v1327 = vmul.f32 1.0, %v1326
    %v1328 = vtanh.pop %v1321
    %v1329 = vmul.f32 %v1327, %v1136
    %1331 = vrot.lane.b32.xlu0 %v1328, 64
    %v1332 = vpop.permute.xlu0 %1331
    %v1334 = vmul.f32 %v1327, %v1332
    %1336 = vrot.lane.b32.xlu0 %v1334, 32
    %v1337 = vpop.permute.xlu0 %1336
    %v1339 = vadd.f32 %v1329, %v1337
    %v1340 = vtanh.pop %v1339
    %1342 = vrot.lane.b32.xlu0 %v1340, 64
    %v1343 = vpop.permute.xlu0 %1342
    %v1345 = vmul.f32 %v1327, %v1343
    %1347 = vrot.lane.b32.xlu0 %v1345, 32
    %v1348 = vpop.permute.xlu0 %1347
    %1351 = vrot.lane.b32.xlu0 %v1248, 64
    %v1352 = vpop.permute.xlu0 %1351
    %v1354 = vsel %vm290, %v1348, %v1352
    %v1356 = vsel %vm542, %v1354, 0
    %1358 = vmatprep.subr.mxu0 0.0
    %1359 = vmatpush1.msra.mxu0 %v424
    %1360 = vmatprep.subr.mxu0 0.0
    %1361 = vmatpush1.msra.mxu0 %v425
    %1362 = vmatprep.subr.mxu0 0.0
    %1363 = vmatpush1.msra.mxu0 %v426
    %1364 = vmatprep.subr.mxu0 0.0
    %1365 = vmatpush1.msra.mxu0 %v427
    %1366 = vmatprep.subr.mxu0 0.0
    %1367 = vmatpush1.msra.mxu0 %v428
    %1368 = vmatprep.subr.mxu0 0.0
    %1369 = vmatpush1.msra.mxu0 %v429
    %1370 = vmatprep.subr.mxu0 0.0
    %1371 = vmatpush1.msra.mxu0 %v430
    %1372 = vmatprep.subr.mxu0 0.0
    %1373 = vmatpush1.msra.mxu0 %v431
    %1374 = vmatprep.subr.mxu0 0.0
    %1375 = vmatpush1.msra.mxu0 0.0
    %1376 = vmatprep.subr.mxu0 0.0
    %1377 = vmatpush1.msra.mxu0 0.0
    %1378 = vmatprep.subr.mxu0 0.0
    %1379 = vmatpush1.msra.mxu0 0.0
    %1380 = vmatprep.subr.mxu0 0.0
    %1381 = vmatpush1.msra.mxu0 0.0
    %1382 = vmatprep.subr.mxu0 0.0
    %1383 = vmatpush1.msra.mxu0 0.0
    %1384 = vmatprep.subr.mxu0 0.0
    %1385 = vmatpush1.msra.mxu0 0.0
    %1386 = vmatprep.subr.mxu0 0.0
    %1387 = vmatpush1.msra.mxu0 0.0
    %1388 = vmatprep.subr.mxu0 0.0
    %1389 = vmatpush1.msra.mxu0 0.0
    %1390 = vmatprep.subr.mxu0 0.0
    %1391 = vmatpush1.msra.mxu0 0.0
    %1392 = vmatprep.subr.mxu0 0.0
    %1393 = vmatpush1.msra.mxu0 0.0
    %1394 = vmatprep.subr.mxu0 0.0
    %1395 = vmatpush1.msra.mxu0 0.0
    %1396 = vmatprep.subr.mxu0 0.0
    %1397 = vmatpush1.msra.mxu0 0.0
    %1398 = vmatprep.subr.mxu0 0.0
    %1399 = vmatpush1.msra.mxu0 0.0
    %1400 = vmatprep.subr.mxu0 0.0
    %1401 = vmatpush1.msra.mxu0 0.0
    %1402 = vmatprep.subr.mxu0 0.0
    %1403 = vmatpush1.msra.mxu0 0.0
    %1404 = vmatprep.subr.mxu0 0.0
    %1405 = vmatpush1.msra.mxu0 0.0
    %1406 = vmatprep.subr.mxu0 0.0
    %1407 = vmatpush1.msra.mxu0 0.0
    %1408 = vmatprep.subr.mxu0 0.0
    %1409 = vmatpush1.msra.mxu0 0.0
    %1410 = vmatprep.subr.mxu0 0.0
    %1411 = vmatpush1.msra.mxu0 0.0
    %1412 = vmatprep.subr.mxu0 0.0
    %1413 = vmatpush1.msra.mxu0 0.0
    %1414 = vmatprep.subr.mxu0 0.0
    %1415 = vmatpush1.msra.mxu0 0.0
    %1416 = vmatprep.subr.mxu0 0.0
    %1417 = vmatpush1.msra.mxu0 0.0
    %1418 = vmatprep.subr.mxu0 0.0
    %1419 = vmatpush1.msra.mxu0 0.0
    %1420 = vmatprep.subr.mxu0 0.0
    %1421 = vmatpush1.msra.mxu0 0.0
    %1422 = vmatprep.mubr.f32.mxu0 0.0
    %1423 = vmatmul.mubr.f32.gmra.mrb[0].mxu0 %v1356
    %v1424 = vpop.f32.mrb[0].mxu0
    %v1425 = vadd.f32 %v540, %v1424
    %v1426 = vpop.f32.mrb[0].mxu0
    %1427 = vdwg.mxu0
    %v1428 = vxor.u32 %v1425, 2147483648
    %v1429 = vmul.f32 %v1428, 1.442695
    %v1430 = vpow.pop %v1429
    %v1431 = vadd.f32 %v1430, 1.0
    %v1432 = vrcp.pop %v1431
    %v1433 = vmul.f32 1.0, %v1432
    %v1434 = vtanh.pop %v1425
    %v1435 = vmul.f32 %v1433, %v1242
    %1437 = vrot.lane.b32.xlu0 %v1434, 64
    %v1438 = vpop.permute.xlu0 %1437
    %v1440 = vmul.f32 %v1433, %v1438
    %1442 = vrot.lane.b32.xlu0 %v1440, 32
    %v1443 = vpop.permute.xlu0 %1442
    %v1445 = vadd.f32 %v1435, %v1443
    %v1446 = vtanh.pop %v1445
    %1448 = vrot.lane.b32.xlu0 %v1446, 64
    %v1449 = vpop.permute.xlu0 %1448
    %v1451 = vmul.f32 %v1433, %v1449
    %v1452 = vsel %vm290, %v1348, 0
    %1454 = vmatprep.subr.mxu0 0.0
    %1455 = vmatpush1.msra.mxu0 %v420
    %1456 = vmatprep.subr.mxu0 0.0
    %1457 = vmatpush1.msra.mxu0 %v421
    %1458 = vmatprep.subr.mxu0 0.0
    %1459 = vmatpush1.msra.mxu0 %v422
    %1460 = vmatprep.subr.mxu0 0.0
    %1461 = vmatpush1.msra.mxu0 %v423
    %1462 = vmatprep.subr.mxu0 0.0
    %1463 = vmatpush1.msra.mxu0 0.0
    %1464 = vmatprep.subr.mxu0 0.0
    %1465 = vmatpush1.msra.mxu0 0.0
    %1466 = vmatprep.subr.mxu0 0.0
    %1467 = vmatpush1.msra.mxu0 0.0
    %1468 = vmatprep.subr.mxu0 0.0
    %1469 = vmatpush1.msra.mxu0 0.0
    %1470 = vmatprep.subr.mxu0 0.0
    %1471 = vmatpush1.msra.mxu0 0.0
    %1472 = vmatprep.subr.mxu0 0.0
    %1473 = vmatpush1.msra.mxu0 0.0
    %1474 = vmatprep.subr.mxu0 0.0
    %1475 = vmatpush1.msra.mxu0 0.0
    %1476 = vmatprep.subr.mxu0 0.0
    %1477 = vmatpush1.msra.mxu0 0.0
    %1478 = vmatprep.subr.mxu0 0.0
    %1479 = vmatpush1.msra.mxu0 0.0
    %1480 = vmatprep.subr.mxu0 0.0
    %1481 = vmatpush1.msra.mxu0 0.0
    %1482 = vmatprep.subr.mxu0 0.0
    %1483 = vmatpush1.msra.mxu0 0.0
    %1484 = vmatprep.subr.mxu0 0.0
    %1485 = vmatpush1.msra.mxu0 0.0
    %1486 = vmatprep.subr.mxu0 0.0
    %1487 = vmatpush1.msra.mxu0 0.0
    %1488 = vmatprep.subr.mxu0 0.0
    %1489 = vmatpush1.msra.mxu0 0.0
    %1490 = vmatprep.subr.mxu0 0.0
    %1491 = vmatpush1.msra.mxu0 0.0
    %1492 = vmatprep.subr.mxu0 0.0
    %1493 = vmatpush1.msra.mxu0 0.0
    %1494 = vmatprep.subr.mxu0 0.0
    %1495 = vmatpush1.msra.mxu0 0.0
    %1496 = vmatprep.subr.mxu0 0.0
    %1497 = vmatpush1.msra.mxu0 0.0
    %1498 = vmatprep.subr.mxu0 0.0
    %1499 = vmatpush1.msra.mxu0 0.0
    %1500 = vmatprep.subr.mxu0 0.0
    %1501 = vmatpush1.msra.mxu0 0.0
    %1502 = vmatprep.subr.mxu0 0.0
    %1503 = vmatpush1.msra.mxu0 0.0
    %1504 = vmatprep.subr.mxu0 0.0
    %1505 = vmatpush1.msra.mxu0 0.0
    %1506 = vmatprep.subr.mxu0 0.0
    %1507 = vmatpush1.msra.mxu0 0.0
    %1508 = vmatprep.subr.mxu0 0.0
    %1509 = vmatpush1.msra.mxu0 0.0
    %1510 = vmatprep.subr.mxu0 0.0
    %1511 = vmatpush1.msra.mxu0 0.0
    %1512 = vmatprep.subr.mxu0 0.0
    %1513 = vmatpush1.msra.mxu0 0.0
    %1514 = vmatprep.subr.mxu0 0.0
    %1515 = vmatpush1.msra.mxu0 0.0
    %1516 = vmatprep.subr.mxu0 0.0
    %1517 = vmatpush1.msra.mxu0 0.0
    %1518 = vmatprep.mubr.f32.mxu0 0.0
    %1519 = vmatmul.mubr.f32.gmra.mrb[0].mxu0 %v1452
    %v1520 = vpop.f32.mrb[0].mxu0
    %v1521 = vadd.f32 0.0, %v1520
    %v1522 = vpop.f32.mrb[0].mxu0
    %1523 = vdwg.mxu0
    %v1524 = vadd.f32 %v407, %v1521
    %v1525 = vxor.u32 %v1524, 2147483648
    %v1526 = vmul.f32 %v1525, 1.442695
    %v1527 = vpow.pop %v1526
    %v1528 = vadd.f32 %v1527, 1.0
    %v1529 = vrcp.pop %v1528
    %v1530 = vmul.f32 1.0, %v1529
    %v1531 = vtanh.pop %v1524
    %v1532 = vmul.f32 %v1530, %v1339
    %1534 = vrot.lane.b32.xlu0 %v1531, 64
    %v1535 = vpop.permute.xlu0 %1534
    %v1537 = vmul.f32 %v1530, %v1535
    %1539 = vrot.lane.b32.xlu0 %v1537, 32
    %v1540 = vpop.permute.xlu0 %1539
    %v1542 = vadd.f32 %v1532, %v1540
    %v1543 = vtanh.pop %v1542
    %1545 = vrot.lane.b32.xlu0 %v1543, 64
    %v1546 = vpop.permute.xlu0 %1545
    %v1548 = vmul.f32 %v1530, %v1546
    %1550 = vrot.lane.b32.xlu0 %v1548, 32
    %v1551 = vpop.permute.xlu0 %1550
    %1554 = vrot.lane.b32.xlu0 %v1451, 64
    %v1555 = vpop.permute.xlu0 %1554
    %v1557 = vsel %vm290, %v1551, %v1555
    %v1559 = vsel %vm542, %v1557, 0
    %1561 = vmatprep.subr.mxu0 0.0
    %1562 = vmatpush1.msra.mxu0 %v424
    %1563 = vmatprep.subr.mxu0 0.0
    %1564 = vmatpush1.msra.mxu0 %v425
    %1565 = vmatprep.subr.mxu0 0.0
    %1566 = vmatpush1.msra.mxu0 %v426
    %1567 = vmatprep.subr.mxu0 0.0
    %1568 = vmatpush1.msra.mxu0 %v427
    %1569 = vmatprep.subr.mxu0 0.0
    %1570 = vmatpush1.msra.mxu0 %v428
    %1571 = vmatprep.subr.mxu0 0.0
    %1572 = vmatpush1.msra.mxu0 %v429
    %1573 = vmatprep.subr.mxu0 0.0
    %1574 = vmatpush1.msra.mxu0 %v430
    %1575 = vmatprep.subr.mxu0 0.0
    %1576 = vmatpush1.msra.mxu0 %v431
    %1577 = vmatprep.subr.mxu0 0.0
    %1578 = vmatpush1.msra.mxu0 0.0
    %1579 = vmatprep.subr.mxu0 0.0
    %1580 = vmatpush1.msra.mxu0 0.0
    %1581 = vmatprep.subr.mxu0 0.0
    %1582 = vmatpush1.msra.mxu0 0.0
    %1583 = vmatprep.subr.mxu0 0.0
    %1584 = vmatpush1.msra.mxu0 0.0
    %1585 = vmatprep.subr.mxu0 0.0
    %1586 = vmatpush1.msra.mxu0 0.0
    %1587 = vmatprep.subr.mxu0 0.0
    %1588 = vmatpush1.msra.mxu0 0.0
    %1589 = vmatprep.subr.mxu0 0.0
    %1590 = vmatpush1.msra.mxu0 0.0
    %1591 = vmatprep.subr.mxu0 0.0
    %1592 = vmatpush1.msra.mxu0 0.0
    %1593 = vmatprep.subr.mxu0 0.0
    %1594 = vmatpush1.msra.mxu0 0.0
    %1595 = vmatprep.subr.mxu0 0.0
    %1596 = vmatpush1.msra.mxu0 0.0
    %1597 = vmatprep.subr.mxu0 0.0
    %1598 = vmatpush1.msra.mxu0 0.0
    %1599 = vmatprep.subr.mxu0 0.0
    %1600 = vmatpush1.msra.mxu0 0.0
    %1601 = vmatprep.subr.mxu0 0.0
    %1602 = vmatpush1.msra.mxu0 0.0
    %1603 = vmatprep.subr.mxu0 0.0
    %1604 = vmatpush1.msra.mxu0 0.0
    %1605 = vmatprep.subr.mxu0 0.0
    %1606 = vmatpush1.msra.mxu0 0.0
    %1607 = vmatprep.subr.mxu0 0.0
    %1608 = vmatpush1.msra.mxu0 0.0
    %1609 = vmatprep.subr.mxu0 0.0
    %1610 = vmatpush1.msra.mxu0 0.0
    %1611 = vmatprep.subr.mxu0 0.0
    %1612 = vmatpush1.msra.mxu0 0.0
    %1613 = vmatprep.subr.mxu0 0.0
    %1614 = vmatpush1.msra.mxu0 0.0
    %1615 = vmatprep.subr.mxu0 0.0
    %1616 = vmatpush1.msra.mxu0 0.0
    %1617 = vmatprep.subr.mxu0 0.0
    %1618 = vmatpush1.msra.mxu0 0.0
    %1619 = vmatprep.subr.mxu0 0.0
    %1620 = vmatpush1.msra.mxu0 0.0
    %1621 = vmatprep.subr.mxu0 0.0
    %1622 = vmatpush1.msra.mxu0 0.0
    %1623 = vmatprep.subr.mxu0 0.0
    %1624 = vmatpush1.msra.mxu0 0.0
    %1625 = vmatprep.mubr.f32.mxu0 0.0
    %1626 = vmatmul.mubr.f32.gmra.mrb[0].mxu0 %v1559
    %v1627 = vpop.f32.mrb[0].mxu0
    %v1628 = vadd.f32 %v540, %v1627
    %v1629 = vpop.f32.mrb[0].mxu0
    %1630 = vdwg.mxu0
    %v1631 = vxor.u32 %v1628, 2147483648
    %v1632 = vmul.f32 %v1631, 1.442695
    %v1633 = vpow.pop %v1632
    %v1634 = vadd.f32 %v1633, 1.0
    %v1635 = vrcp.pop %v1634
    %v1636 = vmul.f32 1.0, %v1635
    %v1637 = vtanh.pop %v1628
    %v1638 = vmul.f32 %v1636, %v1445
    %1640 = vrot.lane.b32.xlu0 %v1637, 64
    %v1641 = vpop.permute.xlu0 %1640
    %v1643 = vmul.f32 %v1636, %v1641
    %1645 = vrot.lane.b32.xlu0 %v1643, 32
    %v1646 = vpop.permute.xlu0 %1645
    %v1648 = vadd.f32 %v1638, %v1646
    %v1649 = vtanh.pop %v1648
    %1651 = vrot.lane.b32.xlu0 %v1649, 64
    %v1652 = vpop.permute.xlu0 %1651
    %v1654 = vmul.f32 %v1636, %v1652
    %v1655 = vsel %vm290, %v1551, 0
    %1657 = vmatprep.subr.mxu0 0.0
    %1658 = vmatpush1.msra.mxu0 %v420
    %1659 = vmatprep.subr.mxu0 0.0
    %1660 = vmatpush1.msra.mxu0 %v421
    %1661 = vmatprep.subr.mxu0 0.0
    %1662 = vmatpush1.msra.mxu0 %v422
    %1663 = vmatprep.subr.mxu0 0.0
    %1664 = vmatpush1.msra.mxu0 %v423
    %1665 = vmatprep.subr.mxu0 0.0
    %1666 = vmatpush1.msra.mxu0 0.0
    %1667 = vmatprep.subr.mxu0 0.0
    %1668 = vmatpush1.msra.mxu0 0.0
    %1669 = vmatprep.subr.mxu0 0.0
    %1670 = vmatpush1.msra.mxu0 0.0
    %1671 = vmatprep.subr.mxu0 0.0
    %1672 = vmatpush1.msra.mxu0 0.0
    %1673 = vmatprep.subr.mxu0 0.0
    %1674 = vmatpush1.msra.mxu0 0.0
    %1675 = vmatprep.subr.mxu0 0.0
    %1676 = vmatpush1.msra.mxu0 0.0
    %1677 = vmatprep.subr.mxu0 0.0
    %1678 = vmatpush1.msra.mxu0 0.0
    %1679 = vmatprep.subr.mxu0 0.0
    %1680 = vmatpush1.msra.mxu0 0.0
    %1681 = vmatprep.subr.mxu0 0.0
    %1682 = vmatpush1.msra.mxu0 0.0
    %1683 = vmatprep.subr.mxu0 0.0
    %1684 = vmatpush1.msra.mxu0 0.0
    %1685 = vmatprep.subr.mxu0 0.0
    %1686 = vmatpush1.msra.mxu0 0.0
    %1687 = vmatprep.subr.mxu0 0.0
    %1688 = vmatpush1.msra.mxu0 0.0
    %1689 = vmatprep.subr.mxu0 0.0
    %1690 = vmatpush1.msra.mxu0 0.0
    %1691 = vmatprep.subr.mxu0 0.0
    %1692 = vmatpush1.msra.mxu0 0.0
    %1693 = vmatprep.subr.mxu0 0.0
    %1694 = vmatpush1.msra.mxu0 0.0
    %1695 = vmatprep.subr.mxu0 0.0
    %1696 = vmatpush1.msra.mxu0 0.0
    %1697 = vmatprep.subr.mxu0 0.0
    %1698 = vmatpush1.msra.mxu0 0.0
    %1699 = vmatprep.subr.mxu0 0.0
    %1700 = vmatpush1.msra.mxu0 0.0
    %1701 = vmatprep.subr.mxu0 0.0
    %1702 = vmatpush1.msra.mxu0 0.0
    %1703 = vmatprep.subr.mxu0 0.0
    %1704 = vmatpush1.msra.mxu0 0.0
    %1705 = vmatprep.subr.mxu0 0.0
    %1706 = vmatpush1.msra.mxu0 0.0
    %1707 = vmatprep.subr.mxu0 0.0
    %1708 = vmatpush1.msra.mxu0 0.0
    %1709 = vmatprep.subr.mxu0 0.0
    %1710 = vmatpush1.msra.mxu0 0.0
    %1711 = vmatprep.subr.mxu0 0.0
    %1712 = vmatpush1.msra.mxu0 0.0
    %1713 = vmatprep.subr.mxu0 0.0
    %1714 = vmatpush1.msra.mxu0 0.0
    %1715 = vmatprep.subr.mxu0 0.0
    %1716 = vmatpush1.msra.mxu0 0.0
    %1717 = vmatprep.subr.mxu0 0.0
    %1718 = vmatpush1.msra.mxu0 0.0
    %1719 = vmatprep.subr.mxu0 0.0
    %1720 = vmatpush1.msra.mxu0 0.0
    %1721 = vmatprep.mubr.f32.mxu0 0.0
    %1722 = vmatmul.mubr.f32.gmra.mrb[0].mxu0 %v1655
    %v1723 = vpop.f32.mrb[0].mxu0
    %v1724 = vadd.f32 0.0, %v1723
    %v1725 = vpop.f32.mrb[0].mxu0
    %1726 = vdwg.mxu0
    %v1727 = vadd.f32 %v412, %v1724
    %v1728 = vxor.u32 %v1727, 2147483648
    %v1729 = vmul.f32 %v1728, 1.442695
    %v1730 = vpow.pop %v1729
    %v1731 = vadd.f32 %v1730, 1.0
    %v1732 = vrcp.pop %v1731
    %v1733 = vmul.f32 1.0, %v1732
    %v1734 = vtanh.pop %v1727
    %v1735 = vmul.f32 %v1733, %v1542
    %1737 = vrot.lane.b32.xlu0 %v1734, 64
    %v1738 = vpop.permute.xlu0 %1737
    %v1740 = vmul.f32 %v1733, %v1738
    %1742 = vrot.lane.b32.xlu0 %v1740, 32
    %v1743 = vpop.permute.xlu0 %1742
    %v1745 = vadd.f32 %v1735, %v1743
    %v1746 = vtanh.pop %v1745
    %1748 = vrot.lane.b32.xlu0 %v1746, 64
    %v1749 = vpop.permute.xlu0 %1748
    %v1751 = vmul.f32 %v1733, %v1749
    %1753 = vrot.lane.b32.xlu0 %v1751, 32
    %v1754 = vpop.permute.xlu0 %1753
    %1757 = vrot.lane.b32.xlu0 %v1654, 64
    %v1758 = vpop.permute.xlu0 %1757
    %v1760 = vsel %vm290, %v1754, %v1758
    %v1762 = vsel %vm542, %v1760, 0
    %1764 = vmatprep.subr.mxu0 0.0
    %1765 = vmatpush1.msra.mxu0 %v424
    %1766 = vmatprep.subr.mxu0 0.0
    %1767 = vmatpush1.msra.mxu0 %v425
    %1768 = vmatprep.subr.mxu0 0.0
    %1769 = vmatpush1.msra.mxu0 %v426
    %1770 = vmatprep.subr.mxu0 0.0
    %1771 = vmatpush1.msra.mxu0 %v427
    %1772 = vmatprep.subr.mxu0 0.0
    %1773 = vmatpush1.msra.mxu0 %v428
    %1774 = vmatprep.subr.mxu0 0.0
    %1775 = vmatpush1.msra.mxu0 %v429
    %1776 = vmatprep.subr.mxu0 0.0
    %1777 = vmatpush1.msra.mxu0 %v430
    %1778 = vmatprep.subr.mxu0 0.0
    %1779 = vmatpush1.msra.mxu0 %v431
    %1780 = vmatprep.subr.mxu0 0.0
    %1781 = vmatpush1.msra.mxu0 0.0
    %1782 = vmatprep.subr.mxu0 0.0
    %1783 = vmatpush1.msra.mxu0 0.0
    %1784 = vmatprep.subr.mxu0 0.0
    %1785 = vmatpush1.msra.mxu0 0.0
    %1786 = vmatprep.subr.mxu0 0.0
    %1787 = vmatpush1.msra.mxu0 0.0
    %1788 = vmatprep.subr.mxu0 0.0
    %1789 = vmatpush1.msra.mxu0 0.0
    %1790 = vmatprep.subr.mxu0 0.0
    %1791 = vmatpush1.msra.mxu0 0.0
    %1792 = vmatprep.subr.mxu0 0.0
    %1793 = vmatpush1.msra.mxu0 0.0
    %1794 = vmatprep.subr.mxu0 0.0
    %1795 = vmatpush1.msra.mxu0 0.0
    %1796 = vmatprep.subr.mxu0 0.0
    %1797 = vmatpush1.msra.mxu0 0.0
    %1798 = vmatprep.subr.mxu0 0.0
    %1799 = vmatpush1.msra.mxu0 0.0
    %1800 = vmatprep.subr.mxu0 0.0
    %1801 = vmatpush1.msra.mxu0 0.0
    %1802 = vmatprep.subr.mxu0 0.0
    %1803 = vmatpush1.msra.mxu0 0.0
    %1804 = vmatprep.subr.mxu0 0.0
    %1805 = vmatpush1.msra.mxu0 0.0
    %1806 = vmatprep.subr.mxu0 0.0
    %1807 = vmatpush1.msra.mxu0 0.0
    %1808 = vmatprep.subr.mxu0 0.0
    %1809 = vmatpush1.msra.mxu0 0.0
    %1810 = vmatprep.subr.mxu0 0.0
    %1811 = vmatpush1.msra.mxu0 0.0
    %1812 = vmatprep.subr.mxu0 0.0
    %1813 = vmatpush1.msra.mxu0 0.0
    %1814 = vmatprep.subr.mxu0 0.0
    %1815 = vmatpush1.msra.mxu0 0.0
    %1816 = vmatprep.subr.mxu0 0.0
    %1817 = vmatpush1.msra.mxu0 0.0
    %1818 = vmatprep.subr.mxu0 0.0
    %1819 = vmatpush1.msra.mxu0 0.0
    %1820 = vmatprep.subr.mxu0 0.0
    %1821 = vmatpush1.msra.mxu0 0.0
    %1822 = vmatprep.subr.mxu0 0.0
    %1823 = vmatpush1.msra.mxu0 0.0
    %1824 = vmatprep.subr.mxu0 0.0
    %1825 = vmatpush1.msra.mxu0 0.0
    %1826 = vmatprep.subr.mxu0 0.0
    %1827 = vmatpush1.msra.mxu0 0.0
    %1828 = vmatprep.mubr.f32.mxu0 0.0
    %1829 = vmatmul.mubr.f32.gmra.mrb[0].mxu0 %v1762
    %v1830 = vpop.f32.mrb[0].mxu0
    %v1831 = vadd.f32 %v540, %v1830
    %v1832 = vpop.f32.mrb[0].mxu0
    %1833 = vdwg.mxu0
    %v1834 = vxor.u32 %v1831, 2147483648
    %v1835 = vmul.f32 %v1834, 1.442695
    %v1836 = vpow.pop %v1835
    %v1837 = vadd.f32 %v1836, 1.0
    %v1838 = vrcp.pop %v1837
    %v1839 = vmul.f32 1.0, %v1838
    %v1840 = vtanh.pop %v1831
    %v1841 = vmul.f32 %v1839, %v1648
    %1843 = vrot.lane.b32.xlu0 %v1840, 64
    %v1844 = vpop.permute.xlu0 %1843
    %v1846 = vmul.f32 %v1839, %v1844
    %1848 = vrot.lane.b32.xlu0 %v1846, 32
    %v1849 = vpop.permute.xlu0 %1848
    %v1851 = vadd.f32 %v1841, %v1849
    %v1852 = vtanh.pop %v1851
    %1854 = vrot.lane.b32.xlu0 %v1852, 64
    %v1855 = vpop.permute.xlu0 %1854
    %v1857 = vmul.f32 %v1839, %v1855
    %v1858 = vsel %vm290, %v1754, 0
    %1860 = vmatprep.subr.mxu0 0.0
    %1861 = vmatpush1.msra.mxu0 %v420
    %1862 = vmatprep.subr.mxu0 0.0
    %1863 = vmatpush1.msra.mxu0 %v421
    %1864 = vmatprep.subr.mxu0 0.0
    %1865 = vmatpush1.msra.mxu0 %v422
    %1866 = vmatprep.subr.mxu0 0.0
    %1867 = vmatpush1.msra.mxu0 %v423
    %1868 = vmatprep.subr.mxu0 0.0
    %1869 = vmatpush1.msra.mxu0 0.0
    %1870 = vmatprep.subr.mxu0 0.0
    %1871 = vmatpush1.msra.mxu0 0.0
    %1872 = vmatprep.subr.mxu0 0.0
    %1873 = vmatpush1.msra.mxu0 0.0
    %1874 = vmatprep.subr.mxu0 0.0
    %1875 = vmatpush1.msra.mxu0 0.0
    %1876 = vmatprep.subr.mxu0 0.0
    %1877 = vmatpush1.msra.mxu0 0.0
    %1878 = vmatprep.subr.mxu0 0.0
    %1879 = vmatpush1.msra.mxu0 0.0
    %1880 = vmatprep.subr.mxu0 0.0
    %1881 = vmatpush1.msra.mxu0 0.0
    %1882 = vmatprep.subr.mxu0 0.0
    %1883 = vmatpush1.msra.mxu0 0.0
    %1884 = vmatprep.subr.mxu0 0.0
    %1885 = vmatpush1.msra.mxu0 0.0
    %1886 = vmatprep.subr.mxu0 0.0
    %1887 = vmatpush1.msra.mxu0 0.0
    %1888 = vmatprep.subr.mxu0 0.0
    %1889 = vmatpush1.msra.mxu0 0.0
    %1890 = vmatprep.subr.mxu0 0.0
    %1891 = vmatpush1.msra.mxu0 0.0
    %1892 = vmatprep.subr.mxu0 0.0
    %1893 = vmatpush1.msra.mxu0 0.0
    %1894 = vmatprep.subr.mxu0 0.0
    %1895 = vmatpush1.msra.mxu0 0.0
    %1896 = vmatprep.subr.mxu0 0.0
    %1897 = vmatpush1.msra.mxu0 0.0
    %1898 = vmatprep.subr.mxu0 0.0
    %1899 = vmatpush1.msra.mxu0 0.0
    %1900 = vmatprep.subr.mxu0 0.0
    %1901 = vmatpush1.msra.mxu0 0.0
    %1902 = vmatprep.subr.mxu0 0.0
    %1903 = vmatpush1.msra.mxu0 0.0
    %1904 = vmatprep.subr.mxu0 0.0
    %1905 = vmatpush1.msra.mxu0 0.0
    %1906 = vmatprep.subr.mxu0 0.0
    %1907 = vmatpush1.msra.mxu0 0.0
    %1908 = vmatprep.subr.mxu0 0.0
    %1909 = vmatpush1.msra.mxu0 0.0
    %1910 = vmatprep.subr.mxu0 0.0
    %1911 = vmatpush1.msra.mxu0 0.0
    %1912 = vmatprep.subr.mxu0 0.0
    %1913 = vmatpush1.msra.mxu0 0.0
    %1914 = vmatprep.subr.mxu0 0.0
    %1915 = vmatpush1.msra.mxu0 0.0
    %1916 = vmatprep.subr.mxu0 0.0
    %1917 = vmatpush1.msra.mxu0 0.0
    %1918 = vmatprep.subr.mxu0 0.0
    %1919 = vmatpush1.msra.mxu0 0.0
    %1920 = vmatprep.subr.mxu0 0.0
    %1921 = vmatpush1.msra.mxu0 0.0
    %1922 = vmatprep.subr.mxu0 0.0
    %1923 = vmatpush1.msra.mxu0 0.0
    %1924 = vmatprep.mubr.f32.mxu0 0.0
    %1925 = vmatmul.mubr.f32.gmra.mrb[0].mxu0 %v1858
    %v1926 = vpop.f32.mrb[0].mxu0
    %v1927 = vadd.f32 0.0, %v1926
    %v1928 = vpop.f32.mrb[0].mxu0
    %1929 = vdwg.mxu0
    %v1930 = vadd.f32 %v417, %v1927
    %v1931 = vxor.u32 %v1930, 2147483648
    %v1932 = vmul.f32 %v1931, 1.442695
    %v1933 = vpow.pop %v1932
    %v1934 = vadd.f32 %v1933, 1.0
    %v1935 = vrcp.pop %v1934
    %v1936 = vmul.f32 1.0, %v1935
    %v1937 = vtanh.pop %v1930
    %v1938 = vmul.f32 %v1936, %v1745
    %1940 = vrot.lane.b32.xlu0 %v1937, 64
    %v1941 = vpop.permute.xlu0 %1940
    %v1943 = vmul.f32 %v1936, %v1941
    %1945 = vrot.lane.b32.xlu0 %v1943, 32
    %v1946 = vpop.permute.xlu0 %1945
    %v1948 = vadd.f32 %v1938, %v1946
    %v1949 = vtanh.pop %v1948
    %1951 = vrot.lane.b32.xlu0 %v1949, 64
    %v1952 = vpop.permute.xlu0 %1951
    %v1954 = vmul.f32 %v1936, %v1952
    %1956 = vrot.lane.b32.xlu0 %v1954, 32
    %v1957 = vpop.permute.xlu0 %1956
    %1960 = vrot.lane.b32.xlu0 %v1857, 64
    %v1961 = vpop.permute.xlu0 %1960
    %v1963 = vsel %vm290, %v1957, %v1961
    %v1965 = vsel %vm542, %v1963, 0
    %1967 = vmatprep.subr.mxu0 0.0
    %1968 = vmatpush1.msra.mxu0 %v424
    %1969 = vmatprep.subr.mxu0 0.0
    %1970 = vmatpush1.msra.mxu0 %v425
    %1971 = vmatprep.subr.mxu0 0.0
    %1972 = vmatpush1.msra.mxu0 %v426
    %1973 = vmatprep.subr.mxu0 0.0
    %1974 = vmatpush1.msra.mxu0 %v427
    %1975 = vmatprep.subr.mxu0 0.0
    %1976 = vmatpush1.msra.mxu0 %v428
    %1977 = vmatprep.subr.mxu0 0.0
    %1978 = vmatpush1.msra.mxu0 %v429
    %1979 = vmatprep.subr.mxu0 0.0
    %1980 = vmatpush1.msra.mxu0 %v430
    %1981 = vmatprep.subr.mxu0 0.0
    %1982 = vmatpush1.msra.mxu0 %v431
    %1983 = vmatprep.subr.mxu0 0.0
    %1984 = vmatpush1.msra.mxu0 0.0
    %1985 = vmatprep.subr.mxu0 0.0
    %1986 = vmatpush1.msra.mxu0 0.0
    %1987 = vmatprep.subr.mxu0 0.0
    %1988 = vmatpush1.msra.mxu0 0.0
    %1989 = vmatprep.subr.mxu0 0.0
    %1990 = vmatpush1.msra.mxu0 0.0
    %1991 = vmatprep.subr.mxu0 0.0
    %1992 = vmatpush1.msra.mxu0 0.0
    %1993 = vmatprep.subr.mxu0 0.0
    %1994 = vmatpush1.msra.mxu0 0.0
    %1995 = vmatprep.subr.mxu0 0.0
    %1996 = vmatpush1.msra.mxu0 0.0
    %1997 = vmatprep.subr.mxu0 0.0
    %1998 = vmatpush1.msra.mxu0 0.0
    %1999 = vmatprep.subr.mxu0 0.0
    %2000 = vmatpush1.msra.mxu0 0.0
    %2001 = vmatprep.subr.mxu0 0.0
    %2002 = vmatpush1.msra.mxu0 0.0
    %2003 = vmatprep.subr.mxu0 0.0
    %2004 = vmatpush1.msra.mxu0 0.0
    %2005 = vmatprep.subr.mxu0 0.0
    %2006 = vmatpush1.msra.mxu0 0.0
    %2007 = vmatprep.subr.mxu0 0.0
    %2008 = vmatpush1.msra.mxu0 0.0
    %2009 = vmatprep.subr.mxu0 0.0
    %2010 = vmatpush1.msra.mxu0 0.0
    %2011 = vmatprep.subr.mxu0 0.0
    %2012 = vmatpush1.msra.mxu0 0.0
    %2013 = vmatprep.subr.mxu0 0.0
    %2014 = vmatpush1.msra.mxu0 0.0
    %2015 = vmatprep.subr.mxu0 0.0
    %2016 = vmatpush1.msra.mxu0 0.0
    %2017 = vmatprep.subr.mxu0 0.0
    %2018 = vmatpush1.msra.mxu0 0.0
    %2019 = vmatprep.subr.mxu0 0.0
    %2020 = vmatpush1.msra.mxu0 0.0
    %2021 = vmatprep.subr.mxu0 0.0
    %2022 = vmatpush1.msra.mxu0 0.0
    %2023 = vmatprep.subr.mxu0 0.0
    %2024 = vmatpush1.msra.mxu0 0.0
    %2025 = vmatprep.subr.mxu0 0.0
    %2026 = vmatpush1.msra.mxu0 0.0
    %2027 = vmatprep.subr.mxu0 0.0
    %2028 = vmatpush1.msra.mxu0 0.0
    %2029 = vmatprep.subr.mxu0 0.0
    %2030 = vmatpush1.msra.mxu0 0.0
    %2031 = vmatprep.mubr.f32.mxu0 0.0
    %2032 = vmatmul.mubr.f32.gmra.mrb[0].mxu0 %v1965
    %v2033 = vpop.f32.mrb[0].mxu0
    %v2034 = vadd.f32 %v540, %v2033
    %v2035 = vpop.f32.mrb[0].mxu0
    %2036 = vdwg.mxu0
    %v2037 = vxor.u32 %v2034, 2147483648
    %v2038 = vmul.f32 %v2037, 1.442695
    %v2039 = vpow.pop %v2038
    %v2040 = vadd.f32 %v2039, 1.0
    %v2041 = vrcp.pop %v2040
    %v2042 = vmul.f32 1.0, %v2041
    %v2043 = vtanh.pop %v2034
    %v2044 = vmul.f32 %v2042, %v1851
    %2046 = vrot.lane.b32.xlu0 %v2043, 64
    %v2047 = vpop.permute.xlu0 %2046
    %v2049 = vmul.f32 %v2042, %v2047
    %2051 = vrot.lane.b32.xlu0 %v2049, 32
    %v2052 = vpop.permute.xlu0 %2051
    %v2054 = vadd.f32 %v2044, %v2052
    %v2055 = vtanh.pop %v2054
    %2057 = vrot.lane.b32.xlu0 %v2055, 64
    %v2058 = vpop.permute.xlu0 %2057
    %v2060 = vmul.f32 %v2042, %v2058
    %v2061 = vld [vmem:[#allocation8] sm:$0xff]
    %v2062 = vld [vmem:[#allocation8 + $0x8] sm:$0xff]
    %v2063 = vld [vmem:[#allocation8 + $0x10] sm:$0xff]
    %v2064 = vld [vmem:[#allocation8 + $0x18] sm:$0xff]
    %v2065 = vld [vmem:[#allocation8 + $0x20] sm:$0xff]
    %v2066 = vld [vmem:[#allocation8 + $0x28] sm:$0xff]
    %v2067 = vld [vmem:[#allocation8 + $0x30] sm:$0xff]
    %v2068 = vld [vmem:[#allocation8 + $0x38] sm:$0xff]
    %v2069 = vld [vmem:[#allocation8 + $0x40] sm:$0xff]
    %v2070 = vld [vmem:[#allocation8 + $0x48] sm:$0xff]
    %v2071 = vld [vmem:[#allocation8 + $0x50] sm:$0xff]
    %v2072 = vld [vmem:[#allocation8 + $0x58] sm:$0xff]
    %v2073 = vld [vmem:[#allocation8 + $0x60] sm:$0xff]
    %v2074 = vld [vmem:[#allocation8 + $0x68] sm:$0xff]
    %v2075 = vld [vmem:[#allocation8 + $0x70] sm:$0xff]
    %v2076 = vld [vmem:[#allocation8 + $0x78] sm:$0xff]
    %v2077 = vld [vmem:[#allocation8 + $0x80] sm:$0xff]
    %v2078 = vld [vmem:[#allocation8 + $0x88] sm:$0xff]
    %v2079 = vld [vmem:[#allocation8 + $0x90] sm:$0xff]
    %v2080 = vld [vmem:[#allocation8 + $0x98] sm:$0xff]
    %v2081 = vld [vmem:[#allocation8 + $0xa0] sm:$0xff]
    %v2082 = vld [vmem:[#allocation8 + $0xa8] sm:$0xff]
    %v2083 = vld [vmem:[#allocation8 + $0xb0] sm:$0xff]
    %v2084 = vld [vmem:[#allocation8 + $0xb8] sm:$0xff]
    %v2085 = vld [vmem:[#allocation8 + $0xc0] sm:$0xff]
    %v2086 = vld [vmem:[#allocation8 + $0xc8] sm:$0xff]
    %v2087 = vld [vmem:[#allocation8 + $0xd0] sm:$0xff]
    %v2088 = vld [vmem:[#allocation8 + $0xd8] sm:$0xff]
    %v2089 = vld [vmem:[#allocation8 + $0xe0] sm:$0xff]
    %v2090 = vld [vmem:[#allocation8 + $0xe8] sm:$0xff]
    %v2091 = vld [vmem:[#allocation8 + $0xf0] sm:$0xff]
    %v2092 = vld [vmem:[#allocation8 + $0xf8] sm:$0xff]
    %v2093 = vld [vmem:[%s9] sm:$0xff]
    %v2095 = vlaneseq
    %v2096 = vshrl.u32 %v2095, 7
    %v2097 = vsub.s32 0, %v2096
    %v2098 = vrot.slane %v2093, %v2097
    %v2099 = vlaneseq
    %v2100 = vshrl.u32 %v2099, 7
    %v2101 = vsub.s32 1, %v2100
    %v2102 = vrot.slane %v2093, %v2101
    %v2103 = vlaneseq
    %v2104 = vshrl.u32 %v2103, 7
    %v2105 = vsub.s32 2, %v2104
    %v2106 = vrot.slane %v2093, %v2105
    %v2107 = vlaneseq
    %v2108 = vshrl.u32 %v2107, 7
    %v2109 = vsub.s32 3, %v2108
    %v2110 = vrot.slane %v2093, %v2109
    %v2111 = vlaneseq
    %v2112 = vshrl.u32 %v2111, 7
    %v2113 = vsub.s32 4, %v2112
    %v2114 = vrot.slane %v2093, %v2113
    %v2115 = vlaneseq
    %v2116 = vshrl.u32 %v2115, 7
    %v2117 = vsub.s32 5, %v2116
    %v2118 = vrot.slane %v2093, %v2117
    %v2119 = vlaneseq
    %v2120 = vshrl.u32 %v2119, 7
    %v2121 = vsub.s32 6, %v2120
    %v2122 = vrot.slane %v2093, %v2121
    %v2123 = vlaneseq
    %v2124 = vshrl.u32 %v2123, 7
    %v2125 = vsub.s32 7, %v2124
    %v2126 = vrot.slane %v2093, %v2125
    %2136 = vrot.lane.b32.xlu0 %v2060, 32
    %v2137 = vpop.permute.xlu0 %2136
    %v2138 = vsel %vm290, %v2137, 0
    %2140 = vmatprep.subr.mxu0 %v2062
    %2141 = vmatpush1.msra.mxu0 %v2061
    %2142 = vmatprep.subr.mxu0 %v2070
    %2143 = vmatpush1.msra.mxu0 %v2069
    %2144 = vmatprep.subr.mxu0 %v2078
    %2145 = vmatpush1.msra.mxu0 %v2077
    %2146 = vmatprep.subr.mxu0 %v2086
    %2147 = vmatpush1.msra.mxu0 %v2085
    %2148 = vmatprep.subr.mxu0 0.0
    %2149 = vmatpush1.msra.mxu0 0.0
    %2150 = vmatprep.subr.mxu0 0.0
    %2151 = vmatpush1.msra.mxu0 0.0
    %2152 = vmatprep.subr.mxu0 0.0
    %2153 = vmatpush1.msra.mxu0 0.0
    %2154 = vmatprep.subr.mxu0 0.0
    %2155 = vmatpush1.msra.mxu0 0.0
    %2156 = vmatprep.subr.mxu0 0.0
    %2157 = vmatpush1.msra.mxu0 0.0
    %2158 = vmatprep.subr.mxu0 0.0
    %2159 = vmatpush1.msra.mxu0 0.0
    %2160 = vmatprep.subr.mxu0 0.0
    %2161 = vmatpush1.msra.mxu0 0.0
    %2162 = vmatprep.subr.mxu0 0.0
    %2163 = vmatpush1.msra.mxu0 0.0
    %2164 = vmatprep.subr.mxu0 0.0
    %2165 = vmatpush1.msra.mxu0 0.0
    %2166 = vmatprep.subr.mxu0 0.0
    %2167 = vmatpush1.msra.mxu0 0.0
    %2168 = vmatprep.subr.mxu0 0.0
    %2169 = vmatpush1.msra.mxu0 0.0
    %2170 = vmatprep.subr.mxu0 0.0
    %2171 = vmatpush1.msra.mxu0 0.0
    %2172 = vmatprep.subr.mxu0 0.0
    %2173 = vmatpush1.msra.mxu0 0.0
    %2174 = vmatprep.subr.mxu0 0.0
    %2175 = vmatpush1.msra.mxu0 0.0
    %2176 = vmatprep.subr.mxu0 0.0
    %2177 = vmatpush1.msra.mxu0 0.0
    %2178 = vmatprep.subr.mxu0 0.0
    %2179 = vmatpush1.msra.mxu0 0.0
    %2180 = vmatprep.subr.mxu0 0.0
    %2181 = vmatpush1.msra.mxu0 0.0
    %2182 = vmatprep.subr.mxu0 0.0
    %2183 = vmatpush1.msra.mxu0 0.0
    %2184 = vmatprep.subr.mxu0 0.0
    %2185 = vmatpush1.msra.mxu0 0.0
    %2186 = vmatprep.subr.mxu0 0.0
    %2187 = vmatpush1.msra.mxu0 0.0
    %2188 = vmatprep.subr.mxu0 0.0
    %2189 = vmatpush1.msra.mxu0 0.0
    %2190 = vmatprep.subr.mxu0 0.0
    %2191 = vmatpush1.msra.mxu0 0.0
    %2192 = vmatprep.subr.mxu0 0.0
    %2193 = vmatpush1.msra.mxu0 0.0
    %2194 = vmatprep.subr.mxu0 0.0
    %2195 = vmatpush1.msra.mxu0 0.0
    %2196 = vmatprep.subr.mxu0 0.0
    %2197 = vmatpush1.msra.mxu0 0.0
    %2198 = vmatprep.subr.mxu0 0.0
    %2199 = vmatpush1.msra.mxu0 0.0
    %2200 = vmatprep.subr.mxu0 0.0
    %2201 = vmatpush1.msra.mxu0 0.0
    %2202 = vmatprep.subr.mxu0 0.0
    %2203 = vmatpush1.msra.mxu0 0.0
    %2204 = vmatprep.mubr.f32.mxu0 0.0
    %2205 = vmatmul.mubr.f32.gmra.mrb[0].mxu0 %v2138
    %v2206 = vpop.f32.mrb[0].mxu0
    %v2207 = vadd.f32 %v2098, %v2206
    %v2208 = vpop.f32.mrb[0].mxu0
    %v2209 = vadd.f32 %v2102, %v2208
    %2210 = vdwg.mxu0
    %2211 = vmatprep.subr.mxu0 %v2064
    %2212 = vmatpush1.msra.mxu0 %v2063
    %2213 = vmatprep.subr.mxu0 %v2072
    %2214 = vmatpush1.msra.mxu0 %v2071
    %2215 = vmatprep.subr.mxu0 %v2080
    %2216 = vmatpush1.msra.mxu0 %v2079
    %2217 = vmatprep.subr.mxu0 %v2088
    %2218 = vmatpush1.msra.mxu0 %v2087
    %2219 = vmatprep.subr.mxu0 0.0
    %2220 = vmatpush1.msra.mxu0 0.0
    %2221 = vmatprep.subr.mxu0 0.0
    %2222 = vmatpush1.msra.mxu0 0.0
    %2223 = vmatprep.subr.mxu0 0.0
    %2224 = vmatpush1.msra.mxu0 0.0
    %2225 = vmatprep.subr.mxu0 0.0
    %2226 = vmatpush1.msra.mxu0 0.0
    %2227 = vmatprep.subr.mxu0 0.0
    %2228 = vmatpush1.msra.mxu0 0.0
    %2229 = vmatprep.subr.mxu0 0.0
    %2230 = vmatpush1.msra.mxu0 0.0
    %2231 = vmatprep.subr.mxu0 0.0
    %2232 = vmatpush1.msra.mxu0 0.0
    %2233 = vmatprep.subr.mxu0 0.0
    %2234 = vmatpush1.msra.mxu0 0.0
    %2235 = vmatprep.subr.mxu0 0.0
    %2236 = vmatpush1.msra.mxu0 0.0
    %2237 = vmatprep.subr.mxu0 0.0
    %2238 = vmatpush1.msra.mxu0 0.0
    %2239 = vmatprep.subr.mxu0 0.0
    %2240 = vmatpush1.msra.mxu0 0.0
    %2241 = vmatprep.subr.mxu0 0.0
    %2242 = vmatpush1.msra.mxu0 0.0
    %2243 = vmatprep.subr.mxu0 0.0
    %2244 = vmatpush1.msra.mxu0 0.0
    %2245 = vmatprep.subr.mxu0 0.0
    %2246 = vmatpush1.msra.mxu0 0.0
    %2247 = vmatprep.subr.mxu0 0.0
    %2248 = vmatpush1.msra.mxu0 0.0
    %2249 = vmatprep.subr.mxu0 0.0
    %2250 = vmatpush1.msra.mxu0 0.0
    %2251 = vmatprep.subr.mxu0 0.0
    %2252 = vmatpush1.msra.mxu0 0.0
    %2253 = vmatprep.subr.mxu0 0.0
    %2254 = vmatpush1.msra.mxu0 0.0
    %2255 = vmatprep.subr.mxu0 0.0
    %2256 = vmatpush1.msra.mxu0 0.0
    %2257 = vmatprep.subr.mxu0 0.0
    %2258 = vmatpush1.msra.mxu0 0.0
    %2259 = vmatprep.subr.mxu0 0.0
    %2260 = vmatpush1.msra.mxu0 0.0
    %2261 = vmatprep.subr.mxu0 0.0
    %2262 = vmatpush1.msra.mxu0 0.0
    %2263 = vmatprep.subr.mxu0 0.0
    %2264 = vmatpush1.msra.mxu0 0.0
    %2265 = vmatprep.subr.mxu0 0.0
    %2266 = vmatpush1.msra.mxu0 0.0
    %2267 = vmatprep.subr.mxu0 0.0
    %2268 = vmatpush1.msra.mxu0 0.0
    %2269 = vmatprep.subr.mxu0 0.0
    %2270 = vmatpush1.msra.mxu0 0.0
    %2271 = vmatprep.subr.mxu0 0.0
    %2272 = vmatpush1.msra.mxu0 0.0
    %2273 = vmatprep.subr.mxu0 0.0
    %2274 = vmatpush1.msra.mxu0 0.0
    %2275 = vmatprep.mubr.f32.mxu0 0.0
    %2276 = vmatmul.mubr.f32.gmra.mrb[0].mxu0 %v2138
    %v2277 = vpop.f32.mrb[0].mxu0
    %v2278 = vadd.f32 %v2106, %v2277
    %v2279 = vpop.f32.mrb[0].mxu0
    %v2280 = vadd.f32 %v2110, %v2279
    %2281 = vdwg.mxu0
    %2282 = vmatprep.subr.mxu0 %v2066
    %2283 = vmatpush1.msra.mxu0 %v2065
    %2284 = vmatprep.subr.mxu0 %v2074
    %2285 = vmatpush1.msra.mxu0 %v2073
    %2286 = vmatprep.subr.mxu0 %v2082
    %2287 = vmatpush1.msra.mxu0 %v2081
    %2288 = vmatprep.subr.mxu0 %v2090
    %2289 = vmatpush1.msra.mxu0 %v2089
    %2290 = vmatprep.subr.mxu0 0.0
    %2291 = vmatpush1.msra.mxu0 0.0
    %2292 = vmatprep.subr.mxu0 0.0
    %2293 = vmatpush1.msra.mxu0 0.0
    %2294 = vmatprep.subr.mxu0 0.0
    %2295 = vmatpush1.msra.mxu0 0.0
    %2296 = vmatprep.subr.mxu0 0.0
    %2297 = vmatpush1.msra.mxu0 0.0
    %2298 = vmatprep.subr.mxu0 0.0
    %2299 = vmatpush1.msra.mxu0 0.0
    %2300 = vmatprep.subr.mxu0 0.0
    %2301 = vmatpush1.msra.mxu0 0.0
    %2302 = vmatprep.subr.mxu0 0.0
    %2303 = vmatpush1.msra.mxu0 0.0
    %2304 = vmatprep.subr.mxu0 0.0
    %2305 = vmatpush1.msra.mxu0 0.0
    %2306 = vmatprep.subr.mxu0 0.0
    %2307 = vmatpush1.msra.mxu0 0.0
    %2308 = vmatprep.subr.mxu0 0.0
    %2309 = vmatpush1.msra.mxu0 0.0
    %2310 = vmatprep.subr.mxu0 0.0
    %2311 = vmatpush1.msra.mxu0 0.0
    %2312 = vmatprep.subr.mxu0 0.0
    %2313 = vmatpush1.msra.mxu0 0.0
    %2314 = vmatprep.subr.mxu0 0.0
    %2315 = vmatpush1.msra.mxu0 0.0
    %2316 = vmatprep.subr.mxu0 0.0
    %2317 = vmatpush1.msra.mxu0 0.0
    %2318 = vmatprep.subr.mxu0 0.0
    %2319 = vmatpush1.msra.mxu0 0.0
    %2320 = vmatprep.subr.mxu0 0.0
    %2321 = vmatpush1.msra.mxu0 0.0
    %2322 = vmatprep.subr.mxu0 0.0
    %2323 = vmatpush1.msra.mxu0 0.0
    %2324 = vmatprep.subr.mxu0 0.0
    %2325 = vmatpush1.msra.mxu0 0.0
    %2326 = vmatprep.subr.mxu0 0.0
    %2327 = vmatpush1.msra.mxu0 0.0
    %2328 = vmatprep.subr.mxu0 0.0
    %2329 = vmatpush1.msra.mxu0 0.0
    %2330 = vmatprep.subr.mxu0 0.0
    %2331 = vmatpush1.msra.mxu0 0.0
    %2332 = vmatprep.subr.mxu0 0.0
    %2333 = vmatpush1.msra.mxu0 0.0
    %2334 = vmatprep.subr.mxu0 0.0
    %2335 = vmatpush1.msra.mxu0 0.0
    %2336 = vmatprep.subr.mxu0 0.0
    %2337 = vmatpush1.msra.mxu0 0.0
    %2338 = vmatprep.subr.mxu0 0.0
    %2339 = vmatpush1.msra.mxu0 0.0
    %2340 = vmatprep.subr.mxu0 0.0
    %2341 = vmatpush1.msra.mxu0 0.0
    %2342 = vmatprep.subr.mxu0 0.0
    %2343 = vmatpush1.msra.mxu0 0.0
    %2344 = vmatprep.subr.mxu0 0.0
    %2345 = vmatpush1.msra.mxu0 0.0
    %2346 = vmatprep.mubr.f32.mxu0 0.0
    %2347 = vmatmul.mubr.f32.gmra.mrb[0].mxu0 %v2138
    %v2348 = vpop.f32.mrb[0].mxu0
    %v2349 = vadd.f32 %v2114, %v2348
    %v2350 = vpop.f32.mrb[0].mxu0
    %v2351 = vadd.f32 %v2118, %v2350
    %2352 = vdwg.mxu0
    %2353 = vmatprep.subr.mxu0 %v2068
    %2354 = vmatpush1.msra.mxu0 %v2067
    %2355 = vmatprep.subr.mxu0 %v2076
    %2356 = vmatpush1.msra.mxu0 %v2075
    %2357 = vmatprep.subr.mxu0 %v2084
    %2358 = vmatpush1.msra.mxu0 %v2083
    %2359 = vmatprep.subr.mxu0 %v2092
    %2360 = vmatpush1.msra.mxu0 %v2091
    %2361 = vmatprep.subr.mxu0 0.0
    %2362 = vmatpush1.msra.mxu0 0.0
    %2363 = vmatprep.subr.mxu0 0.0
    %2364 = vmatpush1.msra.mxu0 0.0
    %2365 = vmatprep.subr.mxu0 0.0
    %2366 = vmatpush1.msra.mxu0 0.0
    %2367 = vmatprep.subr.mxu0 0.0
    %2368 = vmatpush1.msra.mxu0 0.0
    %2369 = vmatprep.subr.mxu0 0.0
    %2370 = vmatpush1.msra.mxu0 0.0
    %2371 = vmatprep.subr.mxu0 0.0
    %2372 = vmatpush1.msra.mxu0 0.0
    %2373 = vmatprep.subr.mxu0 0.0
    %2374 = vmatpush1.msra.mxu0 0.0
    %2375 = vmatprep.subr.mxu0 0.0
    %2376 = vmatpush1.msra.mxu0 0.0
    %2377 = vmatprep.subr.mxu0 0.0
    %2378 = vmatpush1.msra.mxu0 0.0
    %2379 = vmatprep.subr.mxu0 0.0
    %2380 = vmatpush1.msra.mxu0 0.0
    %2381 = vmatprep.subr.mxu0 0.0
    %2382 = vmatpush1.msra.mxu0 0.0
    %2383 = vmatprep.subr.mxu0 0.0
    %2384 = vmatpush1.msra.mxu0 0.0
    %2385 = vmatprep.subr.mxu0 0.0
    %2386 = vmatpush1.msra.mxu0 0.0
    %2387 = vmatprep.subr.mxu0 0.0
    %2388 = vmatpush1.msra.mxu0 0.0
    %2389 = vmatprep.subr.mxu0 0.0
    %2390 = vmatpush1.msra.mxu0 0.0
    %2391 = vmatprep.subr.mxu0 0.0
    %2392 = vmatpush1.msra.mxu0 0.0
    %2393 = vmatprep.subr.mxu0 0.0
    %2394 = vmatpush1.msra.mxu0 0.0
    %2395 = vmatprep.subr.mxu0 0.0
    %2396 = vmatpush1.msra.mxu0 0.0
    %2397 = vmatprep.subr.mxu0 0.0
    %2398 = vmatpush1.msra.mxu0 0.0
    %2399 = vmatprep.subr.mxu0 0.0
    %2400 = vmatpush1.msra.mxu0 0.0
    %2401 = vmatprep.subr.mxu0 0.0
    %2402 = vmatpush1.msra.mxu0 0.0
    %2403 = vmatprep.subr.mxu0 0.0
    %2404 = vmatpush1.msra.mxu0 0.0
    %2405 = vmatprep.subr.mxu0 0.0
    %2406 = vmatpush1.msra.mxu0 0.0
    %2407 = vmatprep.subr.mxu0 0.0
    %2408 = vmatpush1.msra.mxu0 0.0
    %2409 = vmatprep.subr.mxu0 0.0
    %2410 = vmatpush1.msra.mxu0 0.0
    %2411 = vmatprep.subr.mxu0 0.0
    %2412 = vmatpush1.msra.mxu0 0.0
    %2413 = vmatprep.subr.mxu0 0.0
    %2414 = vmatpush1.msra.mxu0 0.0
    %2415 = vmatprep.subr.mxu0 0.0
    %2416 = vmatpush1.msra.mxu0 0.0
    %2417 = vmatprep.mubr.f32.mxu0 0.0
    %2418 = vmatmul.mubr.f32.gmra.mrb[0].mxu0 %v2138
    %v2419 = vpop.f32.mrb[0].mxu0
    %v2420 = vadd.f32 %v2122, %v2419
    %v2421 = vpop.f32.mrb[0].mxu0
    %v2422 = vadd.f32 %v2126, %v2421
    %2423 = vdwg.mxu0
    %vm2424 = vcmp.gt.f32.partialorder %v2207, 0.0
    %vm2425 = vcmp.gt.f32.partialorder %v2209, 0.0
    %vm2426 = vcmp.gt.f32.partialorder %v2278, 0.0
    %vm2427 = vcmp.gt.f32.partialorder %v2280, 0.0
    %vm2428 = vcmp.gt.f32.partialorder %v2349, 0.0
    %vm2429 = vcmp.gt.f32.partialorder %v2351, 0.0
    %vm2430 = vcmp.gt.f32.partialorder %v2420, 0.0
    %vm2431 = vcmp.gt.f32.partialorder %v2422, 0.0
    %v2432 = vmul.f32 %v2207, 0.01
    %v2433 = vmul.f32 %v2209, 0.01
    %v2434 = vmul.f32 %v2278, 0.01
    %v2435 = vmul.f32 %v2280, 0.01
    %v2436 = vmul.f32 %v2349, 0.01
    %v2437 = vmul.f32 %v2351, 0.01
    %v2438 = vmul.f32 %v2420, 0.01
    %v2439 = vmul.f32 %v2422, 0.01
    %v2440 = vsel %vm2424, %v2207, %v2432
    %v2441 = vsel %vm2425, %v2209, %v2433
    %v2442 = vsel %vm2426, %v2278, %v2434
    %v2443 = vsel %vm2427, %v2280, %v2435
    %v2444 = vsel %vm2428, %v2349, %v2436
    %v2445 = vsel %vm2429, %v2351, %v2437
    %v2446 = vsel %vm2430, %v2420, %v2438
    %v2447 = vsel %vm2431, %v2422, %v2439
    %v2448 = vld [vmem:[#allocation10] sm:$0xff]
    %v2449 = vld [vmem:[#allocation10 + $0x8] sm:$0xff]
    %v2450 = vld [vmem:[#allocation10 + $0x10] sm:$0xff]
    %v2451 = vld [vmem:[#allocation10 + $0x18] sm:$0xff]
    %v2452 = vld [vmem:[#allocation10 + $0x20] sm:$0xff]
    %v2453 = vld [vmem:[#allocation10 + $0x28] sm:$0xff]
    %v2454 = vld [vmem:[#allocation10 + $0x30] sm:$0xff]
    %v2455 = vld [vmem:[#allocation10 + $0x38] sm:$0xff]
    %v2456 = vld [vmem:[#allocation10 + $0x40] sm:$0xff]
    %v2457 = vld [vmem:[#allocation10 + $0x48] sm:$0xff]
    %v2458 = vld [vmem:[#allocation10 + $0x50] sm:$0xff]
    %v2459 = vld [vmem:[#allocation10 + $0x58] sm:$0xff]
    %v2460 = vld [vmem:[#allocation10 + $0x60] sm:$0xff]
    %v2461 = vld [vmem:[#allocation10 + $0x68] sm:$0xff]
    %v2462 = vld [vmem:[#allocation10 + $0x70] sm:$0xff]
    %v2463 = vld [vmem:[#allocation10 + $0x78] sm:$0xff]
    %v2464 = vld [vmem:[#allocation10 + $0x80] sm:$0xff]
    %v2465 = vld [vmem:[#allocation10 + $0x88] sm:$0xff]
    %v2466 = vld [vmem:[#allocation10 + $0x90] sm:$0xff]
    %v2467 = vld [vmem:[#allocation10 + $0x98] sm:$0xff]
    %v2468 = vld [vmem:[#allocation10 + $0xa0] sm:$0xff]
    %v2469 = vld [vmem:[#allocation10 + $0xa8] sm:$0xff]
    %v2470 = vld [vmem:[#allocation10 + $0xb0] sm:$0xff]
    %v2471 = vld [vmem:[#allocation10 + $0xb8] sm:$0xff]
    %v2472 = vld [vmem:[#allocation10 + $0xc0] sm:$0xff]
    %v2473 = vld [vmem:[#allocation10 + $0xc8] sm:$0xff]
    %v2474 = vld [vmem:[#allocation10 + $0xd0] sm:$0xff]
    %v2475 = vld [vmem:[#allocation10 + $0xd8] sm:$0xff]
    %v2476 = vld [vmem:[#allocation10 + $0xe0] sm:$0xff]
    %v2477 = vld [vmem:[#allocation10 + $0xe8] sm:$0xff]
    %v2478 = vld [vmem:[#allocation10 + $0xf0] sm:$0xff]
    %v2479 = vld [vmem:[#allocation10 + $0xf8] sm:$0xff]
    %v2480 = vld [vmem:[#allocation10 + $0x100] sm:$0xff]
    %v2481 = vld [vmem:[#allocation10 + $0x108] sm:$0xff]
    %v2482 = vld [vmem:[#allocation10 + $0x110] sm:$0xff]
    %v2483 = vld [vmem:[#allocation10 + $0x118] sm:$0xff]
    %v2484 = vld [vmem:[#allocation10 + $0x120] sm:$0xff]
    %v2485 = vld [vmem:[#allocation10 + $0x128] sm:$0xff]
    %v2486 = vld [vmem:[#allocation10 + $0x130] sm:$0xff]
    %v2487 = vld [vmem:[#allocation10 + $0x138] sm:$0xff]
    %v2488 = vld [vmem:[#allocation10 + $0x140] sm:$0xff]
    %v2489 = vld [vmem:[#allocation10 + $0x148] sm:$0xff]
    %v2490 = vld [vmem:[#allocation10 + $0x150] sm:$0xff]
    %v2491 = vld [vmem:[#allocation10 + $0x158] sm:$0xff]
    %v2492 = vld [vmem:[#allocation10 + $0x160] sm:$0xff]
    %v2493 = vld [vmem:[#allocation10 + $0x168] sm:$0xff]
    %v2494 = vld [vmem:[#allocation10 + $0x170] sm:$0xff]
    %v2495 = vld [vmem:[#allocation10 + $0x178] sm:$0xff]
    %v2496 = vld [vmem:[#allocation10 + $0x180] sm:$0xff]
    %v2497 = vld [vmem:[#allocation10 + $0x188] sm:$0xff]
    %v2498 = vld [vmem:[#allocation10 + $0x190] sm:$0xff]
    %v2499 = vld [vmem:[#allocation10 + $0x198] sm:$0xff]
    %v2500 = vld [vmem:[#allocation10 + $0x1a0] sm:$0xff]
    %v2501 = vld [vmem:[#allocation10 + $0x1a8] sm:$0xff]
    %v2502 = vld [vmem:[#allocation10 + $0x1b0] sm:$0xff]
    %v2503 = vld [vmem:[#allocation10 + $0x1b8] sm:$0xff]
    %v2504 = vld [vmem:[#allocation10 + $0x1c0] sm:$0xff]
    %v2505 = vld [vmem:[#allocation10 + $0x1c8] sm:$0xff]
    %v2506 = vld [vmem:[#allocation10 + $0x1d0] sm:$0xff]
    %v2507 = vld [vmem:[#allocation10 + $0x1d8] sm:$0xff]
    %v2508 = vld [vmem:[#allocation10 + $0x1e0] sm:$0xff]
    %v2509 = vld [vmem:[#allocation10 + $0x1e8] sm:$0xff]
    %v2510 = vld [vmem:[#allocation10 + $0x1f0] sm:$0xff]
    %v2511 = vld [vmem:[#allocation10 + $0x1f8] sm:$0xff]
    %v2512 = vld [vmem:[#allocation10 + $0x200] sm:$0xff]
    %v2513 = vld [vmem:[#allocation10 + $0x208] sm:$0xff]
    %v2514 = vld [vmem:[#allocation10 + $0x210] sm:$0xff]
    %v2515 = vld [vmem:[#allocation10 + $0x218] sm:$0xff]
    %v2516 = vld [vmem:[#allocation10 + $0x220] sm:$0xff]
    %v2517 = vld [vmem:[#allocation10 + $0x228] sm:$0xff]
    %v2518 = vld [vmem:[#allocation10 + $0x230] sm:$0xff]
    %v2519 = vld [vmem:[#allocation10 + $0x238] sm:$0xff]
    %v2520 = vld [vmem:[#allocation10 + $0x240] sm:$0xff]
    %v2521 = vld [vmem:[#allocation10 + $0x248] sm:$0xff]
    %v2522 = vld [vmem:[#allocation10 + $0x250] sm:$0xff]
    %v2523 = vld [vmem:[#allocation10 + $0x258] sm:$0xff]
    %v2524 = vld [vmem:[#allocation10 + $0x260] sm:$0xff]
    %v2525 = vld [vmem:[#allocation10 + $0x268] sm:$0xff]
    %v2526 = vld [vmem:[#allocation10 + $0x270] sm:$0xff]
    %v2527 = vld [vmem:[#allocation10 + $0x278] sm:$0xff]
    %v2528 = vld [vmem:[#allocation10 + $0x280] sm:$0xff]
    %v2529 = vld [vmem:[#allocation10 + $0x288] sm:$0xff]
    %v2530 = vld [vmem:[#allocation10 + $0x290] sm:$0xff]
    %v2531 = vld [vmem:[#allocation10 + $0x298] sm:$0xff]
    %v2532 = vld [vmem:[#allocation10 + $0x2a0] sm:$0xff]
    %v2533 = vld [vmem:[#allocation10 + $0x2a8] sm:$0xff]
    %v2534 = vld [vmem:[#allocation10 + $0x2b0] sm:$0xff]
    %v2535 = vld [vmem:[#allocation10 + $0x2b8] sm:$0xff]
    %v2536 = vld [vmem:[#allocation10 + $0x2c0] sm:$0xff]
    %v2537 = vld [vmem:[#allocation10 + $0x2c8] sm:$0xff]
    %v2538 = vld [vmem:[#allocation10 + $0x2d0] sm:$0xff]
    %v2539 = vld [vmem:[#allocation10 + $0x2d8] sm:$0xff]
    %v2540 = vld [vmem:[#allocation10 + $0x2e0] sm:$0xff]
    %v2541 = vld [vmem:[#allocation10 + $0x2e8] sm:$0xff]
    %v2542 = vld [vmem:[#allocation10 + $0x2f0] sm:$0xff]
    %v2543 = vld [vmem:[#allocation10 + $0x2f8] sm:$0xff]
    %v2544 = vld [vmem:[#allocation10 + $0x300] sm:$0xff]
    %v2545 = vld [vmem:[#allocation10 + $0x308] sm:$0xff]
    %v2546 = vld [vmem:[#allocation10 + $0x310] sm:$0xff]
    %v2547 = vld [vmem:[#allocation10 + $0x318] sm:$0xff]
    %v2548 = vld [vmem:[#allocation10 + $0x320] sm:$0xff]
    %v2549 = vld [vmem:[#allocation10 + $0x328] sm:$0xff]
    %v2550 = vld [vmem:[#allocation10 + $0x330] sm:$0xff]
    %v2551 = vld [vmem:[#allocation10 + $0x338] sm:$0xff]
    %v2552 = vld [vmem:[#allocation10 + $0x340] sm:$0xff]
    %v2553 = vld [vmem:[#allocation10 + $0x348] sm:$0xff]
    %v2554 = vld [vmem:[#allocation10 + $0x350] sm:$0xff]
    %v2555 = vld [vmem:[#allocation10 + $0x358] sm:$0xff]
    %v2556 = vld [vmem:[#allocation10 + $0x360] sm:$0xff]
    %v2557 = vld [vmem:[#allocation10 + $0x368] sm:$0xff]
    %v2558 = vld [vmem:[#allocation10 + $0x370] sm:$0xff]
    %v2559 = vld [vmem:[#allocation10 + $0x378] sm:$0xff]
    %v2560 = vld [vmem:[#allocation10 + $0x380] sm:$0xff]
    %v2561 = vld [vmem:[#allocation10 + $0x388] sm:$0xff]
    %v2562 = vld [vmem:[#allocation10 + $0x390] sm:$0xff]
    %v2563 = vld [vmem:[#allocation10 + $0x398] sm:$0xff]
    %v2564 = vld [vmem:[#allocation10 + $0x3a0] sm:$0xff]
    %v2565 = vld [vmem:[#allocation10 + $0x3a8] sm:$0xff]
    %v2566 = vld [vmem:[#allocation10 + $0x3b0] sm:$0xff]
    %v2567 = vld [vmem:[#allocation10 + $0x3b8] sm:$0xff]
    %v2568 = vld [vmem:[#allocation10 + $0x3c0] sm:$0xff]
    %v2569 = vld [vmem:[#allocation10 + $0x3c8] sm:$0xff]
    %v2570 = vld [vmem:[#allocation10 + $0x3d0] sm:$0xff]
    %v2571 = vld [vmem:[#allocation10 + $0x3d8] sm:$0xff]
    %v2572 = vld [vmem:[#allocation10 + $0x3e0] sm:$0xff]
    %v2573 = vld [vmem:[#allocation10 + $0x3e8] sm:$0xff]
    %v2574 = vld [vmem:[#allocation10 + $0x3f0] sm:$0xff]
    %v2575 = vld [vmem:[#allocation10 + $0x3f8] sm:$0xff]
    %v2576 = vld [vmem:[%s11] sm:$0x1]
    %v2578 = vlaneseq
    %v2579 = vshrl.u32 %v2578, 7
    %v2580 = vsub.s32 0, %v2579
    %v2581 = vrot.slane %v2576, %v2580
    %2583 = vmatprep.subr.mxu0 0.0
    %2584 = vmatpush1.msra.mxu0 %v2448
    %2585 = vmatprep.subr.mxu0 0.0
    %2586 = vmatpush1.msra.mxu0 %v2449
    %2587 = vmatprep.subr.mxu0 0.0
    %2588 = vmatpush1.msra.mxu0 %v2450
    %2589 = vmatprep.subr.mxu0 0.0
    %2590 = vmatpush1.msra.mxu0 %v2451
    %2591 = vmatprep.subr.mxu0 0.0
    %2592 = vmatpush1.msra.mxu0 %v2452
    %2593 = vmatprep.subr.mxu0 0.0
    %2594 = vmatpush1.msra.mxu0 %v2453
    %2595 = vmatprep.subr.mxu0 0.0
    %2596 = vmatpush1.msra.mxu0 %v2454
    %2597 = vmatprep.subr.mxu0 0.0
    %2598 = vmatpush1.msra.mxu0 %v2455
    %2599 = vmatprep.subr.mxu0 0.0
    %2600 = vmatpush1.msra.mxu0 %v2456
    %2601 = vmatprep.subr.mxu0 0.0
    %2602 = vmatpush1.msra.mxu0 %v2457
    %2603 = vmatprep.subr.mxu0 0.0
    %2604 = vmatpush1.msra.mxu0 %v2458
    %2605 = vmatprep.subr.mxu0 0.0
    %2606 = vmatpush1.msra.mxu0 %v2459
    %2607 = vmatprep.subr.mxu0 0.0
    %2608 = vmatpush1.msra.mxu0 %v2460
    %2609 = vmatprep.subr.mxu0 0.0
    %2610 = vmatpush1.msra.mxu0 %v2461
    %2611 = vmatprep.subr.mxu0 0.0
    %2612 = vmatpush1.msra.mxu0 %v2462
    %2613 = vmatprep.subr.mxu0 0.0
    %2614 = vmatpush1.msra.mxu0 %v2463
    %2615 = vmatprep.subr.mxu0 0.0
    %2616 = vmatpush1.msra.mxu0 %v2464
    %2617 = vmatprep.subr.mxu0 0.0
    %2618 = vmatpush1.msra.mxu0 %v2465
    %2619 = vmatprep.subr.mxu0 0.0
    %2620 = vmatpush1.msra.mxu0 %v2466
    %2621 = vmatprep.subr.mxu0 0.0
    %2622 = vmatpush1.msra.mxu0 %v2467
    %2623 = vmatprep.subr.mxu0 0.0
    %2624 = vmatpush1.msra.mxu0 %v2468
    %2625 = vmatprep.subr.mxu0 0.0
    %2626 = vmatpush1.msra.mxu0 %v2469
    %2627 = vmatprep.subr.mxu0 0.0
    %2628 = vmatpush1.msra.mxu0 %v2470
    %2629 = vmatprep.subr.mxu0 0.0
    %2630 = vmatpush1.msra.mxu0 %v2471
    %2631 = vmatprep.subr.mxu0 0.0
    %2632 = vmatpush1.msra.mxu0 %v2472
    %2633 = vmatprep.subr.mxu0 0.0
    %2634 = vmatpush1.msra.mxu0 %v2473
    %2635 = vmatprep.subr.mxu0 0.0
    %2636 = vmatpush1.msra.mxu0 %v2474
    %2637 = vmatprep.subr.mxu0 0.0
    %2638 = vmatpush1.msra.mxu0 %v2475
    %2639 = vmatprep.subr.mxu0 0.0
    %2640 = vmatpush1.msra.mxu0 %v2476
    %2641 = vmatprep.subr.mxu0 0.0
    %2642 = vmatpush1.msra.mxu0 %v2477
    %2643 = vmatprep.subr.mxu0 0.0
    %2644 = vmatpush1.msra.mxu0 %v2478
    %2645 = vmatprep.subr.mxu0 0.0
    %2646 = vmatpush1.msra.mxu0 %v2479
    %2647 = vmatprep.mubr.f32.mxu0 %v2441
    %2648 = vmatmul.mubr.f32.gmra.mrb[0].mxu0 %v2440
    %v2649 = vpop.f32.mrb[0].mxu0
    %v2650 = vadd.f32 %v2581, %v2649
    %v2651 = vpop.f32.mrb[0].mxu0
    %2652 = vdwg.mxu0
    %2653 = vmatprep.subr.mxu0 0.0
    %2654 = vmatpush1.msra.mxu0 %v2480
    %2655 = vmatprep.subr.mxu0 0.0
    %2656 = vmatpush1.msra.mxu0 %v2481
    %2657 = vmatprep.subr.mxu0 0.0
    %2658 = vmatpush1.msra.mxu0 %v2482
    %2659 = vmatprep.subr.mxu0 0.0
    %2660 = vmatpush1.msra.mxu0 %v2483
    %2661 = vmatprep.subr.mxu0 0.0
    %2662 = vmatpush1.msra.mxu0 %v2484
    %2663 = vmatprep.subr.mxu0 0.0
    %2664 = vmatpush1.msra.mxu0 %v2485
    %2665 = vmatprep.subr.mxu0 0.0
    %2666 = vmatpush1.msra.mxu0 %v2486
    %2667 = vmatprep.subr.mxu0 0.0
    %2668 = vmatpush1.msra.mxu0 %v2487
    %2669 = vmatprep.subr.mxu0 0.0
    %2670 = vmatpush1.msra.mxu0 %v2488
    %2671 = vmatprep.subr.mxu0 0.0
    %2672 = vmatpush1.msra.mxu0 %v2489
    %2673 = vmatprep.subr.mxu0 0.0
    %2674 = vmatpush1.msra.mxu0 %v2490
    %2675 = vmatprep.subr.mxu0 0.0
    %2676 = vmatpush1.msra.mxu0 %v2491
    %2677 = vmatprep.subr.mxu0 0.0
    %2678 = vmatpush1.msra.mxu0 %v2492
    %2679 = vmatprep.subr.mxu0 0.0
    %2680 = vmatpush1.msra.mxu0 %v2493
    %2681 = vmatprep.subr.mxu0 0.0
    %2682 = vmatpush1.msra.mxu0 %v2494
    %2683 = vmatprep.subr.mxu0 0.0
    %2684 = vmatpush1.msra.mxu0 %v2495
    %2685 = vmatprep.subr.mxu0 0.0
    %2686 = vmatpush1.msra.mxu0 %v2496
    %2687 = vmatprep.subr.mxu0 0.0
    %2688 = vmatpush1.msra.mxu0 %v2497
    %2689 = vmatprep.subr.mxu0 0.0
    %2690 = vmatpush1.msra.mxu0 %v2498
    %2691 = vmatprep.subr.mxu0 0.0
    %2692 = vmatpush1.msra.mxu0 %v2499
    %2693 = vmatprep.subr.mxu0 0.0
    %2694 = vmatpush1.msra.mxu0 %v2500
    %2695 = vmatprep.subr.mxu0 0.0
    %2696 = vmatpush1.msra.mxu0 %v2501
    %2697 = vmatprep.subr.mxu0 0.0
    %2698 = vmatpush1.msra.mxu0 %v2502
    %2699 = vmatprep.subr.mxu0 0.0
    %2700 = vmatpush1.msra.mxu0 %v2503
    %2701 = vmatprep.subr.mxu0 0.0
    %2702 = vmatpush1.msra.mxu0 %v2504
    %2703 = vmatprep.subr.mxu0 0.0
    %2704 = vmatpush1.msra.mxu0 %v2505
    %2705 = vmatprep.subr.mxu0 0.0
    %2706 = vmatpush1.msra.mxu0 %v2506
    %2707 = vmatprep.subr.mxu0 0.0
    %2708 = vmatpush1.msra.mxu0 %v2507
    %2709 = vmatprep.subr.mxu0 0.0
    %2710 = vmatpush1.msra.mxu0 %v2508
    %2711 = vmatprep.subr.mxu0 0.0
    %2712 = vmatpush1.msra.mxu0 %v2509
    %2713 = vmatprep.subr.mxu0 0.0
    %2714 = vmatpush1.msra.mxu0 %v2510
    %2715 = vmatprep.subr.mxu0 0.0
    %2716 = vmatpush1.msra.mxu0 %v2511
    %2717 = vmatprep.mubr.f32.mxu0 %v2443
    %2718 = vmatmul.mubr.f32.gmra.mrb[0].mxu0 %v2442
    %v2719 = vpop.f32.mrb[0].mxu0
    %v2720 = vadd.f32 %v2650, %v2719
    %v2721 = vpop.f32.mrb[0].mxu0
    %2722 = vdwg.mxu0
    %2723 = vmatprep.subr.mxu0 0.0
    %2724 = vmatpush1.msra.mxu0 %v2512
    %2725 = vmatprep.subr.mxu0 0.0
    %2726 = vmatpush1.msra.mxu0 %v2513
    %2727 = vmatprep.subr.mxu0 0.0
    %2728 = vmatpush1.msra.mxu0 %v2514
    %2729 = vmatprep.subr.mxu0 0.0
    %2730 = vmatpush1.msra.mxu0 %v2515
    %2731 = vmatprep.subr.mxu0 0.0
    %2732 = vmatpush1.msra.mxu0 %v2516
    %2733 = vmatprep.subr.mxu0 0.0
    %2734 = vmatpush1.msra.mxu0 %v2517
    %2735 = vmatprep.subr.mxu0 0.0
    %2736 = vmatpush1.msra.mxu0 %v2518
    %2737 = vmatprep.subr.mxu0 0.0
    %2738 = vmatpush1.msra.mxu0 %v2519
    %2739 = vmatprep.subr.mxu0 0.0
    %2740 = vmatpush1.msra.mxu0 %v2520
    %2741 = vmatprep.subr.mxu0 0.0
    %2742 = vmatpush1.msra.mxu0 %v2521
    %2743 = vmatprep.subr.mxu0 0.0
    %2744 = vmatpush1.msra.mxu0 %v2522
    %2745 = vmatprep.subr.mxu0 0.0
    %2746 = vmatpush1.msra.mxu0 %v2523
    %2747 = vmatprep.subr.mxu0 0.0
    %2748 = vmatpush1.msra.mxu0 %v2524
    %2749 = vmatprep.subr.mxu0 0.0
    %2750 = vmatpush1.msra.mxu0 %v2525
    %2751 = vmatprep.subr.mxu0 0.0
    %2752 = vmatpush1.msra.mxu0 %v2526
    %2753 = vmatprep.subr.mxu0 0.0
    %2754 = vmatpush1.msra.mxu0 %v2527
    %2755 = vmatprep.subr.mxu0 0.0
    %2756 = vmatpush1.msra.mxu0 %v2528
    %2757 = vmatprep.subr.mxu0 0.0
    %2758 = vmatpush1.msra.mxu0 %v2529
    %2759 = vmatprep.subr.mxu0 0.0
    %2760 = vmatpush1.msra.mxu0 %v2530
    %2761 = vmatprep.subr.mxu0 0.0
    %2762 = vmatpush1.msra.mxu0 %v2531
    %2763 = vmatprep.subr.mxu0 0.0
    %2764 = vmatpush1.msra.mxu0 %v2532
    %2765 = vmatprep.subr.mxu0 0.0
    %2766 = vmatpush1.msra.mxu0 %v2533
    %2767 = vmatprep.subr.mxu0 0.0
    %2768 = vmatpush1.msra.mxu0 %v2534
    %2769 = vmatprep.subr.mxu0 0.0
    %2770 = vmatpush1.msra.mxu0 %v2535
    %2771 = vmatprep.subr.mxu0 0.0
    %2772 = vmatpush1.msra.mxu0 %v2536
    %2773 = vmatprep.subr.mxu0 0.0
    %2774 = vmatpush1.msra.mxu0 %v2537
    %2775 = vmatprep.subr.mxu0 0.0
    %2776 = vmatpush1.msra.mxu0 %v2538
    %2777 = vmatprep.subr.mxu0 0.0
    %2778 = vmatpush1.msra.mxu0 %v2539
    %2779 = vmatprep.subr.mxu0 0.0
    %2780 = vmatpush1.msra.mxu0 %v2540
    %2781 = vmatprep.subr.mxu0 0.0
    %2782 = vmatpush1.msra.mxu0 %v2541
    %2783 = vmatprep.subr.mxu0 0.0
    %2784 = vmatpush1.msra.mxu0 %v2542
    %2785 = vmatprep.subr.mxu0 0.0
    %2786 = vmatpush1.msra.mxu0 %v2543
    %2787 = vmatprep.mubr.f32.mxu0 %v2445
    %2788 = vmatmul.mubr.f32.gmra.mrb[0].mxu0 %v2444
    %v2789 = vpop.f32.mrb[0].mxu0
    %v2790 = vadd.f32 %v2720, %v2789
    %v2791 = vpop.f32.mrb[0].mxu0
    %2792 = vdwg.mxu0
    %2793 = vmatprep.subr.mxu0 0.0
    %2794 = vmatpush1.msra.mxu0 %v2544
    %2795 = vmatprep.subr.mxu0 0.0
    %2796 = vmatpush1.msra.mxu0 %v2545
    %2797 = vmatprep.subr.mxu0 0.0
    %2798 = vmatpush1.msra.mxu0 %v2546
    %2799 = vmatprep.subr.mxu0 0.0
    %2800 = vmatpush1.msra.mxu0 %v2547
    %2801 = vmatprep.subr.mxu0 0.0
    %2802 = vmatpush1.msra.mxu0 %v2548
    %2803 = vmatprep.subr.mxu0 0.0
    %2804 = vmatpush1.msra.mxu0 %v2549
    %2805 = vmatprep.subr.mxu0 0.0
    %2806 = vmatpush1.msra.mxu0 %v2550
    %2807 = vmatprep.subr.mxu0 0.0
    %2808 = vmatpush1.msra.mxu0 %v2551
    %2809 = vmatprep.subr.mxu0 0.0
    %2810 = vmatpush1.msra.mxu0 %v2552
    %2811 = vmatprep.subr.mxu0 0.0
    %2812 = vmatpush1.msra.mxu0 %v2553
    %2813 = vmatprep.subr.mxu0 0.0
    %2814 = vmatpush1.msra.mxu0 %v2554
    %2815 = vmatprep.subr.mxu0 0.0
    %2816 = vmatpush1.msra.mxu0 %v2555
    %2817 = vmatprep.subr.mxu0 0.0
    %2818 = vmatpush1.msra.mxu0 %v2556
    %2819 = vmatprep.subr.mxu0 0.0
    %2820 = vmatpush1.msra.mxu0 %v2557
    %2821 = vmatprep.subr.mxu0 0.0
    %2822 = vmatpush1.msra.mxu0 %v2558
    %2823 = vmatprep.subr.mxu0 0.0
    %2824 = vmatpush1.msra.mxu0 %v2559
    %2825 = vmatprep.subr.mxu0 0.0
    %2826 = vmatpush1.msra.mxu0 %v2560
    %2827 = vmatprep.subr.mxu0 0.0
    %2828 = vmatpush1.msra.mxu0 %v2561
    %2829 = vmatprep.subr.mxu0 0.0
    %2830 = vmatpush1.msra.mxu0 %v2562
    %2831 = vmatprep.subr.mxu0 0.0
    %2832 = vmatpush1.msra.mxu0 %v2563
    %2833 = vmatprep.subr.mxu0 0.0
    %2834 = vmatpush1.msra.mxu0 %v2564
    %2835 = vmatprep.subr.mxu0 0.0
    %2836 = vmatpush1.msra.mxu0 %v2565
    %2837 = vmatprep.subr.mxu0 0.0
    %2838 = vmatpush1.msra.mxu0 %v2566
    %2839 = vmatprep.subr.mxu0 0.0
    %2840 = vmatpush1.msra.mxu0 %v2567
    %2841 = vmatprep.subr.mxu0 0.0
    %2842 = vmatpush1.msra.mxu0 %v2568
    %2843 = vmatprep.subr.mxu0 0.0
    %2844 = vmatpush1.msra.mxu0 %v2569
    %2845 = vmatprep.subr.mxu0 0.0
    %2846 = vmatpush1.msra.mxu0 %v2570
    %2847 = vmatprep.subr.mxu0 0.0
    %2848 = vmatpush1.msra.mxu0 %v2571
    %2849 = vmatprep.subr.mxu0 0.0
    %2850 = vmatpush1.msra.mxu0 %v2572
    %2851 = vmatprep.subr.mxu0 0.0
    %2852 = vmatpush1.msra.mxu0 %v2573
    %2853 = vmatprep.subr.mxu0 0.0
    %2854 = vmatpush1.msra.mxu0 %v2574
    %2855 = vmatprep.subr.mxu0 0.0
    %2856 = vmatpush1.msra.mxu0 %v2575
    %2857 = vmatprep.mubr.f32.mxu0 %v2447
    %2858 = vmatmul.mubr.f32.gmra.mrb[0].mxu0 %v2446
    %v2859 = vpop.f32.mrb[0].mxu0
    %v2860 = vadd.f32 %v2790, %v2859
    %v2861 = vpop.f32.mrb[0].mxu0
    %2862 = vdwg.mxu0
    %2863 = vst [vmem:[#allocation11] sm:$0xff] %v2860
    // Predicated region
    $region70: #{tpu_custom_call.1} parent=1 // pred_check
      _
    $region71: #{tpu_custom_call.1} parent=1 // pred_check_branch
      %2865 = sbr.rel (0) target = $region73
    $region72: #{tpu_custom_call.1} parent=1 // pred_region
      %s2867 = ssub.s32 128, 128
      %2868 = vsyncadd [#allocation4], %s2867
      %s2870 = sshll.u32 [#allocation11], 4
      %s2871 = int_to_ptr.vmem [resolvable:$true] %s2870
      %2873 = dma.vmem_to_hbm [thread:$0]  %s2871, 128, %s12, [#allocation4]
    $region73: #{tpu_custom_call.1} parent=1 // pred_fallthru
      _
    // Predicated region
    $region74: #{tpu_custom_call.1} parent=1 // pred_check
      _
    $region75: #{tpu_custom_call.1} parent=1 // pred_check_branch
      %2875 = sbr.rel (0) target = $region77
    $region76: #{tpu_custom_call.1} parent=1 // pred_region
      %2876 = dma.done [#allocation4], 128
    $region77: #{tpu_custom_call.1} parent=1 // pred_fallthru
      _
    %2877 = vsyncpa [#allocation3], 1
    %2878 = vsyncpa [#allocation6], 1
    %2879 = vsyncpa [#allocation9], 1
    %2880 = vsyncpa [#allocation4], 1

</llo_original>
